<compile_context>
chip_gen: v5e
topology: v5e:2x2
jax: 0.10.0
libtpu: 0.0.40
codegen_flags: <defaults>
</compile_context>

<pallas_src>
import numpy as np
import jax
import jax.numpy as jnp
from jax.experimental import pallas as pl
from jax.experimental.pallas import tpu as pltpu

EPS = 1e-5  # PyTorch default eps for InstanceNorm1d / LayerNorm


# ----------------------------------------------------------------------------
# The single fused kernel
# ----------------------------------------------------------------------------
def _build_fused_kernel(n_batch, kernel_size, pool_flags, c_pen):
    """pool_flags: per-conv-layer bool, True if MaxPool1d(2) follows that conv."""
    n_conv = len(pool_flags)
    n_pool = sum(pool_flags)
    K = kernel_size

    def kernel(*refs):
        it = iter(refs)
        x_ref = next(it)                                            # (N, C_in, L)
        conv_refs = [(next(it), next(it)) for _ in range(n_conv)]   # (K,Co,Ci), (Co,1)
        pool_refs = [(next(it), next(it)) for _ in range(n_pool)]   # (Lc,P), (Lc,P)
        interp_ref = next(it)                                       # (l_pen, 500)
        w1_ref, b1_ref, g_ref, be_ref, w2_ref, b2_ref = (next(it) for _ in range(6))
        o_ref = next(it)                                            # (N, C_pen, D_out)
        feat_ref = next(it)                                         # VMEM scratch (N*C_pen, l_pen)

        # --- Fold interpolate-to-500 with Linear(500,300) once (shared by batch) ---
        # Both are linear maps over the length axis, so their composition is a
        # single (l_pen, 300) matrix.  Computed once on the MXU in VMEM.
        w1f = jnp.dot(interp_ref[...], w1_ref[...], preferred_element_type=jnp.float32)

        # --- Conv / InstanceNorm / (MaxPool) / ReLU stack, per sample ---
        for n in range(n_batch):                 # static loop over the tiny batch
            h = x_ref[n]                         # (C_in, L), VMEM-resident
            pool_i = 0
            for li in range(n_conv):
                w_ref, b_ref = conv_refs[li]
                l_out = h.shape[1] - K + 1
                # Conv1d: sum of K shifted matmuls (no im2col materialization).
                y = jnp.dot(w_ref[0], h[:, 0:l_out],
                            preferred_element_type=jnp.float32)
                for k in range(1, K):
                    y = y + jnp.dot(w_ref[k], h[:, k:k + l_out],
                                    preferred_element_type=jnp.float32)
                y = y + b_ref[...]               # (C_out, l_out)
                # InstanceNorm1d (affine=False, biased variance) in f32.
                mean = jnp.mean(y, axis=-1, keepdims=True)
                var = jnp.mean((y - mean) ** 2, axis=-1, keepdims=True)
                y = (y - mean) * jax.lax.rsqrt(var + EPS)
                if pool_flags[li]:
                    # MaxPool1d(2): max of two 0/1-selection matmuls (avoids
                    # lane-strided slicing; exact since each column picks one elem).
                    se_ref, so_ref = pool_refs[pool_i]
                    pool_i += 1
                    y = jnp.maximum(
                        jnp.dot(y, se_ref[...], preferred_element_type=jnp.float32),
                        jnp.dot(y, so_ref[...], preferred_element_type=jnp.float32))
                y = jnp.maximum(y, 0.0)          # ReLU (Dropout = identity in eval)
                h = y
            # Stack this sample's features at a static sublane offset.
            feat_ref[n * c_pen:(n + 1) * c_pen, :] = h

        # --- Head, once over the batch-stacked features (LayerNorm is per-row) ---
        hcat = feat_ref[...]                                             # (N*C, l_pen)
        t = jnp.dot(hcat, w1f, preferred_element_type=jnp.float32)       # (N*C, 300)
        t = t + b1_ref[...]
        mean = jnp.mean(t, axis=-1, keepdims=True)
        var = jnp.mean((t - mean) ** 2, axis=-1, keepdims=True)
        t = (t - mean) * jax.lax.rsqrt(var + EPS)
        t = t * g_ref[...] + be_ref[...]
        t = jnp.maximum(t, 0.0)
        out = (jnp.dot(t, w2_ref[...], preferred_element_type=jnp.float32)
               + b2_ref[...])                                            # (N*C, D_out)
        for n in range(n_batch):
            o_ref[n] = out[n * c_pen:(n + 1) * c_pen, :]

    return kernel


# ----------------------------------------------------------------------------
# Trace-time constant builders (numpy, static shapes)
# ----------------------------------------------------------------------------
def make_interp_matrix(l_in, l_out):
    """F.interpolate(..., size=l_out, mode='linear', align_corners=False) as a matrix."""
    scale = l_in / l_out
    j = np.arange(l_out)
    src = np.maximum((j + 0.5) * scale - 0.5, 0.0)
    i0 = np.minimum(np.floor(src).astype(np.int64), l_in - 1)
    i1 = np.minimum(i0 + 1, l_in - 1)
    lam = (src - i0).astype(np.float32)
    m = np.zeros((l_in, l_out), np.float32)
    m[i0, j] += (1.0 - lam)
    m[i1, j] += lam
    return m


def make_pool_matrices(l_in):
    """MaxPool1d(2) (floor mode) as two 0/1 selection matrices: even / odd columns."""
    p = l_in // 2
    idx = np.arange(p)
    se = np.zeros((l_in, p), np.float32)
    so = np.zeros((l_in, p), np.float32)
    se[2 * idx, idx] = 1.0
    so[2 * idx + 1, idx] = 1.0
    return se, so


# ----------------------------------------------------------------------------
# Parameters (deterministic, PyTorch-style uniform fan-in init; kernel-ready layout)
# ----------------------------------------------------------------------------
def _init_conv(key, c_out, c_in, k):
    kw, kb = jax.random.split(key)
    bound = 1.0 / np.sqrt(c_in * k)
    w = jax.random.uniform(kw, (c_out, c_in, k), jnp.float32, -bound, bound)
    b = jax.random.uniform(kb, (c_out,), jnp.float32, -bound, bound)
    # kernel layout: (K, C_out, C_in) weight, (C_out, 1) bias
    return jnp.transpose(w, (2, 0, 1)), b.reshape(c_out, 1)


def _init_linear(key, d_out, d_in):
    kw, kb = jax.random.split(key)
    bound = 1.0 / np.sqrt(d_in)
    w = jax.random.uniform(kw, (d_out, d_in), jnp.float32, -bound, bound)
    b = jax.random.uniform(kb, (d_out,), jnp.float32, -bound, bound)
    return w, b


def init_params(key, input_channels, num_filters, kernel_size, layers, output_channels):
    keys = jax.random.split(key, 16)
    p = {}
    p["init0"] = _init_conv(keys[0], num_filters, input_channels, kernel_size)
    p["init1"] = _init_conv(keys[1], num_filters, num_filters, kernel_size)
    feats = []
    for i in range(1, layers + 1):
        feats.append(_init_conv(keys[1 + i], num_filters * (i + 1), num_filters * i,
                                kernel_size))
    p["features"] = feats
    cpen = num_filters * (layers + 1)
    p["pen"] = _init_conv(keys[8], cpen, cpen, kernel_size)
    w1, b1 = _init_linear(keys[9], 300, 500)
    p["fc1_wT"] = w1.T                                   # (500, 300), pre-transposed
    p["fc1_b"] = b1.reshape(1, 300)
    p["ln_g"] = jnp.ones((1, 300), jnp.float32)
    p["ln_b"] = jnp.zeros((1, 300), jnp.float32)
    w2, b2 = _init_linear(keys[10], output_channels, 300)
    p["fc2_wT"] = w2.T                                   # (300, D_out), pre-transposed
    p["fc2_b"] = b2.reshape(1, output_channels)
    return p


# ----------------------------------------------------------------------------
# Forward (mirrors ConvNet.forward, inference mode) — one pallas_call total
# ----------------------------------------------------------------------------
def convnet_forward(params, x):
    N, _, L = x.shape
    layers = len(params["features"])
    kernel_size = params["init0"][0].shape[0]

    convs = [params["init0"], params["init1"]] + list(params["features"]) + [params["pen"]]
    pool_flags = tuple([False, False] + [True] * layers + [False])

    # Static shape bookkeeping to size the pooling / interpolation matrices.
    l = L
    pool_mats = []
    for pf in pool_flags:
        l = l - kernel_size + 1
        if pf:
            se, so = make_pool_matrices(l)
            pool_mats.append((jnp.asarray(se), jnp.asarray(so)))
            l = l // 2
    interp_m = jnp.asarray(make_interp_matrix(l, 500))   # l == l_pen after the loop

    c_pen = convs[-1][0].shape[1]
    d_out = params["fc2_wT"].shape[1]

    inputs = [x]
    for w, b in convs:
        inputs += [w, b]
    for se, so in pool_mats:
        inputs += [se, so]
    inputs += [interp_m, params["fc1_wT"], params["fc1_b"],
               params["ln_g"], params["ln_b"], params["fc2_wT"], params["fc2_b"]]

    vmem_spec = pl.BlockSpec(memory_space=pltpu.MemorySpace.VMEM)  # whole array in VMEM
    kernel = _build_fused_kernel(N, kernel_size, pool_flags, c_pen)
    return pl.pallas_call(
        kernel,
        out_shape=jax.ShapeDtypeStruct((N, c_pen, d_out), jnp.float32),
        in_specs=[vmem_spec] * len(inputs),
        out_specs=vmem_spec,
        scratch_shapes=[pltpu.VMEM((N * c_pen, l), jnp.float32)],
        compiler_params=pltpu.CompilerParams(vmem_limit_bytes=32 * 1024 * 1024),
    )(*inputs)


if __name__ == "__main__":
    # opt: input_channels=4, num_filters=8, kernel_size=3, layers=2, output_channels=10
    INPUT_CHANNELS, NUM_FILTERS, KERNEL_SIZE, LAYERS, OUTPUT_CHANNELS = 4, 8, 3, 2, 10
    N, L = 2, 64

    root = jax.random.PRNGKey(0)
    k_x, k_p = jax.random.split(root)
    x = jax.random.normal(k_x, (N, INPUT_CHANNELS, L), jnp.float32)
    params = init_params(k_p, INPUT_CHANNELS, NUM_FILTERS, KERNEL_SIZE, LAYERS,
                         OUTPUT_CHANNELS)

    out = jax.jit(convnet_forward)(params, x)
    jax.block_until_ready(out)
    assert out.shape == (N, NUM_FILTERS * (LAYERS + 1), OUTPUT_CHANNELS)
    assert bool(jnp.all(jnp.isfinite(out)))
    print("KERNEL_OK")
</pallas_src>

<mosaic_0001>
module attributes {stable_mosaic.version = 11 : i64} {
  func.func @kernel(%arg0: memref<2x4x64xf32, #tpu.memory_space<vmem>>, %arg1: memref<3x8x4xf32, #tpu.memory_space<vmem>>, %arg2: memref<8x1xf32, #tpu.memory_space<vmem>>, %arg3: memref<3x8x8xf32, #tpu.memory_space<vmem>>, %arg4: memref<8x1xf32, #tpu.memory_space<vmem>>, %arg5: memref<3x16x8xf32, #tpu.memory_space<vmem>>, %arg6: memref<16x1xf32, #tpu.memory_space<vmem>>, %arg7: memref<3x24x16xf32, #tpu.memory_space<vmem>>, %arg8: memref<24x1xf32, #tpu.memory_space<vmem>>, %arg9: memref<3x24x24xf32, #tpu.memory_space<vmem>>, %arg10: memref<24x1xf32, #tpu.memory_space<vmem>>, %arg11: memref<58x29xf32, #tpu.memory_space<vmem>>, %arg12: memref<58x29xf32, #tpu.memory_space<vmem>>, %arg13: memref<27x13xf32, #tpu.memory_space<vmem>>, %arg14: memref<27x13xf32, #tpu.memory_space<vmem>>, %arg15: memref<11x500xf32, #tpu.memory_space<vmem>>, %arg16: memref<500x300xf32, #tpu.memory_space<vmem>>, %arg17: memref<1x300xf32, #tpu.memory_space<vmem>>, %arg18: memref<1x300xf32, #tpu.memory_space<vmem>>, %arg19: memref<1x300xf32, #tpu.memory_space<vmem>>, %arg20: memref<300x10xf32, #tpu.memory_space<vmem>>, %arg21: memref<1x10xf32, #tpu.memory_space<vmem>>, %arg22: memref<2x24x10xf32, #tpu.memory_space<vmem>>, %arg23: memref<48x11xf32, #tpu.memory_space<vmem>>) attributes {dimension_semantics = [], scalar_prefetch = 0 : i64, scratch_operands = 1 : i64, tpu.core_type = #tpu.core_type<tc>} {
    %c0 = arith.constant 0 : index
    %c0_0 = arith.constant 0 : index
    %0 = vector.load %arg15[%c0, %c0_0] : memref<11x500xf32, #tpu.memory_space<vmem>>, vector<11x500xf32>
    %c0_1 = arith.constant 0 : index
    %c0_2 = arith.constant 0 : index
    %1 = vector.load %arg16[%c0_1, %c0_2] : memref<500x300xf32, #tpu.memory_space<vmem>>, vector<500x300xf32>
    %cst = arith.constant dense<0.000000e+00> : vector<11x300xf32>
    %2 = tpu.matmul %0, %1, %cst {dimension_numbers = #tpu.dot_dimension_numbers<[1], [0], [0], [1], [0, 0, 1, 1], [], []>} : vector<11x500xf32>, vector<500x300xf32>, vector<11x300xf32> -> vector<11x300xf32>
    %c0_3 = arith.constant 0 : index
    %c0_4 = arith.constant 0 : index
    %c0_5 = arith.constant 0 : index
    %3 = vector.load %arg0[%c0_3, %c0_4, %c0_5] : memref<2x4x64xf32, #tpu.memory_space<vmem>>, vector<1x4x64xf32>
    %4 = vector.shape_cast %3 : vector<1x4x64xf32> to vector<4x64xf32>
    %c0_6 = arith.constant 0 : index
    %c0_7 = arith.constant 0 : index
    %c0_8 = arith.constant 0 : index
    %5 = vector.load %arg1[%c0_6, %c0_7, %c0_8] : memref<3x8x4xf32, #tpu.memory_space<vmem>>, vector<1x8x4xf32>
    %6 = vector.shape_cast %5 : vector<1x8x4xf32> to vector<8x4xf32>
    %7 = vector.extract_strided_slice %4 {offsets = [0, 0], sizes = [4, 62], strides = [1, 1]} : vector<4x64xf32> to vector<4x62xf32>
    %cst_9 = arith.constant dense<0.000000e+00> : vector<8x62xf32>
    %8 = tpu.matmul %6, %7, %cst_9 {dimension_numbers = #tpu.dot_dimension_numbers<[1], [0], [0], [1], [0, 0, 1, 1], [], []>} : vector<8x4xf32>, vector<4x62xf32>, vector<8x62xf32> -> vector<8x62xf32>
    %c1 = arith.constant 1 : index
    %c0_10 = arith.constant 0 : index
    %c0_11 = arith.constant 0 : index
    %9 = vector.load %arg1[%c1, %c0_10, %c0_11] : memref<3x8x4xf32, #tpu.memory_space<vmem>>, vector<1x8x4xf32>
    %10 = vector.shape_cast %9 : vector<1x8x4xf32> to vector<8x4xf32>
    %11 = vector.extract_strided_slice %4 {offsets = [0, 1], sizes = [4, 62], strides = [1, 1]} : vector<4x64xf32> to vector<4x62xf32>
    %cst_12 = arith.constant dense<0.000000e+00> : vector<8x62xf32>
    %12 = tpu.matmul %10, %11, %cst_12 {dimension_numbers = #tpu.dot_dimension_numbers<[1], [0], [0], [1], [0, 0, 1, 1], [], []>} : vector<8x4xf32>, vector<4x62xf32>, vector<8x62xf32> -> vector<8x62xf32>
    %13 = arith.addf %8, %12 : vector<8x62xf32>
    %c2 = arith.constant 2 : index
    %c0_13 = arith.constant 0 : index
    %c0_14 = arith.constant 0 : index
    %14 = vector.load %arg1[%c2, %c0_13, %c0_14] : memref<3x8x4xf32, #tpu.memory_space<vmem>>, vector<1x8x4xf32>
    %15 = vector.shape_cast %14 : vector<1x8x4xf32> to vector<8x4xf32>
    %16 = vector.extract_strided_slice %4 {offsets = [0, 2], sizes = [4, 62], strides = [1, 1]} : vector<4x64xf32> to vector<4x62xf32>
    %cst_15 = arith.constant dense<0.000000e+00> : vector<8x62xf32>
    %17 = tpu.matmul %15, %16, %cst_15 {dimension_numbers = #tpu.dot_dimension_numbers<[1], [0], [0], [1], [0, 0, 1, 1], [], []>} : vector<8x4xf32>, vector<4x62xf32>, vector<8x62xf32> -> vector<8x62xf32>
    %18 = arith.addf %13, %17 : vector<8x62xf32>
    %c0_16 = arith.constant 0 : index
    %c0_17 = arith.constant 0 : index
    %19 = vector.load %arg2[%c0_16, %c0_17] : memref<8x1xf32, #tpu.memory_space<vmem>>, vector<8x1xf32>
    %20 = vector.broadcast %19 : vector<8x1xf32> to vector<8x62xf32>
    %21 = arith.addf %18, %20 : vector<8x62xf32>
    %cst_18 = arith.constant dense<0.000000e+00> : vector<8xf32>
    %22 = vector.multi_reduction <add>, %21, %cst_18 [1] : vector<8x62xf32> to vector<8xf32>
    %23 = vector.shape_cast %22 : vector<8xf32> to vector<8x1xf32>
    %cst_19 = arith.constant 6.200000e+01 : f32
    %24 = vector.broadcast %cst_19 : f32 to vector<8x1xf32>
    %25 = arith.divf %23, %24 : vector<8x1xf32>
    %26 = vector.broadcast %25 : vector<8x1xf32> to vector<8x62xf32>
    %27 = arith.subf %21, %26 : vector<8x62xf32>
    %28 = arith.mulf %27, %27 : vector<8x62xf32>
    %cst_20 = arith.constant dense<0.000000e+00> : vector<8xf32>
    %29 = vector.multi_reduction <add>, %28, %cst_20 [1] : vector<8x62xf32> to vector<8xf32>
    %30 = vector.shape_cast %29 : vector<8xf32> to vector<8x1xf32>
    %cst_21 = arith.constant 6.200000e+01 : f32
    %31 = vector.broadcast %cst_21 : f32 to vector<8x1xf32>
    %32 = arith.divf %30, %31 : vector<8x1xf32>
    %33 = vector.broadcast %25 : vector<8x1xf32> to vector<8x62xf32>
    %34 = arith.subf %21, %33 : vector<8x62xf32>
    %cst_22 = arith.constant 9.99999974E-6 : f32
    %35 = vector.broadcast %cst_22 : f32 to vector<8x1xf32>
    %36 = arith.addf %32, %35 : vector<8x1xf32>
    %37 = math.rsqrt %36 : vector<8x1xf32>
    %38 = vector.broadcast %37 : vector<8x1xf32> to vector<8x62xf32>
    %39 = arith.mulf %34, %38 : vector<8x62xf32>
    %cst_23 = arith.constant 0.000000e+00 : f32
    %40 = vector.broadcast %cst_23 : f32 to vector<8x62xf32>
    %41 = arith.maximumf %39, %40 : vector<8x62xf32>
    %c0_24 = arith.constant 0 : index
    %c0_25 = arith.constant 0 : index
    %c0_26 = arith.constant 0 : index
    %42 = vector.load %arg3[%c0_24, %c0_25, %c0_26] : memref<3x8x8xf32, #tpu.memory_space<vmem>>, vector<1x8x8xf32>
    %43 = vector.shape_cast %42 : vector<1x8x8xf32> to vector<8x8xf32>
    %44 = vector.extract_strided_slice %41 {offsets = [0, 0], sizes = [8, 60], strides = [1, 1]} : vector<8x62xf32> to vector<8x60xf32>
    %cst_27 = arith.constant dense<0.000000e+00> : vector<8x60xf32>
    %45 = tpu.matmul %43, %44, %cst_27 {dimension_numbers = #tpu.dot_dimension_numbers<[1], [0], [0], [1], [0, 0, 1, 1], [], []>} : vector<8x8xf32>, vector<8x60xf32>, vector<8x60xf32> -> vector<8x60xf32>
    %c1_28 = arith.constant 1 : index
    %c0_29 = arith.constant 0 : index
    %c0_30 = arith.constant 0 : index
    %46 = vector.load %arg3[%c1_28, %c0_29, %c0_30] : memref<3x8x8xf32, #tpu.memory_space<vmem>>, vector<1x8x8xf32>
    %47 = vector.shape_cast %46 : vector<1x8x8xf32> to vector<8x8xf32>
    %48 = vector.extract_strided_slice %41 {offsets = [0, 1], sizes = [8, 60], strides = [1, 1]} : vector<8x62xf32> to vector<8x60xf32>
    %cst_31 = arith.constant dense<0.000000e+00> : vector<8x60xf32>
    %49 = tpu.matmul %47, %48, %cst_31 {dimension_numbers = #tpu.dot_dimension_numbers<[1], [0], [0], [1], [0, 0, 1, 1], [], []>} : vector<8x8xf32>, vector<8x60xf32>, vector<8x60xf32> -> vector<8x60xf32>
    %50 = arith.addf %45, %49 : vector<8x60xf32>
    %c2_32 = arith.constant 2 : index
    %c0_33 = arith.constant 0 : index
    %c0_34 = arith.constant 0 : index
    %51 = vector.load %arg3[%c2_32, %c0_33, %c0_34] : memref<3x8x8xf32, #tpu.memory_space<vmem>>, vector<1x8x8xf32>
    %52 = vector.shape_cast %51 : vector<1x8x8xf32> to vector<8x8xf32>
    %53 = vector.extract_strided_slice %41 {offsets = [0, 2], sizes = [8, 60], strides = [1, 1]} : vector<8x62xf32> to vector<8x60xf32>
    %cst_35 = arith.constant dense<0.000000e+00> : vector<8x60xf32>
    %54 = tpu.matmul %52, %53, %cst_35 {dimension_numbers = #tpu.dot_dimension_numbers<[1], [0], [0], [1], [0, 0, 1, 1], [], []>} : vector<8x8xf32>, vector<8x60xf32>, vector<8x60xf32> -> vector<8x60xf32>
    %55 = arith.addf %50, %54 : vector<8x60xf32>
    %c0_36 = arith.constant 0 : index
    %c0_37 = arith.constant 0 : index
    %56 = vector.load %arg4[%c0_36, %c0_37] : memref<8x1xf32, #tpu.memory_space<vmem>>, vector<8x1xf32>
    %57 = vector.broadcast %56 : vector<8x1xf32> to vector<8x60xf32>
    %58 = arith.addf %55, %57 : vector<8x60xf32>
    %cst_38 = arith.constant dense<0.000000e+00> : vector<8xf32>
    %59 = vector.multi_reduction <add>, %58, %cst_38 [1] : vector<8x60xf32> to vector<8xf32>
    %60 = vector.shape_cast %59 : vector<8xf32> to vector<8x1xf32>
    %cst_39 = arith.constant 6.000000e+01 : f32
    %61 = vector.broadcast %cst_39 : f32 to vector<8x1xf32>
    %62 = arith.divf %60, %61 : vector<8x1xf32>
    %63 = vector.broadcast %62 : vector<8x1xf32> to vector<8x60xf32>
    %64 = arith.subf %58, %63 : vector<8x60xf32>
    %65 = arith.mulf %64, %64 : vector<8x60xf32>
    %cst_40 = arith.constant dense<0.000000e+00> : vector<8xf32>
    %66 = vector.multi_reduction <add>, %65, %cst_40 [1] : vector<8x60xf32> to vector<8xf32>
    %67 = vector.shape_cast %66 : vector<8xf32> to vector<8x1xf32>
    %cst_41 = arith.constant 6.000000e+01 : f32
    %68 = vector.broadcast %cst_41 : f32 to vector<8x1xf32>
    %69 = arith.divf %67, %68 : vector<8x1xf32>
    %70 = vector.broadcast %62 : vector<8x1xf32> to vector<8x60xf32>
    %71 = arith.subf %58, %70 : vector<8x60xf32>
    %cst_42 = arith.constant 9.99999974E-6 : f32
    %72 = vector.broadcast %cst_42 : f32 to vector<8x1xf32>
    %73 = arith.addf %69, %72 : vector<8x1xf32>
    %74 = math.rsqrt %73 : vector<8x1xf32>
    %75 = vector.broadcast %74 : vector<8x1xf32> to vector<8x60xf32>
    %76 = arith.mulf %71, %75 : vector<8x60xf32>
    %cst_43 = arith.constant 0.000000e+00 : f32
    %77 = vector.broadcast %cst_43 : f32 to vector<8x60xf32>
    %78 = arith.maximumf %76, %77 : vector<8x60xf32>
    %c0_44 = arith.constant 0 : index
    %c0_45 = arith.constant 0 : index
    %c0_46 = arith.constant 0 : index
    %79 = vector.load %arg5[%c0_44, %c0_45, %c0_46] : memref<3x16x8xf32, #tpu.memory_space<vmem>>, vector<1x16x8xf32>
    %80 = vector.shape_cast %79 : vector<1x16x8xf32> to vector<16x8xf32>
    %81 = vector.extract_strided_slice %78 {offsets = [0, 0], sizes = [8, 58], strides = [1, 1]} : vector<8x60xf32> to vector<8x58xf32>
    %cst_47 = arith.constant dense<0.000000e+00> : vector<16x58xf32>
    %82 = tpu.matmul %80, %81, %cst_47 {dimension_numbers = #tpu.dot_dimension_numbers<[1], [0], [0], [1], [0, 0, 1, 1], [], []>} : vector<16x8xf32>, vector<8x58xf32>, vector<16x58xf32> -> vector<16x58xf32>
    %c1_48 = arith.constant 1 : index
    %c0_49 = arith.constant 0 : index
    %c0_50 = arith.constant 0 : index
    %83 = vector.load %arg5[%c1_48, %c0_49, %c0_50] : memref<3x16x8xf32, #tpu.memory_space<vmem>>, vector<1x16x8xf32>
    %84 = vector.shape_cast %83 : vector<1x16x8xf32> to vector<16x8xf32>
    %85 = vector.extract_strided_slice %78 {offsets = [0, 1], sizes = [8, 58], strides = [1, 1]} : vector<8x60xf32> to vector<8x58xf32>
    %cst_51 = arith.constant dense<0.000000e+00> : vector<16x58xf32>
    %86 = tpu.matmul %84, %85, %cst_51 {dimension_numbers = #tpu.dot_dimension_numbers<[1], [0], [0], [1], [0, 0, 1, 1], [], []>} : vector<16x8xf32>, vector<8x58xf32>, vector<16x58xf32> -> vector<16x58xf32>
    %87 = arith.addf %82, %86 : vector<16x58xf32>
    %c2_52 = arith.constant 2 : index
    %c0_53 = arith.constant 0 : index
    %c0_54 = arith.constant 0 : index
    %88 = vector.load %arg5[%c2_52, %c0_53, %c0_54] : memref<3x16x8xf32, #tpu.memory_space<vmem>>, vector<1x16x8xf32>
    %89 = vector.shape_cast %88 : vector<1x16x8xf32> to vector<16x8xf32>
    %90 = vector.extract_strided_slice %78 {offsets = [0, 2], sizes = [8, 58], strides = [1, 1]} : vector<8x60xf32> to vector<8x58xf32>
    %cst_55 = arith.constant dense<0.000000e+00> : vector<16x58xf32>
    %91 = tpu.matmul %89, %90, %cst_55 {dimension_numbers = #tpu.dot_dimension_numbers<[1], [0], [0], [1], [0, 0, 1, 1], [], []>} : vector<16x8xf32>, vector<8x58xf32>, vector<16x58xf32> -> vector<16x58xf32>
    %92 = arith.addf %87, %91 : vector<16x58xf32>
    %c0_56 = arith.constant 0 : index
    %c0_57 = arith.constant 0 : index
    %93 = vector.load %arg6[%c0_56, %c0_57] : memref<16x1xf32, #tpu.memory_space<vmem>>, vector<16x1xf32>
    %94 = vector.broadcast %93 : vector<16x1xf32> to vector<16x58xf32>
    %95 = arith.addf %92, %94 : vector<16x58xf32>
    %cst_58 = arith.constant dense<0.000000e+00> : vector<16xf32>
    %96 = vector.multi_reduction <add>, %95, %cst_58 [1] : vector<16x58xf32> to vector<16xf32>
    %97 = vector.shape_cast %96 : vector<16xf32> to vector<16x1xf32>
    %cst_59 = arith.constant 5.800000e+01 : f32
    %98 = vector.broadcast %cst_59 : f32 to vector<16x1xf32>
    %99 = arith.divf %97, %98 : vector<16x1xf32>
    %100 = vector.broadcast %99 : vector<16x1xf32> to vector<16x58xf32>
    %101 = arith.subf %95, %100 : vector<16x58xf32>
    %102 = arith.mulf %101, %101 : vector<16x58xf32>
    %cst_60 = arith.constant dense<0.000000e+00> : vector<16xf32>
    %103 = vector.multi_reduction <add>, %102, %cst_60 [1] : vector<16x58xf32> to vector<16xf32>
    %104 = vector.shape_cast %103 : vector<16xf32> to vector<16x1xf32>
    %cst_61 = arith.constant 5.800000e+01 : f32
    %105 = vector.broadcast %cst_61 : f32 to vector<16x1xf32>
    %106 = arith.divf %104, %105 : vector<16x1xf32>
    %107 = vector.broadcast %99 : vector<16x1xf32> to vector<16x58xf32>
    %108 = arith.subf %95, %107 : vector<16x58xf32>
    %cst_62 = arith.constant 9.99999974E-6 : f32
    %109 = vector.broadcast %cst_62 : f32 to vector<16x1xf32>
    %110 = arith.addf %106, %109 : vector<16x1xf32>
    %111 = math.rsqrt %110 : vector<16x1xf32>
    %112 = vector.broadcast %111 : vector<16x1xf32> to vector<16x58xf32>
    %113 = arith.mulf %108, %112 : vector<16x58xf32>
    %c0_63 = arith.constant 0 : index
    %c0_64 = arith.constant 0 : index
    %114 = vector.load %arg11[%c0_63, %c0_64] : memref<58x29xf32, #tpu.memory_space<vmem>>, vector<58x29xf32>
    %cst_65 = arith.constant dense<0.000000e+00> : vector<16x29xf32>
    %115 = tpu.matmul %113, %114, %cst_65 {dimension_numbers = #tpu.dot_dimension_numbers<[1], [0], [0], [1], [0, 0, 1, 1], [], []>} : vector<16x58xf32>, vector<58x29xf32>, vector<16x29xf32> -> vector<16x29xf32>
    %c0_66 = arith.constant 0 : index
    %c0_67 = arith.constant 0 : index
    %116 = vector.load %arg12[%c0_66, %c0_67] : memref<58x29xf32, #tpu.memory_space<vmem>>, vector<58x29xf32>
    %cst_68 = arith.constant dense<0.000000e+00> : vector<16x29xf32>
    %117 = tpu.matmul %113, %116, %cst_68 {dimension_numbers = #tpu.dot_dimension_numbers<[1], [0], [0], [1], [0, 0, 1, 1], [], []>} : vector<16x58xf32>, vector<58x29xf32>, vector<16x29xf32> -> vector<16x29xf32>
    %118 = arith.maximumf %115, %117 : vector<16x29xf32>
    %cst_69 = arith.constant 0.000000e+00 : f32
    %119 = vector.broadcast %cst_69 : f32 to vector<16x29xf32>
    %120 = arith.maximumf %118, %119 : vector<16x29xf32>
    %c0_70 = arith.constant 0 : index
    %c0_71 = arith.constant 0 : index
    %c0_72 = arith.constant 0 : index
    %121 = vector.load %arg7[%c0_70, %c0_71, %c0_72] : memref<3x24x16xf32, #tpu.memory_space<vmem>>, vector<1x24x16xf32>
    %122 = vector.shape_cast %121 : vector<1x24x16xf32> to vector<24x16xf32>
    %123 = vector.extract_strided_slice %120 {offsets = [0, 0], sizes = [16, 27], strides = [1, 1]} : vector<16x29xf32> to vector<16x27xf32>
    %cst_73 = arith.constant dense<0.000000e+00> : vector<24x27xf32>
    %124 = tpu.matmul %122, %123, %cst_73 {dimension_numbers = #tpu.dot_dimension_numbers<[1], [0], [0], [1], [0, 0, 1, 1], [], []>} : vector<24x16xf32>, vector<16x27xf32>, vector<24x27xf32> -> vector<24x27xf32>
    %c1_74 = arith.constant 1 : index
    %c0_75 = arith.constant 0 : index
    %c0_76 = arith.constant 0 : index
    %125 = vector.load %arg7[%c1_74, %c0_75, %c0_76] : memref<3x24x16xf32, #tpu.memory_space<vmem>>, vector<1x24x16xf32>
    %126 = vector.shape_cast %125 : vector<1x24x16xf32> to vector<24x16xf32>
    %127 = vector.extract_strided_slice %120 {offsets = [0, 1], sizes = [16, 27], strides = [1, 1]} : vector<16x29xf32> to vector<16x27xf32>
    %cst_77 = arith.constant dense<0.000000e+00> : vector<24x27xf32>
    %128 = tpu.matmul %126, %127, %cst_77 {dimension_numbers = #tpu.dot_dimension_numbers<[1], [0], [0], [1], [0, 0, 1, 1], [], []>} : vector<24x16xf32>, vector<16x27xf32>, vector<24x27xf32> -> vector<24x27xf32>
    %129 = arith.addf %124, %128 : vector<24x27xf32>
    %c2_78 = arith.constant 2 : index
    %c0_79 = arith.constant 0 : index
    %c0_80 = arith.constant 0 : index
    %130 = vector.load %arg7[%c2_78, %c0_79, %c0_80] : memref<3x24x16xf32, #tpu.memory_space<vmem>>, vector<1x24x16xf32>
    %131 = vector.shape_cast %130 : vector<1x24x16xf32> to vector<24x16xf32>
    %132 = vector.extract_strided_slice %120 {offsets = [0, 2], sizes = [16, 27], strides = [1, 1]} : vector<16x29xf32> to vector<16x27xf32>
    %cst_81 = arith.constant dense<0.000000e+00> : vector<24x27xf32>
    %133 = tpu.matmul %131, %132, %cst_81 {dimension_numbers = #tpu.dot_dimension_numbers<[1], [0], [0], [1], [0, 0, 1, 1], [], []>} : vector<24x16xf32>, vector<16x27xf32>, vector<24x27xf32> -> vector<24x27xf32>
    %134 = arith.addf %129, %133 : vector<24x27xf32>
    %c0_82 = arith.constant 0 : index
    %c0_83 = arith.constant 0 : index
    %135 = vector.load %arg8[%c0_82, %c0_83] : memref<24x1xf32, #tpu.memory_space<vmem>>, vector<24x1xf32>
    %136 = vector.broadcast %135 : vector<24x1xf32> to vector<24x27xf32>
    %137 = arith.addf %134, %136 : vector<24x27xf32>
    %cst_84 = arith.constant dense<0.000000e+00> : vector<24xf32>
    %138 = vector.multi_reduction <add>, %137, %cst_84 [1] : vector<24x27xf32> to vector<24xf32>
    %139 = vector.shape_cast %138 : vector<24xf32> to vector<24x1xf32>
    %cst_85 = arith.constant 2.700000e+01 : f32
    %140 = vector.broadcast %cst_85 : f32 to vector<24x1xf32>
    %141 = arith.divf %139, %140 : vector<24x1xf32>
    %142 = vector.broadcast %141 : vector<24x1xf32> to vector<24x27xf32>
    %143 = arith.subf %137, %142 : vector<24x27xf32>
    %144 = arith.mulf %143, %143 : vector<24x27xf32>
    %cst_86 = arith.constant dense<0.000000e+00> : vector<24xf32>
    %145 = vector.multi_reduction <add>, %144, %cst_86 [1] : vector<24x27xf32> to vector<24xf32>
    %146 = vector.shape_cast %145 : vector<24xf32> to vector<24x1xf32>
    %cst_87 = arith.constant 2.700000e+01 : f32
    %147 = vector.broadcast %cst_87 : f32 to vector<24x1xf32>
    %148 = arith.divf %146, %147 : vector<24x1xf32>
    %149 = vector.broadcast %141 : vector<24x1xf32> to vector<24x27xf32>
    %150 = arith.subf %137, %149 : vector<24x27xf32>
    %cst_88 = arith.constant 9.99999974E-6 : f32
    %151 = vector.broadcast %cst_88 : f32 to vector<24x1xf32>
    %152 = arith.addf %148, %151 : vector<24x1xf32>
    %153 = math.rsqrt %152 : vector<24x1xf32>
    %154 = vector.broadcast %153 : vector<24x1xf32> to vector<24x27xf32>
    %155 = arith.mulf %150, %154 : vector<24x27xf32>
    %c0_89 = arith.constant 0 : index
    %c0_90 = arith.constant 0 : index
    %156 = vector.load %arg13[%c0_89, %c0_90] : memref<27x13xf32, #tpu.memory_space<vmem>>, vector<27x13xf32>
    %cst_91 = arith.constant dense<0.000000e+00> : vector<24x13xf32>
    %157 = tpu.matmul %155, %156, %cst_91 {dimension_numbers = #tpu.dot_dimension_numbers<[1], [0], [0], [1], [0, 0, 1, 1], [], []>} : vector<24x27xf32>, vector<27x13xf32>, vector<24x13xf32> -> vector<24x13xf32>
    %c0_92 = arith.constant 0 : index
    %c0_93 = arith.constant 0 : index
    %158 = vector.load %arg14[%c0_92, %c0_93] : memref<27x13xf32, #tpu.memory_space<vmem>>, vector<27x13xf32>
    %cst_94 = arith.constant dense<0.000000e+00> : vector<24x13xf32>
    %159 = tpu.matmul %155, %158, %cst_94 {dimension_numbers = #tpu.dot_dimension_numbers<[1], [0], [0], [1], [0, 0, 1, 1], [], []>} : vector<24x27xf32>, vector<27x13xf32>, vector<24x13xf32> -> vector<24x13xf32>
    %160 = arith.maximumf %157, %159 : vector<24x13xf32>
    %cst_95 = arith.constant 0.000000e+00 : f32
    %161 = vector.broadcast %cst_95 : f32 to vector<24x13xf32>
    %162 = arith.maximumf %160, %161 : vector<24x13xf32>
    %c0_96 = arith.constant 0 : index
    %c0_97 = arith.constant 0 : index
    %c0_98 = arith.constant 0 : index
    %163 = vector.load %arg9[%c0_96, %c0_97, %c0_98] : memref<3x24x24xf32, #tpu.memory_space<vmem>>, vector<1x24x24xf32>
    %164 = vector.shape_cast %163 : vector<1x24x24xf32> to vector<24x24xf32>
    %165 = vector.extract_strided_slice %162 {offsets = [0, 0], sizes = [24, 11], strides = [1, 1]} : vector<24x13xf32> to vector<24x11xf32>
    %cst_99 = arith.constant dense<0.000000e+00> : vector<24x11xf32>
    %166 = tpu.matmul %164, %165, %cst_99 {dimension_numbers = #tpu.dot_dimension_numbers<[1], [0], [0], [1], [0, 0, 1, 1], [], []>} : vector<24x24xf32>, vector<24x11xf32>, vector<24x11xf32> -> vector<24x11xf32>
    %c1_100 = arith.constant 1 : index
    %c0_101 = arith.constant 0 : index
    %c0_102 = arith.constant 0 : index
    %167 = vector.load %arg9[%c1_100, %c0_101, %c0_102] : memref<3x24x24xf32, #tpu.memory_space<vmem>>, vector<1x24x24xf32>
    %168 = vector.shape_cast %167 : vector<1x24x24xf32> to vector<24x24xf32>
    %169 = vector.extract_strided_slice %162 {offsets = [0, 1], sizes = [24, 11], strides = [1, 1]} : vector<24x13xf32> to vector<24x11xf32>
    %cst_103 = arith.constant dense<0.000000e+00> : vector<24x11xf32>
    %170 = tpu.matmul %168, %169, %cst_103 {dimension_numbers = #tpu.dot_dimension_numbers<[1], [0], [0], [1], [0, 0, 1, 1], [], []>} : vector<24x24xf32>, vector<24x11xf32>, vector<24x11xf32> -> vector<24x11xf32>
    %171 = arith.addf %166, %170 : vector<24x11xf32>
    %c2_104 = arith.constant 2 : index
    %c0_105 = arith.constant 0 : index
    %c0_106 = arith.constant 0 : index
    %172 = vector.load %arg9[%c2_104, %c0_105, %c0_106] : memref<3x24x24xf32, #tpu.memory_space<vmem>>, vector<1x24x24xf32>
    %173 = vector.shape_cast %172 : vector<1x24x24xf32> to vector<24x24xf32>
    %174 = vector.extract_strided_slice %162 {offsets = [0, 2], sizes = [24, 11], strides = [1, 1]} : vector<24x13xf32> to vector<24x11xf32>
    %cst_107 = arith.constant dense<0.000000e+00> : vector<24x11xf32>
    %175 = tpu.matmul %173, %174, %cst_107 {dimension_numbers = #tpu.dot_dimension_numbers<[1], [0], [0], [1], [0, 0, 1, 1], [], []>} : vector<24x24xf32>, vector<24x11xf32>, vector<24x11xf32> -> vector<24x11xf32>
    %176 = arith.addf %171, %175 : vector<24x11xf32>
    %c0_108 = arith.constant 0 : index
    %c0_109 = arith.constant 0 : index
    %177 = vector.load %arg10[%c0_108, %c0_109] : memref<24x1xf32, #tpu.memory_space<vmem>>, vector<24x1xf32>
    %178 = vector.broadcast %177 : vector<24x1xf32> to vector<24x11xf32>
    %179 = arith.addf %176, %178 : vector<24x11xf32>
    %cst_110 = arith.constant dense<0.000000e+00> : vector<24xf32>
    %180 = vector.multi_reduction <add>, %179, %cst_110 [1] : vector<24x11xf32> to vector<24xf32>
    %181 = vector.shape_cast %180 : vector<24xf32> to vector<24x1xf32>
    %cst_111 = arith.constant 1.100000e+01 : f32
    %182 = vector.broadcast %cst_111 : f32 to vector<24x1xf32>
    %183 = arith.divf %181, %182 : vector<24x1xf32>
    %184 = vector.broadcast %183 : vector<24x1xf32> to vector<24x11xf32>
    %185 = arith.subf %179, %184 : vector<24x11xf32>
    %186 = arith.mulf %185, %185 : vector<24x11xf32>
    %cst_112 = arith.constant dense<0.000000e+00> : vector<24xf32>
    %187 = vector.multi_reduction <add>, %186, %cst_112 [1] : vector<24x11xf32> to vector<24xf32>
    %188 = vector.shape_cast %187 : vector<24xf32> to vector<24x1xf32>
    %cst_113 = arith.constant 1.100000e+01 : f32
    %189 = vector.broadcast %cst_113 : f32 to vector<24x1xf32>
    %190 = arith.divf %188, %189 : vector<24x1xf32>
    %191 = vector.broadcast %183 : vector<24x1xf32> to vector<24x11xf32>
    %192 = arith.subf %179, %191 : vector<24x11xf32>
    %cst_114 = arith.constant 9.99999974E-6 : f32
    %193 = vector.broadcast %cst_114 : f32 to vector<24x1xf32>
    %194 = arith.addf %190, %193 : vector<24x1xf32>
    %195 = math.rsqrt %194 : vector<24x1xf32>
    %196 = vector.broadcast %195 : vector<24x1xf32> to vector<24x11xf32>
    %197 = arith.mulf %192, %196 : vector<24x11xf32>
    %cst_115 = arith.constant 0.000000e+00 : f32
    %198 = vector.broadcast %cst_115 : f32 to vector<24x11xf32>
    %199 = arith.maximumf %197, %198 : vector<24x11xf32>
    %c0_116 = arith.constant 0 : index
    %c0_117 = arith.constant 0 : index
    %200 = vector.load %arg23[%c0_116, %c0_117] : memref<48x11xf32, #tpu.memory_space<vmem>>, vector<24x11xf32>
    tpu.vector_store %arg23[%c0_116, %c0_117], %199 {strides = array<i32>} : memref<48x11xf32, #tpu.memory_space<vmem>>, vector<24x11xf32>,
    %c1_118 = arith.constant 1 : index
    %c0_119 = arith.constant 0 : index
    %c0_120 = arith.constant 0 : index
    %201 = vector.load %arg0[%c1_118, %c0_119, %c0_120] : memref<2x4x64xf32, #tpu.memory_space<vmem>>, vector<1x4x64xf32>
    %202 = vector.shape_cast %201 : vector<1x4x64xf32> to vector<4x64xf32>
    %c0_121 = arith.constant 0 : index
    %c0_122 = arith.constant 0 : index
    %c0_123 = arith.constant 0 : index
    %203 = vector.load %arg1[%c0_121, %c0_122, %c0_123] : memref<3x8x4xf32, #tpu.memory_space<vmem>>, vector<1x8x4xf32>
    %204 = vector.shape_cast %203 : vector<1x8x4xf32> to vector<8x4xf32>
    %205 = vector.extract_strided_slice %202 {offsets = [0, 0], sizes = [4, 62], strides = [1, 1]} : vector<4x64xf32> to vector<4x62xf32>
    %cst_124 = arith.constant dense<0.000000e+00> : vector<8x62xf32>
    %206 = tpu.matmul %204, %205, %cst_124 {dimension_numbers = #tpu.dot_dimension_numbers<[1], [0], [0], [1], [0, 0, 1, 1], [], []>} : vector<8x4xf32>, vector<4x62xf32>, vector<8x62xf32> -> vector<8x62xf32>
    %c1_125 = arith.constant 1 : index
    %c0_126 = arith.constant 0 : index
    %c0_127 = arith.constant 0 : index
    %207 = vector.load %arg1[%c1_125, %c0_126, %c0_127] : memref<3x8x4xf32, #tpu.memory_space<vmem>>, vector<1x8x4xf32>
    %208 = vector.shape_cast %207 : vector<1x8x4xf32> to vector<8x4xf32>
    %209 = vector.extract_strided_slice %202 {offsets = [0, 1], sizes = [4, 62], strides = [1, 1]} : vector<4x64xf32> to vector<4x62xf32>
    %cst_128 = arith.constant dense<0.000000e+00> : vector<8x62xf32>
    %210 = tpu.matmul %208, %209, %cst_128 {dimension_numbers = #tpu.dot_dimension_numbers<[1], [0], [0], [1], [0, 0, 1, 1], [], []>} : vector<8x4xf32>, vector<4x62xf32>, vector<8x62xf32> -> vector<8x62xf32>
    %211 = arith.addf %206, %210 : vector<8x62xf32>
    %c2_129 = arith.constant 2 : index
    %c0_130 = arith.constant 0 : index
    %c0_131 = arith.constant 0 : index
    %212 = vector.load %arg1[%c2_129, %c0_130, %c0_131] : memref<3x8x4xf32, #tpu.memory_space<vmem>>, vector<1x8x4xf32>
    %213 = vector.shape_cast %212 : vector<1x8x4xf32> to vector<8x4xf32>
    %214 = vector.extract_strided_slice %202 {offsets = [0, 2], sizes = [4, 62], strides = [1, 1]} : vector<4x64xf32> to vector<4x62xf32>
    %cst_132 = arith.constant dense<0.000000e+00> : vector<8x62xf32>
    %215 = tpu.matmul %213, %214, %cst_132 {dimension_numbers = #tpu.dot_dimension_numbers<[1], [0], [0], [1], [0, 0, 1, 1], [], []>} : vector<8x4xf32>, vector<4x62xf32>, vector<8x62xf32> -> vector<8x62xf32>
    %216 = arith.addf %211, %215 : vector<8x62xf32>
    %c0_133 = arith.constant 0 : index
    %c0_134 = arith.constant 0 : index
    %217 = vector.load %arg2[%c0_133, %c0_134] : memref<8x1xf32, #tpu.memory_space<vmem>>, vector<8x1xf32>
    %218 = vector.broadcast %217 : vector<8x1xf32> to vector<8x62xf32>
    %219 = arith.addf %216, %218 : vector<8x62xf32>
    %cst_135 = arith.constant dense<0.000000e+00> : vector<8xf32>
    %220 = vector.multi_reduction <add>, %219, %cst_135 [1] : vector<8x62xf32> to vector<8xf32>
    %221 = vector.shape_cast %220 : vector<8xf32> to vector<8x1xf32>
    %cst_136 = arith.constant 6.200000e+01 : f32
    %222 = vector.broadcast %cst_136 : f32 to vector<8x1xf32>
    %223 = arith.divf %221, %222 : vector<8x1xf32>
    %224 = vector.broadcast %223 : vector<8x1xf32> to vector<8x62xf32>
    %225 = arith.subf %219, %224 : vector<8x62xf32>
    %226 = arith.mulf %225, %225 : vector<8x62xf32>
    %cst_137 = arith.constant dense<0.000000e+00> : vector<8xf32>
    %227 = vector.multi_reduction <add>, %226, %cst_137 [1] : vector<8x62xf32> to vector<8xf32>
    %228 = vector.shape_cast %227 : vector<8xf32> to vector<8x1xf32>
    %cst_138 = arith.constant 6.200000e+01 : f32
    %229 = vector.broadcast %cst_138 : f32 to vector<8x1xf32>
    %230 = arith.divf %228, %229 : vector<8x1xf32>
    %231 = vector.broadcast %223 : vector<8x1xf32> to vector<8x62xf32>
    %232 = arith.subf %219, %231 : vector<8x62xf32>
    %cst_139 = arith.constant 9.99999974E-6 : f32
    %233 = vector.broadcast %cst_139 : f32 to vector<8x1xf32>
    %234 = arith.addf %230, %233 : vector<8x1xf32>
    %235 = math.rsqrt %234 : vector<8x1xf32>
    %236 = vector.broadcast %235 : vector<8x1xf32> to vector<8x62xf32>
    %237 = arith.mulf %232, %236 : vector<8x62xf32>
    %cst_140 = arith.constant 0.000000e+00 : f32
    %238 = vector.broadcast %cst_140 : f32 to vector<8x62xf32>
    %239 = arith.maximumf %237, %238 : vector<8x62xf32>
    %c0_141 = arith.constant 0 : index
    %c0_142 = arith.constant 0 : index
    %c0_143 = arith.constant 0 : index
    %240 = vector.load %arg3[%c0_141, %c0_142, %c0_143] : memref<3x8x8xf32, #tpu.memory_space<vmem>>, vector<1x8x8xf32>
    %241 = vector.shape_cast %240 : vector<1x8x8xf32> to vector<8x8xf32>
    %242 = vector.extract_strided_slice %239 {offsets = [0, 0], sizes = [8, 60], strides = [1, 1]} : vector<8x62xf32> to vector<8x60xf32>
    %cst_144 = arith.constant dense<0.000000e+00> : vector<8x60xf32>
    %243 = tpu.matmul %241, %242, %cst_144 {dimension_numbers = #tpu.dot_dimension_numbers<[1], [0], [0], [1], [0, 0, 1, 1], [], []>} : vector<8x8xf32>, vector<8x60xf32>, vector<8x60xf32> -> vector<8x60xf32>
    %c1_145 = arith.constant 1 : index
    %c0_146 = arith.constant 0 : index
    %c0_147 = arith.constant 0 : index
    %244 = vector.load %arg3[%c1_145, %c0_146, %c0_147] : memref<3x8x8xf32, #tpu.memory_space<vmem>>, vector<1x8x8xf32>
    %245 = vector.shape_cast %244 : vector<1x8x8xf32> to vector<8x8xf32>
    %246 = vector.extract_strided_slice %239 {offsets = [0, 1], sizes = [8, 60], strides = [1, 1]} : vector<8x62xf32> to vector<8x60xf32>
    %cst_148 = arith.constant dense<0.000000e+00> : vector<8x60xf32>
    %247 = tpu.matmul %245, %246, %cst_148 {dimension_numbers = #tpu.dot_dimension_numbers<[1], [0], [0], [1], [0, 0, 1, 1], [], []>} : vector<8x8xf32>, vector<8x60xf32>, vector<8x60xf32> -> vector<8x60xf32>
    %248 = arith.addf %243, %247 : vector<8x60xf32>
    %c2_149 = arith.constant 2 : index
    %c0_150 = arith.constant 0 : index
    %c0_151 = arith.constant 0 : index
    %249 = vector.load %arg3[%c2_149, %c0_150, %c0_151] : memref<3x8x8xf32, #tpu.memory_space<vmem>>, vector<1x8x8xf32>
    %250 = vector.shape_cast %249 : vector<1x8x8xf32> to vector<8x8xf32>
    %251 = vector.extract_strided_slice %239 {offsets = [0, 2], sizes = [8, 60], strides = [1, 1]} : vector<8x62xf32> to vector<8x60xf32>
    %cst_152 = arith.constant dense<0.000000e+00> : vector<8x60xf32>
    %252 = tpu.matmul %250, %251, %cst_152 {dimension_numbers = #tpu.dot_dimension_numbers<[1], [0], [0], [1], [0, 0, 1, 1], [], []>} : vector<8x8xf32>, vector<8x60xf32>, vector<8x60xf32> -> vector<8x60xf32>
    %253 = arith.addf %248, %252 : vector<8x60xf32>
    %c0_153 = arith.constant 0 : index
    %c0_154 = arith.constant 0 : index
    %254 = vector.load %arg4[%c0_153, %c0_154] : memref<8x1xf32, #tpu.memory_space<vmem>>, vector<8x1xf32>
    %255 = vector.broadcast %254 : vector<8x1xf32> to vector<8x60xf32>
    %256 = arith.addf %253, %255 : vector<8x60xf32>
    %cst_155 = arith.constant dense<0.000000e+00> : vector<8xf32>
    %257 = vector.multi_reduction <add>, %256, %cst_155 [1] : vector<8x60xf32> to vector<8xf32>
    %258 = vector.shape_cast %257 : vector<8xf32> to vector<8x1xf32>
    %cst_156 = arith.constant 6.000000e+01 : f32
    %259 = vector.broadcast %cst_156 : f32 to vector<8x1xf32>
    %260 = arith.divf %258, %259 : vector<8x1xf32>
    %261 = vector.broadcast %260 : vector<8x1xf32> to vector<8x60xf32>
    %262 = arith.subf %256, %261 : vector<8x60xf32>
    %263 = arith.mulf %262, %262 : vector<8x60xf32>
    %cst_157 = arith.constant dense<0.000000e+00> : vector<8xf32>
    %264 = vector.multi_reduction <add>, %263, %cst_157 [1] : vector<8x60xf32> to vector<8xf32>
    %265 = vector.shape_cast %264 : vector<8xf32> to vector<8x1xf32>
    %cst_158 = arith.constant 6.000000e+01 : f32
    %266 = vector.broadcast %cst_158 : f32 to vector<8x1xf32>
    %267 = arith.divf %265, %266 : vector<8x1xf32>
    %268 = vector.broadcast %260 : vector<8x1xf32> to vector<8x60xf32>
    %269 = arith.subf %256, %268 : vector<8x60xf32>
    %cst_159 = arith.constant 9.99999974E-6 : f32
    %270 = vector.broadcast %cst_159 : f32 to vector<8x1xf32>
    %271 = arith.addf %267, %270 : vector<8x1xf32>
    %272 = math.rsqrt %271 : vector<8x1xf32>
    %273 = vector.broadcast %272 : vector<8x1xf32> to vector<8x60xf32>
    %274 = arith.mulf %269, %273 : vector<8x60xf32>
    %cst_160 = arith.constant 0.000000e+00 : f32
    %275 = vector.broadcast %cst_160 : f32 to vector<8x60xf32>
    %276 = arith.maximumf %274, %275 : vector<8x60xf32>
    %c0_161 = arith.constant 0 : index
    %c0_162 = arith.constant 0 : index
    %c0_163 = arith.constant 0 : index
    %277 = vector.load %arg5[%c0_161, %c0_162, %c0_163] : memref<3x16x8xf32, #tpu.memory_space<vmem>>, vector<1x16x8xf32>
    %278 = vector.shape_cast %277 : vector<1x16x8xf32> to vector<16x8xf32>
    %279 = vector.extract_strided_slice %276 {offsets = [0, 0], sizes = [8, 58], strides = [1, 1]} : vector<8x60xf32> to vector<8x58xf32>
    %cst_164 = arith.constant dense<0.000000e+00> : vector<16x58xf32>
    %280 = tpu.matmul %278, %279, %cst_164 {dimension_numbers = #tpu.dot_dimension_numbers<[1], [0], [0], [1], [0, 0, 1, 1], [], []>} : vector<16x8xf32>, vector<8x58xf32>, vector<16x58xf32> -> vector<16x58xf32>
    %c1_165 = arith.constant 1 : index
    %c0_166 = arith.constant 0 : index
    %c0_167 = arith.constant 0 : index
    %281 = vector.load %arg5[%c1_165, %c0_166, %c0_167] : memref<3x16x8xf32, #tpu.memory_space<vmem>>, vector<1x16x8xf32>
    %282 = vector.shape_cast %281 : vector<1x16x8xf32> to vector<16x8xf32>
    %283 = vector.extract_strided_slice %276 {offsets = [0, 1], sizes = [8, 58], strides = [1, 1]} : vector<8x60xf32> to vector<8x58xf32>
    %cst_168 = arith.constant dense<0.000000e+00> : vector<16x58xf32>
    %284 = tpu.matmul %282, %283, %cst_168 {dimension_numbers = #tpu.dot_dimension_numbers<[1], [0], [0], [1], [0, 0, 1, 1], [], []>} : vector<16x8xf32>, vector<8x58xf32>, vector<16x58xf32> -> vector<16x58xf32>
    %285 = arith.addf %280, %284 : vector<16x58xf32>
    %c2_169 = arith.constant 2 : index
    %c0_170 = arith.constant 0 : index
    %c0_171 = arith.constant 0 : index
    %286 = vector.load %arg5[%c2_169, %c0_170, %c0_171] : memref<3x16x8xf32, #tpu.memory_space<vmem>>, vector<1x16x8xf32>
    %287 = vector.shape_cast %286 : vector<1x16x8xf32> to vector<16x8xf32>
    %288 = vector.extract_strided_slice %276 {offsets = [0, 2], sizes = [8, 58], strides = [1, 1]} : vector<8x60xf32> to vector<8x58xf32>
    %cst_172 = arith.constant dense<0.000000e+00> : vector<16x58xf32>
    %289 = tpu.matmul %287, %288, %cst_172 {dimension_numbers = #tpu.dot_dimension_numbers<[1], [0], [0], [1], [0, 0, 1, 1], [], []>} : vector<16x8xf32>, vector<8x58xf32>, vector<16x58xf32> -> vector<16x58xf32>
    %290 = arith.addf %285, %289 : vector<16x58xf32>
    %c0_173 = arith.constant 0 : index
    %c0_174 = arith.constant 0 : index
    %291 = vector.load %arg6[%c0_173, %c0_174] : memref<16x1xf32, #tpu.memory_space<vmem>>, vector<16x1xf32>
    %292 = vector.broadcast %291 : vector<16x1xf32> to vector<16x58xf32>
    %293 = arith.addf %290, %292 : vector<16x58xf32>
    %cst_175 = arith.constant dense<0.000000e+00> : vector<16xf32>
    %294 = vector.multi_reduction <add>, %293, %cst_175 [1] : vector<16x58xf32> to vector<16xf32>
    %295 = vector.shape_cast %294 : vector<16xf32> to vector<16x1xf32>
    %cst_176 = arith.constant 5.800000e+01 : f32
    %296 = vector.broadcast %cst_176 : f32 to vector<16x1xf32>
    %297 = arith.divf %295, %296 : vector<16x1xf32>
    %298 = vector.broadcast %297 : vector<16x1xf32> to vector<16x58xf32>
    %299 = arith.subf %293, %298 : vector<16x58xf32>
    %300 = arith.mulf %299, %299 : vector<16x58xf32>
    %cst_177 = arith.constant dense<0.000000e+00> : vector<16xf32>
    %301 = vector.multi_reduction <add>, %300, %cst_177 [1] : vector<16x58xf32> to vector<16xf32>
    %302 = vector.shape_cast %301 : vector<16xf32> to vector<16x1xf32>
    %cst_178 = arith.constant 5.800000e+01 : f32
    %303 = vector.broadcast %cst_178 : f32 to vector<16x1xf32>
    %304 = arith.divf %302, %303 : vector<16x1xf32>
    %305 = vector.broadcast %297 : vector<16x1xf32> to vector<16x58xf32>
    %306 = arith.subf %293, %305 : vector<16x58xf32>
    %cst_179 = arith.constant 9.99999974E-6 : f32
    %307 = vector.broadcast %cst_179 : f32 to vector<16x1xf32>
    %308 = arith.addf %304, %307 : vector<16x1xf32>
    %309 = math.rsqrt %308 : vector<16x1xf32>
    %310 = vector.broadcast %309 : vector<16x1xf32> to vector<16x58xf32>
    %311 = arith.mulf %306, %310 : vector<16x58xf32>
    %c0_180 = arith.constant 0 : index
    %c0_181 = arith.constant 0 : index
    %312 = vector.load %arg11[%c0_180, %c0_181] : memref<58x29xf32, #tpu.memory_space<vmem>>, vector<58x29xf32>
    %cst_182 = arith.constant dense<0.000000e+00> : vector<16x29xf32>
    %313 = tpu.matmul %311, %312, %cst_182 {dimension_numbers = #tpu.dot_dimension_numbers<[1], [0], [0], [1], [0, 0, 1, 1], [], []>} : vector<16x58xf32>, vector<58x29xf32>, vector<16x29xf32> -> vector<16x29xf32>
    %c0_183 = arith.constant 0 : index
    %c0_184 = arith.constant 0 : index
    %314 = vector.load %arg12[%c0_183, %c0_184] : memref<58x29xf32, #tpu.memory_space<vmem>>, vector<58x29xf32>
    %cst_185 = arith.constant dense<0.000000e+00> : vector<16x29xf32>
    %315 = tpu.matmul %311, %314, %cst_185 {dimension_numbers = #tpu.dot_dimension_numbers<[1], [0], [0], [1], [0, 0, 1, 1], [], []>} : vector<16x58xf32>, vector<58x29xf32>, vector<16x29xf32> -> vector<16x29xf32>
    %316 = arith.maximumf %313, %315 : vector<16x29xf32>
    %cst_186 = arith.constant 0.000000e+00 : f32
    %317 = vector.broadcast %cst_186 : f32 to vector<16x29xf32>
    %318 = arith.maximumf %316, %317 : vector<16x29xf32>
    %c0_187 = arith.constant 0 : index
    %c0_188 = arith.constant 0 : index
    %c0_189 = arith.constant 0 : index
    %319 = vector.load %arg7[%c0_187, %c0_188, %c0_189] : memref<3x24x16xf32, #tpu.memory_space<vmem>>, vector<1x24x16xf32>
    %320 = vector.shape_cast %319 : vector<1x24x16xf32> to vector<24x16xf32>
    %321 = vector.extract_strided_slice %318 {offsets = [0, 0], sizes = [16, 27], strides = [1, 1]} : vector<16x29xf32> to vector<16x27xf32>
    %cst_190 = arith.constant dense<0.000000e+00> : vector<24x27xf32>
    %322 = tpu.matmul %320, %321, %cst_190 {dimension_numbers = #tpu.dot_dimension_numbers<[1], [0], [0], [1], [0, 0, 1, 1], [], []>} : vector<24x16xf32>, vector<16x27xf32>, vector<24x27xf32> -> vector<24x27xf32>
    %c1_191 = arith.constant 1 : index
    %c0_192 = arith.constant 0 : index
    %c0_193 = arith.constant 0 : index
    %323 = vector.load %arg7[%c1_191, %c0_192, %c0_193] : memref<3x24x16xf32, #tpu.memory_space<vmem>>, vector<1x24x16xf32>
    %324 = vector.shape_cast %323 : vector<1x24x16xf32> to vector<24x16xf32>
    %325 = vector.extract_strided_slice %318 {offsets = [0, 1], sizes = [16, 27], strides = [1, 1]} : vector<16x29xf32> to vector<16x27xf32>
    %cst_194 = arith.constant dense<0.000000e+00> : vector<24x27xf32>
    %326 = tpu.matmul %324, %325, %cst_194 {dimension_numbers = #tpu.dot_dimension_numbers<[1], [0], [0], [1], [0, 0, 1, 1], [], []>} : vector<24x16xf32>, vector<16x27xf32>, vector<24x27xf32> -> vector<24x27xf32>
    %327 = arith.addf %322, %326 : vector<24x27xf32>
    %c2_195 = arith.constant 2 : index
    %c0_196 = arith.constant 0 : index
    %c0_197 = arith.constant 0 : index
    %328 = vector.load %arg7[%c2_195, %c0_196, %c0_197] : memref<3x24x16xf32, #tpu.memory_space<vmem>>, vector<1x24x16xf32>
    %329 = vector.shape_cast %328 : vector<1x24x16xf32> to vector<24x16xf32>
    %330 = vector.extract_strided_slice %318 {offsets = [0, 2], sizes = [16, 27], strides = [1, 1]} : vector<16x29xf32> to vector<16x27xf32>
    %cst_198 = arith.constant dense<0.000000e+00> : vector<24x27xf32>
    %331 = tpu.matmul %329, %330, %cst_198 {dimension_numbers = #tpu.dot_dimension_numbers<[1], [0], [0], [1], [0, 0, 1, 1], [], []>} : vector<24x16xf32>, vector<16x27xf32>, vector<24x27xf32> -> vector<24x27xf32>
    %332 = arith.addf %327, %331 : vector<24x27xf32>
    %c0_199 = arith.constant 0 : index
    %c0_200 = arith.constant 0 : index
    %333 = vector.load %arg8[%c0_199, %c0_200] : memref<24x1xf32, #tpu.memory_space<vmem>>, vector<24x1xf32>
    %334 = vector.broadcast %333 : vector<24x1xf32> to vector<24x27xf32>
    %335 = arith.addf %332, %334 : vector<24x27xf32>
    %cst_201 = arith.constant dense<0.000000e+00> : vector<24xf32>
    %336 = vector.multi_reduction <add>, %335, %cst_201 [1] : vector<24x27xf32> to vector<24xf32>
    %337 = vector.shape_cast %336 : vector<24xf32> to vector<24x1xf32>
    %cst_202 = arith.constant 2.700000e+01 : f32
    %338 = vector.broadcast %cst_202 : f32 to vector<24x1xf32>
    %339 = arith.divf %337, %338 : vector<24x1xf32>
    %340 = vector.broadcast %339 : vector<24x1xf32> to vector<24x27xf32>
    %341 = arith.subf %335, %340 : vector<24x27xf32>
    %342 = arith.mulf %341, %341 : vector<24x27xf32>
    %cst_203 = arith.constant dense<0.000000e+00> : vector<24xf32>
    %343 = vector.multi_reduction <add>, %342, %cst_203 [1] : vector<24x27xf32> to vector<24xf32>
    %344 = vector.shape_cast %343 : vector<24xf32> to vector<24x1xf32>
    %cst_204 = arith.constant 2.700000e+01 : f32
    %345 = vector.broadcast %cst_204 : f32 to vector<24x1xf32>
    %346 = arith.divf %344, %345 : vector<24x1xf32>
    %347 = vector.broadcast %339 : vector<24x1xf32> to vector<24x27xf32>
    %348 = arith.subf %335, %347 : vector<24x27xf32>
    %cst_205 = arith.constant 9.99999974E-6 : f32
    %349 = vector.broadcast %cst_205 : f32 to vector<24x1xf32>
    %350 = arith.addf %346, %349 : vector<24x1xf32>
    %351 = math.rsqrt %350 : vector<24x1xf32>
    %352 = vector.broadcast %351 : vector<24x1xf32> to vector<24x27xf32>
    %353 = arith.mulf %348, %352 : vector<24x27xf32>
    %c0_206 = arith.constant 0 : index
    %c0_207 = arith.constant 0 : index
    %354 = vector.load %arg13[%c0_206, %c0_207] : memref<27x13xf32, #tpu.memory_space<vmem>>, vector<27x13xf32>
    %cst_208 = arith.constant dense<0.000000e+00> : vector<24x13xf32>
    %355 = tpu.matmul %353, %354, %cst_208 {dimension_numbers = #tpu.dot_dimension_numbers<[1], [0], [0], [1], [0, 0, 1, 1], [], []>} : vector<24x27xf32>, vector<27x13xf32>, vector<24x13xf32> -> vector<24x13xf32>
    %c0_209 = arith.constant 0 : index
    %c0_210 = arith.constant 0 : index
    %356 = vector.load %arg14[%c0_209, %c0_210] : memref<27x13xf32, #tpu.memory_space<vmem>>, vector<27x13xf32>
    %cst_211 = arith.constant dense<0.000000e+00> : vector<24x13xf32>
    %357 = tpu.matmul %353, %356, %cst_211 {dimension_numbers = #tpu.dot_dimension_numbers<[1], [0], [0], [1], [0, 0, 1, 1], [], []>} : vector<24x27xf32>, vector<27x13xf32>, vector<24x13xf32> -> vector<24x13xf32>
    %358 = arith.maximumf %355, %357 : vector<24x13xf32>
    %cst_212 = arith.constant 0.000000e+00 : f32
    %359 = vector.broadcast %cst_212 : f32 to vector<24x13xf32>
    %360 = arith.maximumf %358, %359 : vector<24x13xf32>
    %c0_213 = arith.constant 0 : index
    %c0_214 = arith.constant 0 : index
    %c0_215 = arith.constant 0 : index
    %361 = vector.load %arg9[%c0_213, %c0_214, %c0_215] : memref<3x24x24xf32, #tpu.memory_space<vmem>>, vector<1x24x24xf32>
    %362 = vector.shape_cast %361 : vector<1x24x24xf32> to vector<24x24xf32>
    %363 = vector.extract_strided_slice %360 {offsets = [0, 0], sizes = [24, 11], strides = [1, 1]} : vector<24x13xf32> to vector<24x11xf32>
    %cst_216 = arith.constant dense<0.000000e+00> : vector<24x11xf32>
    %364 = tpu.matmul %362, %363, %cst_216 {dimension_numbers = #tpu.dot_dimension_numbers<[1], [0], [0], [1], [0, 0, 1, 1], [], []>} : vector<24x24xf32>, vector<24x11xf32>, vector<24x11xf32> -> vector<24x11xf32>
    %c1_217 = arith.constant 1 : index
    %c0_218 = arith.constant 0 : index
    %c0_219 = arith.constant 0 : index
    %365 = vector.load %arg9[%c1_217, %c0_218, %c0_219] : memref<3x24x24xf32, #tpu.memory_space<vmem>>, vector<1x24x24xf32>
    %366 = vector.shape_cast %365 : vector<1x24x24xf32> to vector<24x24xf32>
    %367 = vector.extract_strided_slice %360 {offsets = [0, 1], sizes = [24, 11], strides = [1, 1]} : vector<24x13xf32> to vector<24x11xf32>
    %cst_220 = arith.constant dense<0.000000e+00> : vector<24x11xf32>
    %368 = tpu.matmul %366, %367, %cst_220 {dimension_numbers = #tpu.dot_dimension_numbers<[1], [0], [0], [1], [0, 0, 1, 1], [], []>} : vector<24x24xf32>, vector<24x11xf32>, vector<24x11xf32> -> vector<24x11xf32>
    %369 = arith.addf %364, %368 : vector<24x11xf32>
    %c2_221 = arith.constant 2 : index
    %c0_222 = arith.constant 0 : index
    %c0_223 = arith.constant 0 : index
    %370 = vector.load %arg9[%c2_221, %c0_222, %c0_223] : memref<3x24x24xf32, #tpu.memory_space<vmem>>, vector<1x24x24xf32>
    %371 = vector.shape_cast %370 : vector<1x24x24xf32> to vector<24x24xf32>
    %372 = vector.extract_strided_slice %360 {offsets = [0, 2], sizes = [24, 11], strides = [1, 1]} : vector<24x13xf32> to vector<24x11xf32>
    %cst_224 = arith.constant dense<0.000000e+00> : vector<24x11xf32>
    %373 = tpu.matmul %371, %372, %cst_224 {dimension_numbers = #tpu.dot_dimension_numbers<[1], [0], [0], [1], [0, 0, 1, 1], [], []>} : vector<24x24xf32>, vector<24x11xf32>, vector<24x11xf32> -> vector<24x11xf32>
    %374 = arith.addf %369, %373 : vector<24x11xf32>
    %c0_225 = arith.constant 0 : index
    %c0_226 = arith.constant 0 : index
    %375 = vector.load %arg10[%c0_225, %c0_226] : memref<24x1xf32, #tpu.memory_space<vmem>>, vector<24x1xf32>
    %376 = vector.broadcast %375 : vector<24x1xf32> to vector<24x11xf32>
    %377 = arith.addf %374, %376 : vector<24x11xf32>
    %cst_227 = arith.constant dense<0.000000e+00> : vector<24xf32>
    %378 = vector.multi_reduction <add>, %377, %cst_227 [1] : vector<24x11xf32> to vector<24xf32>
    %379 = vector.shape_cast %378 : vector<24xf32> to vector<24x1xf32>
    %cst_228 = arith.constant 1.100000e+01 : f32
    %380 = vector.broadcast %cst_228 : f32 to vector<24x1xf32>
    %381 = arith.divf %379, %380 : vector<24x1xf32>
    %382 = vector.broadcast %381 : vector<24x1xf32> to vector<24x11xf32>
    %383 = arith.subf %377, %382 : vector<24x11xf32>
    %384 = arith.mulf %383, %383 : vector<24x11xf32>
    %cst_229 = arith.constant dense<0.000000e+00> : vector<24xf32>
    %385 = vector.multi_reduction <add>, %384, %cst_229 [1] : vector<24x11xf32> to vector<24xf32>
    %386 = vector.shape_cast %385 : vector<24xf32> to vector<24x1xf32>
    %cst_230 = arith.constant 1.100000e+01 : f32
    %387 = vector.broadcast %cst_230 : f32 to vector<24x1xf32>
    %388 = arith.divf %386, %387 : vector<24x1xf32>
    %389 = vector.broadcast %381 : vector<24x1xf32> to vector<24x11xf32>
    %390 = arith.subf %377, %389 : vector<24x11xf32>
    %cst_231 = arith.constant 9.99999974E-6 : f32
    %391 = vector.broadcast %cst_231 : f32 to vector<24x1xf32>
    %392 = arith.addf %388, %391 : vector<24x1xf32>
    %393 = math.rsqrt %392 : vector<24x1xf32>
    %394 = vector.broadcast %393 : vector<24x1xf32> to vector<24x11xf32>
    %395 = arith.mulf %390, %394 : vector<24x11xf32>
    %cst_232 = arith.constant 0.000000e+00 : f32
    %396 = vector.broadcast %cst_232 : f32 to vector<24x11xf32>
    %397 = arith.maximumf %395, %396 : vector<24x11xf32>
    %c24 = arith.constant 24 : index
    %c0_233 = arith.constant 0 : index
    %398 = vector.load %arg23[%c24, %c0_233] : memref<48x11xf32, #tpu.memory_space<vmem>>, vector<24x11xf32>
    tpu.vector_store %arg23[%c24, %c0_233], %397 {strides = array<i32>} : memref<48x11xf32, #tpu.memory_space<vmem>>, vector<24x11xf32>,
    %c0_234 = arith.constant 0 : index
    %c0_235 = arith.constant 0 : index
    %399 = vector.load %arg23[%c0_234, %c0_235] : memref<48x11xf32, #tpu.memory_space<vmem>>, vector<48x11xf32>
    %cst_236 = arith.constant dense<0.000000e+00> : vector<48x300xf32>
    %400 = tpu.matmul %399, %2, %cst_236 {dimension_numbers = #tpu.dot_dimension_numbers<[1], [0], [0], [1], [0, 0, 1, 1], [], []>} : vector<48x11xf32>, vector<11x300xf32>, vector<48x300xf32> -> vector<48x300xf32>
    %c0_237 = arith.constant 0 : index
    %c0_238 = arith.constant 0 : index
    %401 = vector.load %arg17[%c0_237, %c0_238] : memref<1x300xf32, #tpu.memory_space<vmem>>, vector<1x300xf32>
    %402 = vector.broadcast %401 : vector<1x300xf32> to vector<48x300xf32>
    %403 = arith.addf %400, %402 : vector<48x300xf32>
    %cst_239 = arith.constant dense<0.000000e+00> : vector<48xf32>
    %404 = vector.multi_reduction <add>, %403, %cst_239 [1] : vector<48x300xf32> to vector<48xf32>
    %405 = vector.shape_cast %404 : vector<48xf32> to vector<48x1xf32>
    %cst_240 = arith.constant 3.000000e+02 : f32
    %406 = vector.broadcast %cst_240 : f32 to vector<48x1xf32>
    %407 = arith.divf %405, %406 : vector<48x1xf32>
    %408 = vector.broadcast %407 : vector<48x1xf32> to vector<48x300xf32>
    %409 = arith.subf %403, %408 : vector<48x300xf32>
    %410 = arith.mulf %409, %409 : vector<48x300xf32>
    %cst_241 = arith.constant dense<0.000000e+00> : vector<48xf32>
    %411 = vector.multi_reduction <add>, %410, %cst_241 [1] : vector<48x300xf32> to vector<48xf32>
    %412 = vector.shape_cast %411 : vector<48xf32> to vector<48x1xf32>
    %cst_242 = arith.constant 3.000000e+02 : f32
    %413 = vector.broadcast %cst_242 : f32 to vector<48x1xf32>
    %414 = arith.divf %412, %413 : vector<48x1xf32>
    %415 = vector.broadcast %407 : vector<48x1xf32> to vector<48x300xf32>
    %416 = arith.subf %403, %415 : vector<48x300xf32>
    %cst_243 = arith.constant 9.99999974E-6 : f32
    %417 = vector.broadcast %cst_243 : f32 to vector<48x1xf32>
    %418 = arith.addf %414, %417 : vector<48x1xf32>
    %419 = math.rsqrt %418 : vector<48x1xf32>
    %420 = vector.broadcast %419 : vector<48x1xf32> to vector<48x300xf32>
    %421 = arith.mulf %416, %420 : vector<48x300xf32>
    %c0_244 = arith.constant 0 : index
    %c0_245 = arith.constant 0 : index
    %422 = vector.load %arg18[%c0_244, %c0_245] : memref<1x300xf32, #tpu.memory_space<vmem>>, vector<1x300xf32>
    %423 = vector.broadcast %422 : vector<1x300xf32> to vector<48x300xf32>
    %424 = arith.mulf %421, %423 : vector<48x300xf32>
    %c0_246 = arith.constant 0 : index
    %c0_247 = arith.constant 0 : index
    %425 = vector.load %arg19[%c0_246, %c0_247] : memref<1x300xf32, #tpu.memory_space<vmem>>, vector<1x300xf32>
    %426 = vector.broadcast %425 : vector<1x300xf32> to vector<48x300xf32>
    %427 = arith.addf %424, %426 : vector<48x300xf32>
    %cst_248 = arith.constant 0.000000e+00 : f32
    %428 = vector.broadcast %cst_248 : f32 to vector<48x300xf32>
    %429 = arith.maximumf %427, %428 : vector<48x300xf32>
    %c0_249 = arith.constant 0 : index
    %c0_250 = arith.constant 0 : index
    %430 = vector.load %arg20[%c0_249, %c0_250] : memref<300x10xf32, #tpu.memory_space<vmem>>, vector<300x10xf32>
    %cst_251 = arith.constant dense<0.000000e+00> : vector<48x10xf32>
    %431 = tpu.matmul %429, %430, %cst_251 {dimension_numbers = #tpu.dot_dimension_numbers<[1], [0], [0], [1], [0, 0, 1, 1], [], []>} : vector<48x300xf32>, vector<300x10xf32>, vector<48x10xf32> -> vector<48x10xf32>
    %c0_252 = arith.constant 0 : index
    %c0_253 = arith.constant 0 : index
    %432 = vector.load %arg21[%c0_252, %c0_253] : memref<1x10xf32, #tpu.memory_space<vmem>>, vector<1x10xf32>
    %433 = vector.broadcast %432 : vector<1x10xf32> to vector<48x10xf32>
    %434 = arith.addf %431, %433 : vector<48x10xf32>
    %435 = vector.extract_strided_slice %434 {offsets = [0, 0], sizes = [24, 10], strides = [1, 1]} : vector<48x10xf32> to vector<24x10xf32>
    %c0_254 = arith.constant 0 : index
    %c0_255 = arith.constant 0 : index
    %c0_256 = arith.constant 0 : index
    %436 = vector.load %arg22[%c0_254, %c0_255, %c0_256] : memref<2x24x10xf32, #tpu.memory_space<vmem>>, vector<1x24x10xf32>
    %437 = vector.shape_cast %436 : vector<1x24x10xf32> to vector<24x10xf32>
    %438 = vector.shape_cast %435 : vector<24x10xf32> to vector<1x24x10xf32>
    tpu.vector_store %arg22[%c0_254, %c0_255, %c0_256], %438 {strides = array<i32>} : memref<2x24x10xf32, #tpu.memory_space<vmem>>, vector<1x24x10xf32>,
    %439 = vector.extract_strided_slice %434 {offsets = [24, 0], sizes = [24, 10], strides = [1, 1]} : vector<48x10xf32> to vector<24x10xf32>
    %c1_257 = arith.constant 1 : index
    %c0_258 = arith.constant 0 : index
    %c0_259 = arith.constant 0 : index
    %440 = vector.load %arg22[%c1_257, %c0_258, %c0_259] : memref<2x24x10xf32, #tpu.memory_space<vmem>>, vector<1x24x10xf32>
    %441 = vector.shape_cast %440 : vector<1x24x10xf32> to vector<24x10xf32>
    %442 = vector.shape_cast %439 : vector<24x10xf32> to vector<1x24x10xf32>
    tpu.vector_store %arg22[%c1_257, %c0_258, %c0_259], %442 {strides = array<i32>} : memref<2x24x10xf32, #tpu.memory_space<vmem>>, vector<1x24x10xf32>,
    return
  }
}

</mosaic_0001>

<llo_original>
// kernel: convnet_forward.1
$region0: #{convnet_forward.1}
  #allocation0 [shape = 'u32[]', space=smem, size = 0x4, offset = 0x4, fixed_abs, tag = 'smem constant byte address 0x4 - core index']
  #allocation1 [shape = 'u32[72,128]{1,0:T(1,128)}', space=vmem, size = 0x9000, scoped, tag = 'internal scratch']
  #allocation2 [shape = 'f32[48,11]{1,0:T(8,128)}', space=vmem, size = 0x6000, scoped, tag = 'scratch operand']
  %s0 = inlined_call_operand.vmem [shape: f32[2,4,64], index: 0, kind: input, shape index: {}]
  %s1 = inlined_call_operand.vmem [shape: f32[3,8,4], index: 1, kind: input, shape index: {}]
  %s2 = inlined_call_operand.vmem [shape: f32[8,1], index: 2, kind: input, shape index: {}]
  %s3 = inlined_call_operand.vmem [shape: f32[3,8,8], index: 3, kind: input, shape index: {}]
  %s4 = inlined_call_operand.vmem [shape: f32[8,1], index: 4, kind: input, shape index: {}]
  %s5 = inlined_call_operand.vmem [shape: f32[3,16,8], index: 5, kind: input, shape index: {}]
  %s6 = inlined_call_operand.vmem [shape: f32[16,1], index: 6, kind: input, shape index: {}]
  %s7 = inlined_call_operand.vmem [shape: f32[3,24,16], index: 7, kind: input, shape index: {}]
  %s8 = inlined_call_operand.vmem [shape: f32[24,1], index: 8, kind: input, shape index: {}]
  %s9 = inlined_call_operand.vmem [shape: f32[3,24,24], index: 9, kind: input, shape index: {}]
  %s10 = inlined_call_operand.vmem [shape: f32[24,1], index: 10, kind: input, shape index: {}]
  %s11 = inlined_call_operand.vmem [shape: f32[58,29], index: 11, kind: input, shape index: {}]
  %s12 = inlined_call_operand.vmem [shape: f32[58,29], index: 12, kind: input, shape index: {}]
  %s13 = inlined_call_operand.vmem [shape: f32[27,13], index: 13, kind: input, shape index: {}]
  %s14 = inlined_call_operand.vmem [shape: f32[27,13], index: 14, kind: input, shape index: {}]
  %s15 = inlined_call_operand.vmem [shape: f32[11,500], index: 15, kind: input, shape index: {}]
  %s16 = inlined_call_operand.vmem [shape: f32[500,300], index: 16, kind: input, shape index: {}]
  %s17 = inlined_call_operand.vmem [shape: f32[1,300], index: 17, kind: input, shape index: {}]
  %s18 = inlined_call_operand.vmem [shape: f32[1,300], index: 18, kind: input, shape index: {}]
  %s19 = inlined_call_operand.vmem [shape: f32[1,300], index: 19, kind: input, shape index: {}]
  %s20 = inlined_call_operand.vmem [shape: f32[300,10], index: 20, kind: input, shape index: {}]
  %s21 = inlined_call_operand.vmem [shape: f32[1,10], index: 21, kind: input, shape index: {}]
  %s22 = inlined_call_operand.vmem [shape: f32[2,24,10], index: 22, kind: output, shape index: {}]
  %s23 = sld [smem:[#allocation0]]
  $region98: #{convnet_forward.1} parent=0
    _
  %s25 = ssub.s32 1, %s23
  %s26 = scalar_select 0, %s25, %s23
  // Predicated region
  $region2: #{convnet_forward.1} parent=0 // pred_check
    _
  $region3: #{convnet_forward.1} parent=0 // pred_check_branch
    %28 = sbr.rel (0) target = $region5
  $region4: #{convnet_forward.1} parent=0 // pred_region
    _
  $region5: #{convnet_forward.1} parent=0 // pred_fallthru
    _
  // Predicated region
  $region6: #{convnet_forward.1} parent=0 // pred_check
    _
  $region7: #{convnet_forward.1} parent=0 // pred_check_branch
    %30 = sbr.rel (0) target = $region9
  $region8: #{convnet_forward.1} parent=0 // pred_region
    _
  $region9: #{convnet_forward.1} parent=0 // pred_fallthru
    _
  // Predicated region
  $region10: #{convnet_forward.1} parent=0 // pred_check
    _
  $region11: #{convnet_forward.1} parent=0 // pred_check_branch
    %32 = sbr.rel (0) target = $region13
  $region12: #{convnet_forward.1} parent=0 // pred_region
    _
  $region13: #{convnet_forward.1} parent=0 // pred_fallthru
    _
  // Predicated region
  $region14: #{convnet_forward.1} parent=0 // pred_check
    _
  $region15: #{convnet_forward.1} parent=0 // pred_check_branch
    %34 = sbr.rel (0) target = $region17
  $region16: #{convnet_forward.1} parent=0 // pred_region
    _
  $region17: #{convnet_forward.1} parent=0 // pred_fallthru
    _
  // Predicated region
  $region18: #{convnet_forward.1} parent=0 // pred_check
    _
  $region19: #{convnet_forward.1} parent=0 // pred_check_branch
    %36 = sbr.rel (0) target = $region21
  $region20: #{convnet_forward.1} parent=0 // pred_region
    _
  $region21: #{convnet_forward.1} parent=0 // pred_fallthru
    _
  // Predicated region
  $region22: #{convnet_forward.1} parent=0 // pred_check
    _
  $region23: #{convnet_forward.1} parent=0 // pred_check_branch
    %38 = sbr.rel (0) target = $region25
  $region24: #{convnet_forward.1} parent=0 // pred_region
    _
  $region25: #{convnet_forward.1} parent=0 // pred_fallthru
    _
  // Predicated region
  $region26: #{convnet_forward.1} parent=0 // pred_check
    _
  $region27: #{convnet_forward.1} parent=0 // pred_check_branch
    %40 = sbr.rel (0) target = $region29
  $region28: #{convnet_forward.1} parent=0 // pred_region
    _
  $region29: #{convnet_forward.1} parent=0 // pred_fallthru
    _
  // Predicated region
  $region30: #{convnet_forward.1} parent=0 // pred_check
    _
  $region31: #{convnet_forward.1} parent=0 // pred_check_branch
    %42 = sbr.rel (0) target = $region33
  $region32: #{convnet_forward.1} parent=0 // pred_region
    _
  $region33: #{convnet_forward.1} parent=0 // pred_fallthru
    _
  // Predicated region
  $region34: #{convnet_forward.1} parent=0 // pred_check
    _
  $region35: #{convnet_forward.1} parent=0 // pred_check_branch
    %44 = sbr.rel (0) target = $region37
  $region36: #{convnet_forward.1} parent=0 // pred_region
    _
  $region37: #{convnet_forward.1} parent=0 // pred_fallthru
    _
  // Predicated region
  $region38: #{convnet_forward.1} parent=0 // pred_check
    _
  $region39: #{convnet_forward.1} parent=0 // pred_check_branch
    %46 = sbr.rel (0) target = $region41
  $region40: #{convnet_forward.1} parent=0 // pred_region
    _
  $region41: #{convnet_forward.1} parent=0 // pred_fallthru
    _
  // Predicated region
  $region42: #{convnet_forward.1} parent=0 // pred_check
    _
  $region43: #{convnet_forward.1} parent=0 // pred_check_branch
    %48 = sbr.rel (0) target = $region45
  $region44: #{convnet_forward.1} parent=0 // pred_region
    _
  $region45: #{convnet_forward.1} parent=0 // pred_fallthru
    _
  // Predicated region
  $region46: #{convnet_forward.1} parent=0 // pred_check
    _
  $region47: #{convnet_forward.1} parent=0 // pred_check_branch
    %50 = sbr.rel (0) target = $region49
  $region48: #{convnet_forward.1} parent=0 // pred_region
    _
  $region49: #{convnet_forward.1} parent=0 // pred_fallthru
    _
  // Predicated region
  $region50: #{convnet_forward.1} parent=0 // pred_check
    _
  $region51: #{convnet_forward.1} parent=0 // pred_check_branch
    %52 = sbr.rel (0) target = $region53
  $region52: #{convnet_forward.1} parent=0 // pred_region
    _
  $region53: #{convnet_forward.1} parent=0 // pred_fallthru
    _
  // Predicated region
  $region54: #{convnet_forward.1} parent=0 // pred_check
    _
  $region55: #{convnet_forward.1} parent=0 // pred_check_branch
    %54 = sbr.rel (0) target = $region57
  $region56: #{convnet_forward.1} parent=0 // pred_region
    _
  $region57: #{convnet_forward.1} parent=0 // pred_fallthru
    _
  // Predicated region
  $region58: #{convnet_forward.1} parent=0 // pred_check
    _
  $region59: #{convnet_forward.1} parent=0 // pred_check_branch
    %56 = sbr.rel (0) target = $region61
  $region60: #{convnet_forward.1} parent=0 // pred_region
    _
  $region61: #{convnet_forward.1} parent=0 // pred_fallthru
    _
  // Predicated region
  $region62: #{convnet_forward.1} parent=0 // pred_check
    _
  $region63: #{convnet_forward.1} parent=0 // pred_check_branch
    %58 = sbr.rel (0) target = $region65
  $region64: #{convnet_forward.1} parent=0 // pred_region
    _
  $region65: #{convnet_forward.1} parent=0 // pred_fallthru
    _
  // Predicated region
  $region66: #{convnet_forward.1} parent=0 // pred_check
    _
  $region67: #{convnet_forward.1} parent=0 // pred_check_branch
    %60 = sbr.rel (0) target = $region69
  $region68: #{convnet_forward.1} parent=0 // pred_region
    _
  $region69: #{convnet_forward.1} parent=0 // pred_fallthru
    _
  // Predicated region
  $region70: #{convnet_forward.1} parent=0 // pred_check
    _
  $region71: #{convnet_forward.1} parent=0 // pred_check_branch
    %62 = sbr.rel (0) target = $region73
  $region72: #{convnet_forward.1} parent=0 // pred_region
    _
  $region73: #{convnet_forward.1} parent=0 // pred_fallthru
    _
  // Predicated region
  $region74: #{convnet_forward.1} parent=0 // pred_check
    _
  $region75: #{convnet_forward.1} parent=0 // pred_check_branch
    %64 = sbr.rel (0) target = $region77
  $region76: #{convnet_forward.1} parent=0 // pred_region
    _
  $region77: #{convnet_forward.1} parent=0 // pred_fallthru
    _
  // Predicated region
  $region78: #{convnet_forward.1} parent=0 // pred_check
    _
  $region79: #{convnet_forward.1} parent=0 // pred_check_branch
    %66 = sbr.rel (0) target = $region81
  $region80: #{convnet_forward.1} parent=0 // pred_region
    _
  $region81: #{convnet_forward.1} parent=0 // pred_fallthru
    _
  // Predicated region
  $region82: #{convnet_forward.1} parent=0 // pred_check
    _
  $region83: #{convnet_forward.1} parent=0 // pred_check_branch
    %68 = sbr.rel (0) target = $region85
  $region84: #{convnet_forward.1} parent=0 // pred_region
    _
  $region85: #{convnet_forward.1} parent=0 // pred_fallthru
    _
  // Predicated region
  $region86: #{convnet_forward.1} parent=0 // pred_check
    _
  $region87: #{convnet_forward.1} parent=0 // pred_check_branch
    %70 = sbr.rel (0) target = $region89
  $region88: #{convnet_forward.1} parent=0 // pred_region
    _
  $region89: #{convnet_forward.1} parent=0 // pred_fallthru
    _
  %v71 = vld [vmem:[%s15] sm:$0xff]
  %v72 = vld [vmem:[%s15 + $0x8] sm:$0xff]
  %v73 = vld [vmem:[%s15 + $0x10] sm:$0xff]
  %v74 = vld [vmem:[%s15 + $0x18] sm:$0xff]
  %v75 = vld [vmem:[%s15 + $0x20] sm:$0x7]
  %v76 = vld [vmem:[%s15 + $0x28] sm:$0x7]
  %v77 = vld [vmem:[%s15 + $0x30] sm:$0x7]
  %v78 = vld [vmem:[%s15 + $0x38] sm:$0x7]
  %v79 = vld [vmem:[%s16] sm:$0xff]
  %v80 = vld [vmem:[%s16 + $0x8] sm:$0xff]
  %v81 = vld [vmem:[%s16 + $0x10] sm:$0xff]
  %v82 = vld [vmem:[%s16 + $0x18] sm:$0xff]
  %v83 = vld [vmem:[%s16 + $0x20] sm:$0xff]
  %v84 = vld [vmem:[%s16 + $0x28] sm:$0xff]
  %v85 = vld [vmem:[%s16 + $0x30] sm:$0xff]
  %v86 = vld [vmem:[%s16 + $0x38] sm:$0xff]
  %v87 = vld [vmem:[%s16 + $0x40] sm:$0xff]
  %v88 = vld [vmem:[%s16 + $0x48] sm:$0xff]
  %v89 = vld [vmem:[%s16 + $0x50] sm:$0xff]
  %v90 = vld [vmem:[%s16 + $0x58] sm:$0xff]
  %v91 = vld [vmem:[%s16 + $0x60] sm:$0xff]
  %v92 = vld [vmem:[%s16 + $0x68] sm:$0xff]
  %v93 = vld [vmem:[%s16 + $0x70] sm:$0xff]
  %v94 = vld [vmem:[%s16 + $0x78] sm:$0xff]
  %v95 = vld [vmem:[%s16 + $0x80] sm:$0xff]
  %v96 = vld [vmem:[%s16 + $0x88] sm:$0xff]
  %v97 = vld [vmem:[%s16 + $0x90] sm:$0xff]
  %v98 = vld [vmem:[%s16 + $0x98] sm:$0xff]
  %v99 = vld [vmem:[%s16 + $0xa0] sm:$0xff]
  %v100 = vld [vmem:[%s16 + $0xa8] sm:$0xff]
  %v101 = vld [vmem:[%s16 + $0xb0] sm:$0xff]
  %v102 = vld [vmem:[%s16 + $0xb8] sm:$0xff]
  %v103 = vld [vmem:[%s16 + $0xc0] sm:$0xff]
  %v104 = vld [vmem:[%s16 + $0xc8] sm:$0xff]
  %v105 = vld [vmem:[%s16 + $0xd0] sm:$0xff]
  %v106 = vld [vmem:[%s16 + $0xd8] sm:$0xff]
  %v107 = vld [vmem:[%s16 + $0xe0] sm:$0xff]
  %v108 = vld [vmem:[%s16 + $0xe8] sm:$0xff]
  %v109 = vld [vmem:[%s16 + $0xf0] sm:$0xff]
  %v110 = vld [vmem:[%s16 + $0xf8] sm:$0xff]
  %v111 = vld [vmem:[%s16 + $0x100] sm:$0xff]
  %v112 = vld [vmem:[%s16 + $0x108] sm:$0xff]
  %v113 = vld [vmem:[%s16 + $0x110] sm:$0xff]
  %v114 = vld [vmem:[%s16 + $0x118] sm:$0xff]
  %v115 = vld [vmem:[%s16 + $0x120] sm:$0xff]
  %v116 = vld [vmem:[%s16 + $0x128] sm:$0xff]
  %v117 = vld [vmem:[%s16 + $0x130] sm:$0xff]
  %v118 = vld [vmem:[%s16 + $0x138] sm:$0xff]
  %v119 = vld [vmem:[%s16 + $0x140] sm:$0xff]
  %v120 = vld [vmem:[%s16 + $0x148] sm:$0xff]
  %v121 = vld [vmem:[%s16 + $0x150] sm:$0xff]
  %v122 = vld [vmem:[%s16 + $0x158] sm:$0xff]
  %v123 = vld [vmem:[%s16 + $0x160] sm:$0xff]
  %v124 = vld [vmem:[%s16 + $0x168] sm:$0xff]
  %v125 = vld [vmem:[%s16 + $0x170] sm:$0xff]
  %v126 = vld [vmem:[%s16 + $0x178] sm:$0xff]
  %v127 = vld [vmem:[%s16 + $0x180] sm:$0xff]
  %v128 = vld [vmem:[%s16 + $0x188] sm:$0xff]
  %v129 = vld [vmem:[%s16 + $0x190] sm:$0xff]
  %v130 = vld [vmem:[%s16 + $0x198] sm:$0xff]
  %v131 = vld [vmem:[%s16 + $0x1a0] sm:$0xff]
  %v132 = vld [vmem:[%s16 + $0x1a8] sm:$0xff]
  %v133 = vld [vmem:[%s16 + $0x1b0] sm:$0xff]
  %v134 = vld [vmem:[%s16 + $0x1b8] sm:$0xff]
  %v135 = vld [vmem:[%s16 + $0x1c0] sm:$0xff]
  %v136 = vld [vmem:[%s16 + $0x1c8] sm:$0xff]
  %v137 = vld [vmem:[%s16 + $0x1d0] sm:$0xff]
  %v138 = vld [vmem:[%s16 + $0x1d8] sm:$0xff]
  %v139 = vld [vmem:[%s16 + $0x1e0] sm:$0xff]
  %v140 = vld [vmem:[%s16 + $0x1e8] sm:$0xff]
  %v141 = vld [vmem:[%s16 + $0x1f0] sm:$0xff]
  %v142 = vld [vmem:[%s16 + $0x1f8] sm:$0xff]
  %v143 = vld [vmem:[%s16 + $0x200] sm:$0xff]
  %v144 = vld [vmem:[%s16 + $0x208] sm:$0xff]
  %v145 = vld [vmem:[%s16 + $0x210] sm:$0xff]
  %v146 = vld [vmem:[%s16 + $0x218] sm:$0xff]
  %v147 = vld [vmem:[%s16 + $0x220] sm:$0xff]
  %v148 = vld [vmem:[%s16 + $0x228] sm:$0xff]
  %v149 = vld [vmem:[%s16 + $0x230] sm:$0xff]
  %v150 = vld [vmem:[%s16 + $0x238] sm:$0xff]
  %v151 = vld [vmem:[%s16 + $0x240] sm:$0xff]
  %v152 = vld [vmem:[%s16 + $0x248] sm:$0xff]
  %v153 = vld [vmem:[%s16 + $0x250] sm:$0xff]
  %v154 = vld [vmem:[%s16 + $0x258] sm:$0xff]
  %v155 = vld [vmem:[%s16 + $0x260] sm:$0xff]
  %v156 = vld [vmem:[%s16 + $0x268] sm:$0xff]
  %v157 = vld [vmem:[%s16 + $0x270] sm:$0xff]
  %v158 = vld [vmem:[%s16 + $0x278] sm:$0xff]
  %v159 = vld [vmem:[%s16 + $0x280] sm:$0xff]
  %v160 = vld [vmem:[%s16 + $0x288] sm:$0xff]
  %v161 = vld [vmem:[%s16 + $0x290] sm:$0xff]
  %v162 = vld [vmem:[%s16 + $0x298] sm:$0xff]
  %v163 = vld [vmem:[%s16 + $0x2a0] sm:$0xff]
  %v164 = vld [vmem:[%s16 + $0x2a8] sm:$0xff]
  %v165 = vld [vmem:[%s16 + $0x2b0] sm:$0xff]
  %v166 = vld [vmem:[%s16 + $0x2b8] sm:$0xff]
  %v167 = vld [vmem:[%s16 + $0x2c0] sm:$0xff]
  %v168 = vld [vmem:[%s16 + $0x2c8] sm:$0xff]
  %v169 = vld [vmem:[%s16 + $0x2d0] sm:$0xff]
  %v170 = vld [vmem:[%s16 + $0x2d8] sm:$0xff]
  %v171 = vld [vmem:[%s16 + $0x2e0] sm:$0xff]
  %v172 = vld [vmem:[%s16 + $0x2e8] sm:$0xff]
  %v173 = vld [vmem:[%s16 + $0x2f0] sm:$0xff]
  %v174 = vld [vmem:[%s16 + $0x2f8] sm:$0xff]
  %v175 = vld [vmem:[%s16 + $0x300] sm:$0xff]
  %v176 = vld [vmem:[%s16 + $0x308] sm:$0xff]
  %v177 = vld [vmem:[%s16 + $0x310] sm:$0xff]
  %v178 = vld [vmem:[%s16 + $0x318] sm:$0xff]
  %v179 = vld [vmem:[%s16 + $0x320] sm:$0xff]
  %v180 = vld [vmem:[%s16 + $0x328] sm:$0xff]
  %v181 = vld [vmem:[%s16 + $0x330] sm:$0xff]
  %v182 = vld [vmem:[%s16 + $0x338] sm:$0xff]
  %v183 = vld [vmem:[%s16 + $0x340] sm:$0xff]
  %v184 = vld [vmem:[%s16 + $0x348] sm:$0xff]
  %v185 = vld [vmem:[%s16 + $0x350] sm:$0xff]
  %v186 = vld [vmem:[%s16 + $0x358] sm:$0xff]
  %v187 = vld [vmem:[%s16 + $0x360] sm:$0xff]
  %v188 = vld [vmem:[%s16 + $0x368] sm:$0xff]
  %v189 = vld [vmem:[%s16 + $0x370] sm:$0xff]
  %v190 = vld [vmem:[%s16 + $0x378] sm:$0xff]
  %v191 = vld [vmem:[%s16 + $0x380] sm:$0xff]
  %v192 = vld [vmem:[%s16 + $0x388] sm:$0xff]
  %v193 = vld [vmem:[%s16 + $0x390] sm:$0xff]
  %v194 = vld [vmem:[%s16 + $0x398] sm:$0xff]
  %v195 = vld [vmem:[%s16 + $0x3a0] sm:$0xff]
  %v196 = vld [vmem:[%s16 + $0x3a8] sm:$0xff]
  %v197 = vld [vmem:[%s16 + $0x3b0] sm:$0xff]
  %v198 = vld [vmem:[%s16 + $0x3b8] sm:$0xff]
  %v199 = vld [vmem:[%s16 + $0x3c0] sm:$0xff]
  %v200 = vld [vmem:[%s16 + $0x3c8] sm:$0xff]
  %v201 = vld [vmem:[%s16 + $0x3d0] sm:$0xff]
  %v202 = vld [vmem:[%s16 + $0x3d8] sm:$0xff]
  %v203 = vld [vmem:[%s16 + $0x3e0] sm:$0xff]
  %v204 = vld [vmem:[%s16 + $0x3e8] sm:$0xff]
  %v205 = vld [vmem:[%s16 + $0x3f0] sm:$0xff]
  %v206 = vld [vmem:[%s16 + $0x3f8] sm:$0xff]
  %v207 = vld [vmem:[%s16 + $0x400] sm:$0xff]
  %v208 = vld [vmem:[%s16 + $0x408] sm:$0xff]
  %v209 = vld [vmem:[%s16 + $0x410] sm:$0xff]
  %v210 = vld [vmem:[%s16 + $0x418] sm:$0xff]
  %v211 = vld [vmem:[%s16 + $0x420] sm:$0xff]
  %v212 = vld [vmem:[%s16 + $0x428] sm:$0xff]
  %v213 = vld [vmem:[%s16 + $0x430] sm:$0xff]
  %v214 = vld [vmem:[%s16 + $0x438] sm:$0xff]
  %v215 = vld [vmem:[%s16 + $0x440] sm:$0xff]
  %v216 = vld [vmem:[%s16 + $0x448] sm:$0xff]
  %v217 = vld [vmem:[%s16 + $0x450] sm:$0xff]
  %v218 = vld [vmem:[%s16 + $0x458] sm:$0xff]
  %v219 = vld [vmem:[%s16 + $0x460] sm:$0xff]
  %v220 = vld [vmem:[%s16 + $0x468] sm:$0xff]
  %v221 = vld [vmem:[%s16 + $0x470] sm:$0xff]
  %v222 = vld [vmem:[%s16 + $0x478] sm:$0xff]
  %v223 = vld [vmem:[%s16 + $0x480] sm:$0xff]
  %v224 = vld [vmem:[%s16 + $0x488] sm:$0xff]
  %v225 = vld [vmem:[%s16 + $0x490] sm:$0xff]
  %v226 = vld [vmem:[%s16 + $0x498] sm:$0xff]
  %v227 = vld [vmem:[%s16 + $0x4a0] sm:$0xff]
  %v228 = vld [vmem:[%s16 + $0x4a8] sm:$0xff]
  %v229 = vld [vmem:[%s16 + $0x4b0] sm:$0xff]
  %v230 = vld [vmem:[%s16 + $0x4b8] sm:$0xff]
  %v231 = vld [vmem:[%s16 + $0x4c0] sm:$0xff]
  %v232 = vld [vmem:[%s16 + $0x4c8] sm:$0xff]
  %v233 = vld [vmem:[%s16 + $0x4d0] sm:$0xff]
  %v234 = vld [vmem:[%s16 + $0x4d8] sm:$0xff]
  %v235 = vld [vmem:[%s16 + $0x4e0] sm:$0xff]
  %v236 = vld [vmem:[%s16 + $0x4e8] sm:$0xff]
  %v237 = vld [vmem:[%s16 + $0x4f0] sm:$0xff]
  %v238 = vld [vmem:[%s16 + $0x4f8] sm:$0xff]
  %v239 = vld [vmem:[%s16 + $0x500] sm:$0xff]
  %v240 = vld [vmem:[%s16 + $0x508] sm:$0xff]
  %v241 = vld [vmem:[%s16 + $0x510] sm:$0xff]
  %v242 = vld [vmem:[%s16 + $0x518] sm:$0xff]
  %v243 = vld [vmem:[%s16 + $0x520] sm:$0xff]
  %v244 = vld [vmem:[%s16 + $0x528] sm:$0xff]
  %v245 = vld [vmem:[%s16 + $0x530] sm:$0xff]
  %v246 = vld [vmem:[%s16 + $0x538] sm:$0xff]
  %v247 = vld [vmem:[%s16 + $0x540] sm:$0xff]
  %v248 = vld [vmem:[%s16 + $0x548] sm:$0xff]
  %v249 = vld [vmem:[%s16 + $0x550] sm:$0xff]
  %v250 = vld [vmem:[%s16 + $0x558] sm:$0xff]
  %v251 = vld [vmem:[%s16 + $0x560] sm:$0xff]
  %v252 = vld [vmem:[%s16 + $0x568] sm:$0xff]
  %v253 = vld [vmem:[%s16 + $0x570] sm:$0xff]
  %v254 = vld [vmem:[%s16 + $0x578] sm:$0xff]
  %v255 = vld [vmem:[%s16 + $0x580] sm:$0xff]
  %v256 = vld [vmem:[%s16 + $0x588] sm:$0xff]
  %v257 = vld [vmem:[%s16 + $0x590] sm:$0xff]
  %v258 = vld [vmem:[%s16 + $0x598] sm:$0xff]
  %v259 = vld [vmem:[%s16 + $0x5a0] sm:$0xff]
  %v260 = vld [vmem:[%s16 + $0x5a8] sm:$0xff]
  %v261 = vld [vmem:[%s16 + $0x5b0] sm:$0xff]
  %v262 = vld [vmem:[%s16 + $0x5b8] sm:$0xff]
  %v263 = vld [vmem:[%s16 + $0x5c0] sm:$0xff]
  %v264 = vld [vmem:[%s16 + $0x5c8] sm:$0xff]
  %v265 = vld [vmem:[%s16 + $0x5d0] sm:$0xf]
  %v266 = vld [vmem:[%s16 + $0x5d8] sm:$0xf]
  %v267 = vld [vmem:[%s16 + $0x5e0] sm:$0xf]
  %vm268 = vcmask 949248
  %v270 = vsel %vm268, %v74, 0
  %v273 = vsel %vm268, %v78, 0
  %vm275 = vcmask 1043456
  %v277 = vsel %vm275, %v265, 0
  %v280 = vsel %vm275, %v266, 0
  %v283 = vsel %vm275, %v267, 0
  %285 = vmatpush.msra.mxu0 %v124
  %286 = vmatpush.msra.mxu0 %v121
  %287 = vmatpush.msra.mxu0 %v118
  %288 = vmatpush.msra.mxu0 %v115
  %289 = vmatpush.msra.mxu0 %v112
  %290 = vmatpush.msra.mxu0 %v109
  %291 = vmatpush.msra.mxu0 %v106
  %292 = vmatpush.msra.mxu0 %v103
  %293 = vmatpush.msra.mxu0 %v100
  %294 = vmatpush.msra.mxu0 %v97
  %295 = vmatpush.msra.mxu0 %v94
  %296 = vmatpush.msra.mxu0 %v91
  %297 = vmatpush.msra.mxu0 %v88
  %298 = vmatpush.msra.mxu0 %v85
  %299 = vmatpush.msra.mxu0 %v82
  %300 = vmatpush.msra.mxu0 %v79
  %301 = vmatmul.f32.gmra.mxu0 %v71
  %v302 = vpop.f32.mrf.mxu0
  %v303 = vadd.f32 0.0, %v302
  %304 = vmatmul.f32.gmra.mxu0 %v75
  %v305 = vpop.f32.mrf.mxu0
  %v306 = vadd.f32 0.0, %v305
  %307 = vdwg.mxu0
  %308 = vmatpush.msra.mxu0 %v172
  %309 = vmatpush.msra.mxu0 %v169
  %310 = vmatpush.msra.mxu0 %v166
  %311 = vmatpush.msra.mxu0 %v163
  %312 = vmatpush.msra.mxu0 %v160
  %313 = vmatpush.msra.mxu0 %v157
  %314 = vmatpush.msra.mxu0 %v154
  %315 = vmatpush.msra.mxu0 %v151
  %316 = vmatpush.msra.mxu0 %v148
  %317 = vmatpush.msra.mxu0 %v145
  %318 = vmatpush.msra.mxu0 %v142
  %319 = vmatpush.msra.mxu0 %v139
  %320 = vmatpush.msra.mxu0 %v136
  %321 = vmatpush.msra.mxu0 %v133
  %322 = vmatpush.msra.mxu0 %v130
  %323 = vmatpush.msra.mxu0 %v127
  %324 = vmatmul.f32.gmra.mxu0 %v72
  %v325 = vpop.f32.mrf.mxu0
  %v326 = vadd.f32 %v303, %v325
  %327 = vmatmul.f32.gmra.mxu0 %v76
  %v328 = vpop.f32.mrf.mxu0
  %v329 = vadd.f32 %v306, %v328
  %330 = vdwg.mxu0
  %331 = vmatpush.msra.mxu0 %v220
  %332 = vmatpush.msra.mxu0 %v217
  %333 = vmatpush.msra.mxu0 %v214
  %334 = vmatpush.msra.mxu0 %v211
  %335 = vmatpush.msra.mxu0 %v208
  %336 = vmatpush.msra.mxu0 %v205
  %337 = vmatpush.msra.mxu0 %v202
  %338 = vmatpush.msra.mxu0 %v199
  %339 = vmatpush.msra.mxu0 %v196
  %340 = vmatpush.msra.mxu0 %v193
  %341 = vmatpush.msra.mxu0 %v190
  %342 = vmatpush.msra.mxu0 %v187
  %343 = vmatpush.msra.mxu0 %v184
  %344 = vmatpush.msra.mxu0 %v181
  %345 = vmatpush.msra.mxu0 %v178
  %346 = vmatpush.msra.mxu0 %v175
  %347 = vmatmul.f32.gmra.mxu0 %v73
  %v348 = vpop.f32.mrf.mxu0
  %v349 = vadd.f32 %v326, %v348
  %350 = vmatmul.f32.gmra.mxu0 %v77
  %v351 = vpop.f32.mrf.mxu0
  %v352 = vadd.f32 %v329, %v351
  %353 = vdwg.mxu0
  %354 = vmatpush.msra.mxu0 0.0
  %355 = vmatpush.msra.mxu0 %v277
  %356 = vmatpush.msra.mxu0 %v262
  %357 = vmatpush.msra.mxu0 %v259
  %358 = vmatpush.msra.mxu0 %v256
  %359 = vmatpush.msra.mxu0 %v253
  %360 = vmatpush.msra.mxu0 %v250
  %361 = vmatpush.msra.mxu0 %v247
  %362 = vmatpush.msra.mxu0 %v244
  %363 = vmatpush.msra.mxu0 %v241
  %364 = vmatpush.msra.mxu0 %v238
  %365 = vmatpush.msra.mxu0 %v235
  %366 = vmatpush.msra.mxu0 %v232
  %367 = vmatpush.msra.mxu0 %v229
  %368 = vmatpush.msra.mxu0 %v226
  %369 = vmatpush.msra.mxu0 %v223
  %370 = vmatmul.f32.gmra.mxu0 %v270
  %v371 = vpop.f32.mrf.mxu0
  %v372 = vadd.f32 %v349, %v371
  %373 = vmatmul.f32.gmra.mxu0 %v273
  %v374 = vpop.f32.mrf.mxu0
  %v375 = vadd.f32 %v352, %v374
  %376 = vdwg.mxu0
  %377 = vmatpush.msra.mxu0 %v125
  %378 = vmatpush.msra.mxu0 %v122
  %379 = vmatpush.msra.mxu0 %v119
  %380 = vmatpush.msra.mxu0 %v116
  %381 = vmatpush.msra.mxu0 %v113
  %382 = vmatpush.msra.mxu0 %v110
  %383 = vmatpush.msra.mxu0 %v107
  %384 = vmatpush.msra.mxu0 %v104
  %385 = vmatpush.msra.mxu0 %v101
  %386 = vmatpush.msra.mxu0 %v98
  %387 = vmatpush.msra.mxu0 %v95
  %388 = vmatpush.msra.mxu0 %v92
  %389 = vmatpush.msra.mxu0 %v89
  %390 = vmatpush.msra.mxu0 %v86
  %391 = vmatpush.msra.mxu0 %v83
  %392 = vmatpush.msra.mxu0 %v80
  %393 = vmatmul.f32.gmra.mxu0 %v71
  %v394 = vpop.f32.mrf.mxu0
  %v395 = vadd.f32 0.0, %v394
  %396 = vmatmul.f32.gmra.mxu0 %v75
  %v397 = vpop.f32.mrf.mxu0
  %v398 = vadd.f32 0.0, %v397
  %399 = vdwg.mxu0
  %400 = vmatpush.msra.mxu0 %v173
  %401 = vmatpush.msra.mxu0 %v170
  %402 = vmatpush.msra.mxu0 %v167
  %403 = vmatpush.msra.mxu0 %v164
  %404 = vmatpush.msra.mxu0 %v161
  %405 = vmatpush.msra.mxu0 %v158
  %406 = vmatpush.msra.mxu0 %v155
  %407 = vmatpush.msra.mxu0 %v152
  %408 = vmatpush.msra.mxu0 %v149
  %409 = vmatpush.msra.mxu0 %v146
  %410 = vmatpush.msra.mxu0 %v143
  %411 = vmatpush.msra.mxu0 %v140
  %412 = vmatpush.msra.mxu0 %v137
  %413 = vmatpush.msra.mxu0 %v134
  %414 = vmatpush.msra.mxu0 %v131
  %415 = vmatpush.msra.mxu0 %v128
  %416 = vmatmul.f32.gmra.mxu0 %v72
  %v417 = vpop.f32.mrf.mxu0
  %v418 = vadd.f32 %v395, %v417
  %419 = vmatmul.f32.gmra.mxu0 %v76
  %v420 = vpop.f32.mrf.mxu0
  %v421 = vadd.f32 %v398, %v420
  %422 = vdwg.mxu0
  %423 = vmatpush.msra.mxu0 %v221
  %424 = vmatpush.msra.mxu0 %v218
  %425 = vmatpush.msra.mxu0 %v215
  %426 = vmatpush.msra.mxu0 %v212
  %427 = vmatpush.msra.mxu0 %v209
  %428 = vmatpush.msra.mxu0 %v206
  %429 = vmatpush.msra.mxu0 %v203
  %430 = vmatpush.msra.mxu0 %v200
  %431 = vmatpush.msra.mxu0 %v197
  %432 = vmatpush.msra.mxu0 %v194
  %433 = vmatpush.msra.mxu0 %v191
  %434 = vmatpush.msra.mxu0 %v188
  %435 = vmatpush.msra.mxu0 %v185
  %436 = vmatpush.msra.mxu0 %v182
  %437 = vmatpush.msra.mxu0 %v179
  %438 = vmatpush.msra.mxu0 %v176
  %439 = vmatmul.f32.gmra.mxu0 %v73
  %v440 = vpop.f32.mrf.mxu0
  %v441 = vadd.f32 %v418, %v440
  %442 = vmatmul.f32.gmra.mxu0 %v77
  %v443 = vpop.f32.mrf.mxu0
  %v444 = vadd.f32 %v421, %v443
  %445 = vdwg.mxu0
  %446 = vmatpush.msra.mxu0 0.0
  %447 = vmatpush.msra.mxu0 %v280
  %448 = vmatpush.msra.mxu0 %v263
  %449 = vmatpush.msra.mxu0 %v260
  %450 = vmatpush.msra.mxu0 %v257
  %451 = vmatpush.msra.mxu0 %v254
  %452 = vmatpush.msra.mxu0 %v251
  %453 = vmatpush.msra.mxu0 %v248
  %454 = vmatpush.msra.mxu0 %v245
  %455 = vmatpush.msra.mxu0 %v242
  %456 = vmatpush.msra.mxu0 %v239
  %457 = vmatpush.msra.mxu0 %v236
  %458 = vmatpush.msra.mxu0 %v233
  %459 = vmatpush.msra.mxu0 %v230
  %460 = vmatpush.msra.mxu0 %v227
  %461 = vmatpush.msra.mxu0 %v224
  %462 = vmatmul.f32.gmra.mxu0 %v270
  %v463 = vpop.f32.mrf.mxu0
  %v464 = vadd.f32 %v441, %v463
  %465 = vmatmul.f32.gmra.mxu0 %v273
  %v466 = vpop.f32.mrf.mxu0
  %v467 = vadd.f32 %v444, %v466
  %468 = vdwg.mxu0
  %469 = vmatpush.msra.mxu0 %v126
  %470 = vmatpush.msra.mxu0 %v123
  %471 = vmatpush.msra.mxu0 %v120
  %472 = vmatpush.msra.mxu0 %v117
  %473 = vmatpush.msra.mxu0 %v114
  %474 = vmatpush.msra.mxu0 %v111
  %475 = vmatpush.msra.mxu0 %v108
  %476 = vmatpush.msra.mxu0 %v105
  %477 = vmatpush.msra.mxu0 %v102
  %478 = vmatpush.msra.mxu0 %v99
  %479 = vmatpush.msra.mxu0 %v96
  %480 = vmatpush.msra.mxu0 %v93
  %481 = vmatpush.msra.mxu0 %v90
  %482 = vmatpush.msra.mxu0 %v87
  %483 = vmatpush.msra.mxu0 %v84
  %484 = vmatpush.msra.mxu0 %v81
  %485 = vmatmul.f32.gmra.mxu0 %v71
  %v486 = vpop.f32.mrf.mxu0
  %v487 = vadd.f32 0.0, %v486
  %488 = vmatmul.f32.gmra.mxu0 %v75
  %v489 = vpop.f32.mrf.mxu0
  %v490 = vadd.f32 0.0, %v489
  %491 = vdwg.mxu0
  %492 = vmatpush.msra.mxu0 %v174
  %493 = vmatpush.msra.mxu0 %v171
  %494 = vmatpush.msra.mxu0 %v168
  %495 = vmatpush.msra.mxu0 %v165
  %496 = vmatpush.msra.mxu0 %v162
  %497 = vmatpush.msra.mxu0 %v159
  %498 = vmatpush.msra.mxu0 %v156
  %499 = vmatpush.msra.mxu0 %v153
  %500 = vmatpush.msra.mxu0 %v150
  %501 = vmatpush.msra.mxu0 %v147
  %502 = vmatpush.msra.mxu0 %v144
  %503 = vmatpush.msra.mxu0 %v141
  %504 = vmatpush.msra.mxu0 %v138
  %505 = vmatpush.msra.mxu0 %v135
  %506 = vmatpush.msra.mxu0 %v132
  %507 = vmatpush.msra.mxu0 %v129
  %508 = vmatmul.f32.gmra.mxu0 %v72
  %v509 = vpop.f32.mrf.mxu0
  %v510 = vadd.f32 %v487, %v509
  %511 = vmatmul.f32.gmra.mxu0 %v76
  %v512 = vpop.f32.mrf.mxu0
  %v513 = vadd.f32 %v490, %v512
  %514 = vdwg.mxu0
  %515 = vmatpush.msra.mxu0 %v222
  %516 = vmatpush.msra.mxu0 %v219
  %517 = vmatpush.msra.mxu0 %v216
  %518 = vmatpush.msra.mxu0 %v213
  %519 = vmatpush.msra.mxu0 %v210
  %520 = vmatpush.msra.mxu0 %v207
  %521 = vmatpush.msra.mxu0 %v204
  %522 = vmatpush.msra.mxu0 %v201
  %523 = vmatpush.msra.mxu0 %v198
  %524 = vmatpush.msra.mxu0 %v195
  %525 = vmatpush.msra.mxu0 %v192
  %526 = vmatpush.msra.mxu0 %v189
  %527 = vmatpush.msra.mxu0 %v186
  %528 = vmatpush.msra.mxu0 %v183
  %529 = vmatpush.msra.mxu0 %v180
  %530 = vmatpush.msra.mxu0 %v177
  %531 = vmatmul.f32.gmra.mxu0 %v73
  %v532 = vpop.f32.mrf.mxu0
  %v533 = vadd.f32 %v510, %v532
  %534 = vmatmul.f32.gmra.mxu0 %v77
  %v535 = vpop.f32.mrf.mxu0
  %v536 = vadd.f32 %v513, %v535
  %537 = vdwg.mxu0
  %538 = vmatpush.msra.mxu0 0.0
  %539 = vmatpush.msra.mxu0 %v283
  %540 = vmatpush.msra.mxu0 %v264
  %541 = vmatpush.msra.mxu0 %v261
  %542 = vmatpush.msra.mxu0 %v258
  %543 = vmatpush.msra.mxu0 %v255
  %544 = vmatpush.msra.mxu0 %v252
  %545 = vmatpush.msra.mxu0 %v249
  %546 = vmatpush.msra.mxu0 %v246
  %547 = vmatpush.msra.mxu0 %v243
  %548 = vmatpush.msra.mxu0 %v240
  %549 = vmatpush.msra.mxu0 %v237
  %550 = vmatpush.msra.mxu0 %v234
  %551 = vmatpush.msra.mxu0 %v231
  %552 = vmatpush.msra.mxu0 %v228
  %553 = vmatpush.msra.mxu0 %v225
  %554 = vmatmul.f32.gmra.mxu0 %v270
  %v555 = vpop.f32.mrf.mxu0
  %v556 = vadd.f32 %v533, %v555
  %557 = vmatmul.f32.gmra.mxu0 %v273
  %v558 = vpop.f32.mrf.mxu0
  %v559 = vadd.f32 %v536, %v558
  %560 = vdwg.mxu0
  %v561 = vld [vmem:[%s0] sm:$0xf]
  %v562 = vld [vmem:[%s1] sm:$0xff]
  %s563 = scalar_lea.vmem %s1, 8
  %v564 = vld [vmem:[%s563] sm:$0xff]
  %566 = vrot.lane.b32.xlu0 %v561, 127
  %v567 = vpop.permute.xlu0 %566
  %vm568 = vcmask 31744
  %v570 = vsel %vm568, %v564, 0
  %v572 = vsel %vm275, %v567, 0
  %574 = vmatpush.msra.mxu0 0.0
  %575 = vmatpush.msra.mxu0 0.0
  %576 = vmatpush.msra.mxu0 0.0
  %577 = vmatpush.msra.mxu0 0.0
  %578 = vmatpush.msra.mxu0 0.0
  %579 = vmatpush.msra.mxu0 0.0
  %580 = vmatpush.msra.mxu0 0.0
  %581 = vmatpush.msra.mxu0 0.0
  %582 = vmatpush.msra.mxu0 0.0
  %583 = vmatpush.msra.mxu0 0.0
  %584 = vmatpush.msra.mxu0 0.0
  %585 = vmatpush.msra.mxu0 0.0
  %586 = vmatpush.msra.mxu0 0.0
  %587 = vmatpush.msra.mxu0 0.0
  %588 = vmatpush.msra.mxu0 0.0
  %589 = vmatpush.msra.mxu0 %v572
  %590 = vmatmul.f32.gmra.mxu0 %v570
  %v591 = vpop.f32.mrf.mxu0
  %v592 = vadd.f32 0.0, %v591
  %593 = vdwg.mxu0
  %v595 = vsel %vm568, %v562, 0
  %v597 = vsel %vm275, %v561, 0
  %599 = vmatpush.msra.mxu0 0.0
  %600 = vmatpush.msra.mxu0 0.0
  %601 = vmatpush.msra.mxu0 0.0
  %602 = vmatpush.msra.mxu0 0.0
  %603 = vmatpush.msra.mxu0 0.0
  %604 = vmatpush.msra.mxu0 0.0
  %605 = vmatpush.msra.mxu0 0.0
  %606 = vmatpush.msra.mxu0 0.0
  %607 = vmatpush.msra.mxu0 0.0
  %608 = vmatpush.msra.mxu0 0.0
  %609 = vmatpush.msra.mxu0 0.0
  %610 = vmatpush.msra.mxu0 0.0
  %611 = vmatpush.msra.mxu0 0.0
  %612 = vmatpush.msra.mxu0 0.0
  %613 = vmatpush.msra.mxu0 0.0
  %614 = vmatpush.msra.mxu0 %v597
  %615 = vmatmul.f32.gmra.mxu0 %v595
  %v616 = vpop.f32.mrf.mxu0
  %v617 = vadd.f32 %v592, %v616
  %618 = vdwg.mxu0
  %s619 = scalar_lea.vmem %s1, 16
  %v620 = vld [vmem:[%s619] sm:$0xff]
  %621 = vrot.lane.b32.xlu0 %v561, 126
  %v622 = vpop.permute.xlu0 %621
  %v624 = vsel %vm568, %v620, 0
  %v626 = vsel %vm275, %v622, 0
  %628 = vmatpush.msra.mxu0 0.0
  %629 = vmatpush.msra.mxu0 0.0
  %630 = vmatpush.msra.mxu0 0.0
  %631 = vmatpush.msra.mxu0 0.0
  %632 = vmatpush.msra.mxu0 0.0
  %633 = vmatpush.msra.mxu0 0.0
  %634 = vmatpush.msra.mxu0 0.0
  %635 = vmatpush.msra.mxu0 0.0
  %636 = vmatpush.msra.mxu0 0.0
  %637 = vmatpush.msra.mxu0 0.0
  %638 = vmatpush.msra.mxu0 0.0
  %639 = vmatpush.msra.mxu0 0.0
  %640 = vmatpush.msra.mxu0 0.0
  %641 = vmatpush.msra.mxu0 0.0
  %642 = vmatpush.msra.mxu0 0.0
  %643 = vmatpush.msra.mxu0 %v626
  %644 = vmatmul.f32.gmra.mxu0 %v624
  %v645 = vpop.f32.mrf.mxu0
  %v646 = vadd.f32 0.0, %v645
  %647 = vdwg.mxu0
  %v648 = vadd.f32 %v617, %v646
  %v649 = vld [vmem:[%s2] sm:$0xff]
  %651 = vset.pattern.permute.xlu0 0
  %652 = vperm.xlu0 %651, %v649
  %v653 = vpop.permute.xlu0 %652
  %v655 = vadd.f32 %v648, %v653
  %vm656 = vcmask 506880
  %v657 = vsel %vm656, %v655, 0.0
  %658 = vadd.xlane.f32.xlu0 %v657
  %v659 = vpop.xlane.xlu0 %658
  %v660 = vrcp.pop 62.0
  %v661 = vmul.f32 62.0, %v660
  %v662 = vsub.f32 1.0, %v661
  %v663 = vmul.f32 %v660, %v662
  %v664 = vadd.f32 %v660, %v663
  %vm665 = vweird.f32 %v660
  %v666 = vsel %vm665, %v660, %v664
  %v667 = vmul.f32 %v659, %v666
  %v668 = vsub.f32 %v655, %v667
  %v669 = vmul.f32 %v668, %v668
  %v670 = vsel %vm656, %v669, 0.0
  %671 = vadd.xlane.f32.xlu0 %v670
  %v672 = vpop.xlane.xlu0 %671
  %v673 = vmul.f32 %v672, %v666
  %v674 = vadd.f32 %v673, 1e-05
  %v675 = vrsqrt.pop %v674
  %v676 = vmul.f32 %v675, %v674
  %v677 = vmul.f32 %v676, %v675
  %v678 = vmul.f32 0.5, %v677
  %v679 = vsub.f32 1.5, %v678
  %v680 = vmul.f32 %v675, %v679
  %vm681 = vweird.f32 %v674
  %vm682 = vweird.f32 %v675
  %vm683 = vmor %vm681, %vm682
  %v684 = vsel %vm683, %v675, %v680
  %v685 = vmul.f32 %v668, %v684
  %v686 = vmax.f32 %v685, 0.0
  %v687 = vld [vmem:[%s3] sm:$0xff]
  %s688 = scalar_lea.vmem %s3, 8
  %v689 = vld [vmem:[%s688] sm:$0xff]
  %691 = vrot.lane.b32.xlu0 %v686, 127
  %v692 = vpop.permute.xlu0 %691
  %vm694 = vcmask 64512
  %v696 = vsel %vm694, %v689, 0
  %698 = vmatpush.msra.mxu0 0.0
  %699 = vmatpush.msra.mxu0 0.0
  %700 = vmatpush.msra.mxu0 0.0
  %701 = vmatpush.msra.mxu0 0.0
  %702 = vmatpush.msra.mxu0 0.0
  %703 = vmatpush.msra.mxu0 0.0
  %704 = vmatpush.msra.mxu0 0.0
  %705 = vmatpush.msra.mxu0 0.0
  %706 = vmatpush.msra.mxu0 0.0
  %707 = vmatpush.msra.mxu0 0.0
  %708 = vmatpush.msra.mxu0 0.0
  %709 = vmatpush.msra.mxu0 0.0
  %710 = vmatpush.msra.mxu0 0.0
  %711 = vmatpush.msra.mxu0 0.0
  %712 = vmatpush.msra.mxu0 0.0
  %713 = vmatpush.msra.mxu0 %v692
  %714 = vmatmul.f32.gmra.mxu0 %v696
  %v715 = vpop.f32.mrf.mxu0
  %v716 = vadd.f32 0.0, %v715
  %717 = vdwg.mxu0
  %v719 = vsel %vm694, %v687, 0
  %721 = vmatpush.msra.mxu0 0.0
  %722 = vmatpush.msra.mxu0 0.0
  %723 = vmatpush.msra.mxu0 0.0
  %724 = vmatpush.msra.mxu0 0.0
  %725 = vmatpush.msra.mxu0 0.0
  %726 = vmatpush.msra.mxu0 0.0
  %727 = vmatpush.msra.mxu0 0.0
  %728 = vmatpush.msra.mxu0 0.0
  %729 = vmatpush.msra.mxu0 0.0
  %730 = vmatpush.msra.mxu0 0.0
  %731 = vmatpush.msra.mxu0 0.0
  %732 = vmatpush.msra.mxu0 0.0
  %733 = vmatpush.msra.mxu0 0.0
  %734 = vmatpush.msra.mxu0 0.0
  %735 = vmatpush.msra.mxu0 0.0
  %736 = vmatpush.msra.mxu0 %v686
  %737 = vmatmul.f32.gmra.mxu0 %v719
  %v738 = vpop.f32.mrf.mxu0
  %v739 = vadd.f32 %v716, %v738
  %740 = vdwg.mxu0
  %s741 = scalar_lea.vmem %s3, 16
  %v742 = vld [vmem:[%s741] sm:$0xff]
  %743 = vrot.lane.b32.xlu0 %v686, 126
  %v744 = vpop.permute.xlu0 %743
  %v747 = vsel %vm694, %v742, 0
  %749 = vmatpush.msra.mxu0 0.0
  %750 = vmatpush.msra.mxu0 0.0
  %751 = vmatpush.msra.mxu0 0.0
  %752 = vmatpush.msra.mxu0 0.0
  %753 = vmatpush.msra.mxu0 0.0
  %754 = vmatpush.msra.mxu0 0.0
  %755 = vmatpush.msra.mxu0 0.0
  %756 = vmatpush.msra.mxu0 0.0
  %757 = vmatpush.msra.mxu0 0.0
  %758 = vmatpush.msra.mxu0 0.0
  %759 = vmatpush.msra.mxu0 0.0
  %760 = vmatpush.msra.mxu0 0.0
  %761 = vmatpush.msra.mxu0 0.0
  %762 = vmatpush.msra.mxu0 0.0
  %763 = vmatpush.msra.mxu0 0.0
  %764 = vmatpush.msra.mxu0 %v744
  %765 = vmatmul.f32.gmra.mxu0 %v747
  %v766 = vpop.f32.mrf.mxu0
  %v767 = vadd.f32 0.0, %v766
  %768 = vdwg.mxu0
  %v769 = vadd.f32 %v739, %v767
  %v770 = vld [vmem:[%s4] sm:$0xff]
  %772 = vset.pattern.permute.xlu0 0
  %773 = vperm.xlu0 %772, %v770
  %v774 = vpop.permute.xlu0 %773
  %v776 = vadd.f32 %v769, %v774
  %vm777 = vcmask 490496
  %v778 = vsel %vm777, %v776, 0.0
  %779 = vadd.xlane.f32.xlu0 %v778
  %v780 = vpop.xlane.xlu0 %779
  %v781 = vrcp.pop 60.0
  %v782 = vmul.f32 60.0, %v781
  %v783 = vsub.f32 1.0, %v782
  %v784 = vmul.f32 %v781, %v783
  %v785 = vadd.f32 %v781, %v784
  %vm786 = vweird.f32 %v781
  %v787 = vsel %vm786, %v781, %v785
  %v788 = vmul.f32 %v780, %v787
  %v789 = vsub.f32 %v776, %v788
  %v790 = vmul.f32 %v789, %v789
  %v791 = vsel %vm777, %v790, 0.0
  %792 = vadd.xlane.f32.xlu0 %v791
  %v793 = vpop.xlane.xlu0 %792
  %v794 = vmul.f32 %v793, %v787
  %v795 = vadd.f32 %v794, 1e-05
  %v796 = vrsqrt.pop %v795
  %v797 = vmul.f32 %v796, %v795
  %v798 = vmul.f32 %v797, %v796
  %v799 = vmul.f32 0.5, %v798
  %v800 = vsub.f32 1.5, %v799
  %v801 = vmul.f32 %v796, %v800
  %vm802 = vweird.f32 %v795
  %vm803 = vweird.f32 %v796
  %vm804 = vmor %vm802, %vm803
  %v805 = vsel %vm804, %v796, %v801
  %v806 = vmul.f32 %v789, %v805
  %v807 = vmax.f32 %v806, 0.0
  %v808 = vld [vmem:[%s5] sm:$0xff]
  %v809 = vld [vmem:[%s5 + $0x8] sm:$0xff]
  %s810 = scalar_lea.vmem %s5, 16
  %v811 = vld [vmem:[%s810] sm:$0xff]
  %v812 = vld [vmem:[%s810 + $0x8] sm:$0xff]
  %814 = vrot.lane.b32.xlu0 %v807, 127
  %v815 = vpop.permute.xlu0 %814
  %v818 = vsel %vm694, %v811, 0
  %v821 = vsel %vm694, %v812, 0
  %823 = vmatpush.msra.mxu0 0.0
  %824 = vmatpush.msra.mxu0 0.0
  %825 = vmatpush.msra.mxu0 0.0
  %826 = vmatpush.msra.mxu0 0.0
  %827 = vmatpush.msra.mxu0 0.0
  %828 = vmatpush.msra.mxu0 0.0
  %829 = vmatpush.msra.mxu0 0.0
  %830 = vmatpush.msra.mxu0 0.0
  %831 = vmatpush.msra.mxu0 0.0
  %832 = vmatpush.msra.mxu0 0.0
  %833 = vmatpush.msra.mxu0 0.0
  %834 = vmatpush.msra.mxu0 0.0
  %835 = vmatpush.msra.mxu0 0.0
  %836 = vmatpush.msra.mxu0 0.0
  %837 = vmatpush.msra.mxu0 0.0
  %838 = vmatpush.msra.mxu0 %v815
  %839 = vmatmul.f32.gmra.mxu0 %v818
  %v840 = vpop.f32.mrf.mxu0
  %v841 = vadd.f32 0.0, %v840
  %842 = vmatmul.f32.gmra.mxu0 %v821
  %v843 = vpop.f32.mrf.mxu0
  %v844 = vadd.f32 0.0, %v843
  %845 = vdwg.mxu0
  %v847 = vsel %vm694, %v808, 0
  %v850 = vsel %vm694, %v809, 0
  %852 = vmatpush.msra.mxu0 0.0
  %853 = vmatpush.msra.mxu0 0.0
  %854 = vmatpush.msra.mxu0 0.0
  %855 = vmatpush.msra.mxu0 0.0
  %856 = vmatpush.msra.mxu0 0.0
  %857 = vmatpush.msra.mxu0 0.0
  %858 = vmatpush.msra.mxu0 0.0
  %859 = vmatpush.msra.mxu0 0.0
  %860 = vmatpush.msra.mxu0 0.0
  %861 = vmatpush.msra.mxu0 0.0
  %862 = vmatpush.msra.mxu0 0.0
  %863 = vmatpush.msra.mxu0 0.0
  %864 = vmatpush.msra.mxu0 0.0
  %865 = vmatpush.msra.mxu0 0.0
  %866 = vmatpush.msra.mxu0 0.0
  %867 = vmatpush.msra.mxu0 %v807
  %868 = vmatmul.f32.gmra.mxu0 %v847
  %v869 = vpop.f32.mrf.mxu0
  %v870 = vadd.f32 %v841, %v869
  %871 = vmatmul.f32.gmra.mxu0 %v850
  %v872 = vpop.f32.mrf.mxu0
  %v873 = vadd.f32 %v844, %v872
  %874 = vdwg.mxu0
  %s875 = scalar_lea.vmem %s5, 32
  %v876 = vld [vmem:[%s875] sm:$0xff]
  %v877 = vld [vmem:[%s875 + $0x8] sm:$0xff]
  %878 = vrot.lane.b32.xlu0 %v807, 126
  %v879 = vpop.permute.xlu0 %878
  %v882 = vsel %vm694, %v876, 0
  %v885 = vsel %vm694, %v877, 0
  %887 = vmatpush.msra.mxu0 0.0
  %888 = vmatpush.msra.mxu0 0.0
  %889 = vmatpush.msra.mxu0 0.0
  %890 = vmatpush.msra.mxu0 0.0
  %891 = vmatpush.msra.mxu0 0.0
  %892 = vmatpush.msra.mxu0 0.0
  %893 = vmatpush.msra.mxu0 0.0
  %894 = vmatpush.msra.mxu0 0.0
  %895 = vmatpush.msra.mxu0 0.0
  %896 = vmatpush.msra.mxu0 0.0
  %897 = vmatpush.msra.mxu0 0.0
  %898 = vmatpush.msra.mxu0 0.0
  %899 = vmatpush.msra.mxu0 0.0
  %900 = vmatpush.msra.mxu0 0.0
  %901 = vmatpush.msra.mxu0 0.0
  %902 = vmatpush.msra.mxu0 %v879
  %903 = vmatmul.f32.gmra.mxu0 %v882
  %v904 = vpop.f32.mrf.mxu0
  %v905 = vadd.f32 0.0, %v904
  %906 = vmatmul.f32.gmra.mxu0 %v885
  %v907 = vpop.f32.mrf.mxu0
  %v908 = vadd.f32 0.0, %v907
  %909 = vdwg.mxu0
  %v910 = vadd.f32 %v870, %v905
  %v911 = vadd.f32 %v873, %v908
  %v912 = vld [vmem:[%s6] sm:$0xff]
  %v913 = vld [vmem:[%s6 + $0x8] sm:$0xff]
  %915 = vset.pattern.permute.xlu0 0
  %916 = vperm.xlu0 %915, %v912
  %v917 = vpop.permute.xlu0 %916
  %920 = vset.pattern.permute.xlu0 0
  %921 = vperm.xlu0 %920, %v913
  %v922 = vpop.permute.xlu0 %921
  %v924 = vadd.f32 %v910, %v917
  %v925 = vadd.f32 %v911, %v922
  %vm926 = vcmask 474112
  %v927 = vsel %vm926, %v924, 0.0
  %928 = vadd.xlane.f32.xlu0 %v927
  %v929 = vpop.xlane.xlu0 %928
  %v930 = vsel %vm926, %v925, 0.0
  %931 = vadd.xlane.f32.xlu0 %v930
  %v932 = vpop.xlane.xlu0 %931
  %v933 = vrcp.pop 58.0
  %v934 = vmul.f32 58.0, %v933
  %v935 = vsub.f32 1.0, %v934
  %v936 = vmul.f32 %v933, %v935
  %v937 = vadd.f32 %v933, %v936
  %vm938 = vweird.f32 %v933
  %v939 = vsel %vm938, %v933, %v937
  %v940 = vmul.f32 %v929, %v939
  %v941 = vmul.f32 %v932, %v939
  %v942 = vsub.f32 %v924, %v940
  %v943 = vsub.f32 %v925, %v941
  %v944 = vmul.f32 %v942, %v942
  %v945 = vmul.f32 %v943, %v943
  %v946 = vsel %vm926, %v944, 0.0
  %947 = vadd.xlane.f32.xlu0 %v946
  %v948 = vpop.xlane.xlu0 %947
  %v949 = vsel %vm926, %v945, 0.0
  %950 = vadd.xlane.f32.xlu0 %v949
  %v951 = vpop.xlane.xlu0 %950
  %v952 = vmul.f32 %v948, %v939
  %v953 = vmul.f32 %v951, %v939
  %v954 = vadd.f32 %v952, 1e-05
  %v955 = vadd.f32 %v953, 1e-05
  %v956 = vrsqrt.pop %v954
  %v957 = vmul.f32 %v956, %v954
  %v958 = vmul.f32 %v957, %v956
  %v959 = vmul.f32 0.5, %v958
  %v960 = vsub.f32 1.5, %v959
  %v961 = vmul.f32 %v956, %v960
  %vm962 = vweird.f32 %v954
  %vm963 = vweird.f32 %v956
  %vm964 = vmor %vm962, %vm963
  %v965 = vsel %vm964, %v956, %v961
  %v966 = vrsqrt.pop %v955
  %v967 = vmul.f32 %v966, %v955
  %v968 = vmul.f32 %v967, %v966
  %v969 = vmul.f32 0.5, %v968
  %v970 = vsub.f32 1.5, %v969
  %v971 = vmul.f32 %v966, %v970
  %vm972 = vweird.f32 %v955
  %vm973 = vweird.f32 %v966
  %vm974 = vmor %vm972, %vm973
  %v975 = vsel %vm974, %v966, %v971
  %v976 = vmul.f32 %v942, %v965
  %v977 = vmul.f32 %v943, %v975
  %v978 = vld [vmem:[%s11] sm:$0xff]
  %v979 = vld [vmem:[%s11 + $0x8] sm:$0xff]
  %v980 = vld [vmem:[%s11 + $0x10] sm:$0xff]
  %v981 = vld [vmem:[%s11 + $0x18] sm:$0xff]
  %v982 = vld [vmem:[%s11 + $0x20] sm:$0xff]
  %v983 = vld [vmem:[%s11 + $0x28] sm:$0xff]
  %v984 = vld [vmem:[%s11 + $0x30] sm:$0xff]
  %v985 = vld [vmem:[%s11 + $0x38] sm:$0x3]
  %v987 = vsel %vm926, %v976, 0
  %v990 = vsel %vm926, %v977, 0
  %vm992 = vcmask 1041408
  %v994 = vsel %vm992, %v985, 0
  %996 = vmatpush.msra.mxu0 0.0
  %997 = vmatpush.msra.mxu0 0.0
  %998 = vmatpush.msra.mxu0 0.0
  %999 = vmatpush.msra.mxu0 0.0
  %1000 = vmatpush.msra.mxu0 0.0
  %1001 = vmatpush.msra.mxu0 0.0
  %1002 = vmatpush.msra.mxu0 0.0
  %1003 = vmatpush.msra.mxu0 0.0
  %1004 = vmatpush.msra.mxu0 %v994
  %1005 = vmatpush.msra.mxu0 %v984
  %1006 = vmatpush.msra.mxu0 %v983
  %1007 = vmatpush.msra.mxu0 %v982
  %1008 = vmatpush.msra.mxu0 %v981
  %1009 = vmatpush.msra.mxu0 %v980
  %1010 = vmatpush.msra.mxu0 %v979
  %1011 = vmatpush.msra.mxu0 %v978
  %1012 = vmatmul.f32.gmra.mxu0 %v987
  %v1013 = vpop.f32.mrf.mxu0
  %v1014 = vadd.f32 0.0, %v1013
  %1015 = vmatmul.f32.gmra.mxu0 %v990
  %v1016 = vpop.f32.mrf.mxu0
  %v1017 = vadd.f32 0.0, %v1016
  %1018 = vdwg.mxu0
  %v1019 = vld [vmem:[%s12] sm:$0xff]
  %v1020 = vld [vmem:[%s12 + $0x8] sm:$0xff]
  %v1021 = vld [vmem:[%s12 + $0x10] sm:$0xff]
  %v1022 = vld [vmem:[%s12 + $0x18] sm:$0xff]
  %v1023 = vld [vmem:[%s12 + $0x20] sm:$0xff]
  %v1024 = vld [vmem:[%s12 + $0x28] sm:$0xff]
  %v1025 = vld [vmem:[%s12 + $0x30] sm:$0xff]
  %v1026 = vld [vmem:[%s12 + $0x38] sm:$0x3]
  %v1028 = vsel %vm992, %v1026, 0
  %1030 = vmatpush.msra.mxu0 0.0
  %1031 = vmatpush.msra.mxu0 0.0
  %1032 = vmatpush.msra.mxu0 0.0
  %1033 = vmatpush.msra.mxu0 0.0
  %1034 = vmatpush.msra.mxu0 0.0
  %1035 = vmatpush.msra.mxu0 0.0
  %1036 = vmatpush.msra.mxu0 0.0
  %1037 = vmatpush.msra.mxu0 0.0
  %1038 = vmatpush.msra.mxu0 %v1028
  %1039 = vmatpush.msra.mxu0 %v1025
  %1040 = vmatpush.msra.mxu0 %v1024
  %1041 = vmatpush.msra.mxu0 %v1023
  %1042 = vmatpush.msra.mxu0 %v1022
  %1043 = vmatpush.msra.mxu0 %v1021
  %1044 = vmatpush.msra.mxu0 %v1020
  %1045 = vmatpush.msra.mxu0 %v1019
  %1046 = vmatmul.f32.gmra.mxu0 %v987
  %v1047 = vpop.f32.mrf.mxu0
  %v1048 = vadd.f32 0.0, %v1047
  %1049 = vmatmul.f32.gmra.mxu0 %v990
  %v1050 = vpop.f32.mrf.mxu0
  %v1051 = vadd.f32 0.0, %v1050
  %1052 = vdwg.mxu0
  %v1053 = vmax.f32 %v1014, %v1048
  %v1054 = vmax.f32 %v1017, %v1051
  %v1055 = vmax.f32 %v1053, 0.0
  %v1056 = vmax.f32 %v1054, 0.0
  %v1057 = vld [vmem:[%s7] sm:$0xff]
  %v1058 = vld [vmem:[%s7 + $0x8] sm:$0xff]
  %v1059 = vld [vmem:[%s7 + $0x10] sm:$0xff]
  %s1060 = scalar_lea.vmem %s7, 24
  %v1061 = vld [vmem:[%s1060] sm:$0xff]
  %v1062 = vld [vmem:[%s1060 + $0x8] sm:$0xff]
  %v1063 = vld [vmem:[%s1060 + $0x10] sm:$0xff]
  %1066 = vrot.lane.b32.xlu0 %v1055, 127
  %v1067 = vpop.permute.xlu0 %1066
  %1068 = vrot.lane.b32.xlu0 %v1056, 127
  %v1069 = vpop.permute.xlu0 %1068
  %vm1072 = vcmask 130048
  %v1074 = vsel %vm1072, %v1061, 0
  %v1077 = vsel %vm1072, %v1062, 0
  %v1080 = vsel %vm1072, %v1063, 0
  %1082 = vmatpush.msra.mxu0 0.0
  %1083 = vmatpush.msra.mxu0 0.0
  %1084 = vmatpush.msra.mxu0 0.0
  %1085 = vmatpush.msra.mxu0 0.0
  %1086 = vmatpush.msra.mxu0 0.0
  %1087 = vmatpush.msra.mxu0 0.0
  %1088 = vmatpush.msra.mxu0 0.0
  %1089 = vmatpush.msra.mxu0 0.0
  %1090 = vmatpush.msra.mxu0 0.0
  %1091 = vmatpush.msra.mxu0 0.0
  %1092 = vmatpush.msra.mxu0 0.0
  %1093 = vmatpush.msra.mxu0 0.0
  %1094 = vmatpush.msra.mxu0 0.0
  %1095 = vmatpush.msra.mxu0 0.0
  %1096 = vmatpush.msra.mxu0 %v1069
  %1097 = vmatpush.msra.mxu0 %v1067
  %1098 = vmatmul.f32.gmra.mxu0 %v1074
  %v1099 = vpop.f32.mrf.mxu0
  %v1100 = vadd.f32 0.0, %v1099
  %1101 = vmatmul.f32.gmra.mxu0 %v1077
  %v1102 = vpop.f32.mrf.mxu0
  %v1103 = vadd.f32 0.0, %v1102
  %1104 = vmatmul.f32.gmra.mxu0 %v1080
  %v1105 = vpop.f32.mrf.mxu0
  %v1106 = vadd.f32 0.0, %v1105
  %1107 = vdwg.mxu0
  %v1109 = vsel %vm1072, %v1057, 0
  %v1112 = vsel %vm1072, %v1058, 0
  %v1115 = vsel %vm1072, %v1059, 0
  %1117 = vmatpush.msra.mxu0 0.0
  %1118 = vmatpush.msra.mxu0 0.0
  %1119 = vmatpush.msra.mxu0 0.0
  %1120 = vmatpush.msra.mxu0 0.0
  %1121 = vmatpush.msra.mxu0 0.0
  %1122 = vmatpush.msra.mxu0 0.0
  %1123 = vmatpush.msra.mxu0 0.0
  %1124 = vmatpush.msra.mxu0 0.0
  %1125 = vmatpush.msra.mxu0 0.0
  %1126 = vmatpush.msra.mxu0 0.0
  %1127 = vmatpush.msra.mxu0 0.0
  %1128 = vmatpush.msra.mxu0 0.0
  %1129 = vmatpush.msra.mxu0 0.0
  %1130 = vmatpush.msra.mxu0 0.0
  %1131 = vmatpush.msra.mxu0 %v1056
  %1132 = vmatpush.msra.mxu0 %v1055
  %1133 = vmatmul.f32.gmra.mxu0 %v1109
  %v1134 = vpop.f32.mrf.mxu0
  %v1135 = vadd.f32 %v1100, %v1134
  %1136 = vmatmul.f32.gmra.mxu0 %v1112
  %v1137 = vpop.f32.mrf.mxu0
  %v1138 = vadd.f32 %v1103, %v1137
  %1139 = vmatmul.f32.gmra.mxu0 %v1115
  %v1140 = vpop.f32.mrf.mxu0
  %v1141 = vadd.f32 %v1106, %v1140
  %1142 = vdwg.mxu0
  %s1143 = scalar_lea.vmem %s7, 48
  %v1144 = vld [vmem:[%s1143] sm:$0xff]
  %v1145 = vld [vmem:[%s1143 + $0x8] sm:$0xff]
  %v1146 = vld [vmem:[%s1143 + $0x10] sm:$0xff]
  %1147 = vrot.lane.b32.xlu0 %v1055, 126
  %v1148 = vpop.permute.xlu0 %1147
  %1149 = vrot.lane.b32.xlu0 %v1056, 126
  %v1150 = vpop.permute.xlu0 %1149
  %v1154 = vsel %vm1072, %v1144, 0
  %v1157 = vsel %vm1072, %v1145, 0
  %v1160 = vsel %vm1072, %v1146, 0
  %1162 = vmatpush.msra.mxu0 0.0
  %1163 = vmatpush.msra.mxu0 0.0
  %1164 = vmatpush.msra.mxu0 0.0
  %1165 = vmatpush.msra.mxu0 0.0
  %1166 = vmatpush.msra.mxu0 0.0
  %1167 = vmatpush.msra.mxu0 0.0
  %1168 = vmatpush.msra.mxu0 0.0
  %1169 = vmatpush.msra.mxu0 0.0
  %1170 = vmatpush.msra.mxu0 0.0
  %1171 = vmatpush.msra.mxu0 0.0
  %1172 = vmatpush.msra.mxu0 0.0
  %1173 = vmatpush.msra.mxu0 0.0
  %1174 = vmatpush.msra.mxu0 0.0
  %1175 = vmatpush.msra.mxu0 0.0
  %1176 = vmatpush.msra.mxu0 %v1150
  %1177 = vmatpush.msra.mxu0 %v1148
  %1178 = vmatmul.f32.gmra.mxu0 %v1154
  %v1179 = vpop.f32.mrf.mxu0
  %v1180 = vadd.f32 0.0, %v1179
  %1181 = vmatmul.f32.gmra.mxu0 %v1157
  %v1182 = vpop.f32.mrf.mxu0
  %v1183 = vadd.f32 0.0, %v1182
  %1184 = vmatmul.f32.gmra.mxu0 %v1160
  %v1185 = vpop.f32.mrf.mxu0
  %v1186 = vadd.f32 0.0, %v1185
  %1187 = vdwg.mxu0
  %v1188 = vadd.f32 %v1135, %v1180
  %v1189 = vadd.f32 %v1138, %v1183
  %v1190 = vadd.f32 %v1141, %v1186
  %v1191 = vld [vmem:[%s8] sm:$0xff]
  %v1192 = vld [vmem:[%s8 + $0x8] sm:$0xff]
  %v1193 = vld [vmem:[%s8 + $0x10] sm:$0xff]
  %1195 = vset.pattern.permute.xlu0 0
  %1196 = vperm.xlu0 %1195, %v1191
  %v1197 = vpop.permute.xlu0 %1196
  %1200 = vset.pattern.permute.xlu0 0
  %1201 = vperm.xlu0 %1200, %v1192
  %v1202 = vpop.permute.xlu0 %1201
  %1205 = vset.pattern.permute.xlu0 0
  %1206 = vperm.xlu0 %1205, %v1193
  %v1207 = vpop.permute.xlu0 %1206
  %v1209 = vadd.f32 %v1188, %v1197
  %v1210 = vadd.f32 %v1189, %v1202
  %v1211 = vadd.f32 %v1190, %v1207
  %vm1212 = vcmask 220160
  %v1213 = vsel %vm1212, %v1209, 0.0
  %1214 = vadd.xlane.f32.xlu0 %v1213
  %v1215 = vpop.xlane.xlu0 %1214
  %v1216 = vsel %vm1212, %v1210, 0.0
  %1217 = vadd.xlane.f32.xlu0 %v1216
  %v1218 = vpop.xlane.xlu0 %1217
  %v1219 = vsel %vm1212, %v1211, 0.0
  %1220 = vadd.xlane.f32.xlu0 %v1219
  %v1221 = vpop.xlane.xlu0 %1220
  %v1222 = vrcp.pop 27.0
  %v1223 = vmul.f32 27.0, %v1222
  %v1224 = vsub.f32 1.0, %v1223
  %v1225 = vmul.f32 %v1222, %v1224
  %v1226 = vadd.f32 %v1222, %v1225
  %vm1227 = vweird.f32 %v1222
  %v1228 = vsel %vm1227, %v1222, %v1226
  %v1229 = vmul.f32 %v1215, %v1228
  %v1230 = vmul.f32 %v1218, %v1228
  %v1231 = vmul.f32 %v1221, %v1228
  %v1232 = vsub.f32 %v1209, %v1229
  %v1233 = vsub.f32 %v1210, %v1230
  %v1234 = vsub.f32 %v1211, %v1231
  %v1235 = vmul.f32 %v1232, %v1232
  %v1236 = vmul.f32 %v1233, %v1233
  %v1237 = vmul.f32 %v1234, %v1234
  %v1238 = vsel %vm1212, %v1235, 0.0
  %1239 = vadd.xlane.f32.xlu0 %v1238
  %v1240 = vpop.xlane.xlu0 %1239
  %v1241 = vsel %vm1212, %v1236, 0.0
  %1242 = vadd.xlane.f32.xlu0 %v1241
  %v1243 = vpop.xlane.xlu0 %1242
  %v1244 = vsel %vm1212, %v1237, 0.0
  %1245 = vadd.xlane.f32.xlu0 %v1244
  %v1246 = vpop.xlane.xlu0 %1245
  %v1247 = vmul.f32 %v1240, %v1228
  %v1248 = vmul.f32 %v1243, %v1228
  %v1249 = vmul.f32 %v1246, %v1228
  %v1250 = vadd.f32 %v1247, 1e-05
  %v1251 = vadd.f32 %v1248, 1e-05
  %v1252 = vadd.f32 %v1249, 1e-05
  %v1253 = vrsqrt.pop %v1250
  %v1254 = vmul.f32 %v1253, %v1250
  %v1255 = vmul.f32 %v1254, %v1253
  %v1256 = vmul.f32 0.5, %v1255
  %v1257 = vsub.f32 1.5, %v1256
  %v1258 = vmul.f32 %v1253, %v1257
  %vm1259 = vweird.f32 %v1250
  %vm1260 = vweird.f32 %v1253
  %vm1261 = vmor %vm1259, %vm1260
  %v1262 = vsel %vm1261, %v1253, %v1258
  %v1263 = vrsqrt.pop %v1251
  %v1264 = vmul.f32 %v1263, %v1251
  %v1265 = vmul.f32 %v1264, %v1263
  %v1266 = vmul.f32 0.5, %v1265
  %v1267 = vsub.f32 1.5, %v1266
  %v1268 = vmul.f32 %v1263, %v1267
  %vm1269 = vweird.f32 %v1251
  %vm1270 = vweird.f32 %v1263
  %vm1271 = vmor %vm1269, %vm1270
  %v1272 = vsel %vm1271, %v1263, %v1268
  %v1273 = vrsqrt.pop %v1252
  %v1274 = vmul.f32 %v1273, %v1252
  %v1275 = vmul.f32 %v1274, %v1273
  %v1276 = vmul.f32 0.5, %v1275
  %v1277 = vsub.f32 1.5, %v1276
  %v1278 = vmul.f32 %v1273, %v1277
  %vm1279 = vweird.f32 %v1252
  %vm1280 = vweird.f32 %v1273
  %vm1281 = vmor %vm1279, %vm1280
  %v1282 = vsel %vm1281, %v1273, %v1278
  %v1283 = vmul.f32 %v1232, %v1262
  %v1284 = vmul.f32 %v1233, %v1272
  %v1285 = vmul.f32 %v1234, %v1282
  %v1286 = vld [vmem:[%s13] sm:$0xff]
  %v1287 = vld [vmem:[%s13 + $0x8] sm:$0xff]
  %v1288 = vld [vmem:[%s13 + $0x10] sm:$0xff]
  %v1289 = vld [vmem:[%s13 + $0x18] sm:$0x7]
  %v1291 = vsel %vm1212, %v1283, 0
  %v1294 = vsel %vm1212, %v1284, 0
  %v1297 = vsel %vm1212, %v1285, 0
  %vm1299 = vcmask 1042432
  %v1301 = vsel %vm1299, %v1289, 0
  %1303 = vmatpush.msra.mxu0 0.0
  %1304 = vmatpush.msra.mxu0 0.0
  %1305 = vmatpush.msra.mxu0 0.0
  %1306 = vmatpush.msra.mxu0 0.0
  %1307 = vmatpush.msra.mxu0 0.0
  %1308 = vmatpush.msra.mxu0 0.0
  %1309 = vmatpush.msra.mxu0 0.0
  %1310 = vmatpush.msra.mxu0 0.0
  %1311 = vmatpush.msra.mxu0 0.0
  %1312 = vmatpush.msra.mxu0 0.0
  %1313 = vmatpush.msra.mxu0 0.0
  %1314 = vmatpush.msra.mxu0 0.0
  %1315 = vmatpush.msra.mxu0 %v1301
  %1316 = vmatpush.msra.mxu0 %v1288
  %1317 = vmatpush.msra.mxu0 %v1287
  %1318 = vmatpush.msra.mxu0 %v1286
  %1319 = vmatmul.f32.gmra.mxu0 %v1291
  %v1320 = vpop.f32.mrf.mxu0
  %v1321 = vadd.f32 0.0, %v1320
  %1322 = vmatmul.f32.gmra.mxu0 %v1294
  %v1323 = vpop.f32.mrf.mxu0
  %v1324 = vadd.f32 0.0, %v1323
  %1325 = vmatmul.f32.gmra.mxu0 %v1297
  %v1326 = vpop.f32.mrf.mxu0
  %v1327 = vadd.f32 0.0, %v1326
  %1328 = vdwg.mxu0
  %v1329 = vld [vmem:[%s14] sm:$0xff]
  %v1330 = vld [vmem:[%s14 + $0x8] sm:$0xff]
  %v1331 = vld [vmem:[%s14 + $0x10] sm:$0xff]
  %v1332 = vld [vmem:[%s14 + $0x18] sm:$0x7]
  %v1334 = vsel %vm1299, %v1332, 0
  %1336 = vmatpush.msra.mxu0 0.0
  %1337 = vmatpush.msra.mxu0 0.0
  %1338 = vmatpush.msra.mxu0 0.0
  %1339 = vmatpush.msra.mxu0 0.0
  %1340 = vmatpush.msra.mxu0 0.0
  %1341 = vmatpush.msra.mxu0 0.0
  %1342 = vmatpush.msra.mxu0 0.0
  %1343 = vmatpush.msra.mxu0 0.0
  %1344 = vmatpush.msra.mxu0 0.0
  %1345 = vmatpush.msra.mxu0 0.0
  %1346 = vmatpush.msra.mxu0 0.0
  %1347 = vmatpush.msra.mxu0 0.0
  %1348 = vmatpush.msra.mxu0 %v1334
  %1349 = vmatpush.msra.mxu0 %v1331
  %1350 = vmatpush.msra.mxu0 %v1330
  %1351 = vmatpush.msra.mxu0 %v1329
  %1352 = vmatmul.f32.gmra.mxu0 %v1291
  %v1353 = vpop.f32.mrf.mxu0
  %v1354 = vadd.f32 0.0, %v1353
  %1355 = vmatmul.f32.gmra.mxu0 %v1294
  %v1356 = vpop.f32.mrf.mxu0
  %v1357 = vadd.f32 0.0, %v1356
  %1358 = vmatmul.f32.gmra.mxu0 %v1297
  %v1359 = vpop.f32.mrf.mxu0
  %v1360 = vadd.f32 0.0, %v1359
  %1361 = vdwg.mxu0
  %v1362 = vmax.f32 %v1321, %v1354
  %v1363 = vmax.f32 %v1324, %v1357
  %v1364 = vmax.f32 %v1327, %v1360
  %v1365 = vmax.f32 %v1362, 0.0
  %v1366 = vmax.f32 %v1363, 0.0
  %v1367 = vmax.f32 %v1364, 0.0
  %v1368 = vld [vmem:[%s9] sm:$0xff]
  %v1369 = vld [vmem:[%s9 + $0x8] sm:$0xff]
  %v1370 = vld [vmem:[%s9 + $0x10] sm:$0xff]
  %s1371 = scalar_lea.vmem %s9, 24
  %v1372 = vld [vmem:[%s1371] sm:$0xff]
  %v1373 = vld [vmem:[%s1371 + $0x8] sm:$0xff]
  %v1374 = vld [vmem:[%s1371 + $0x10] sm:$0xff]
  %1378 = vrot.lane.b32.xlu0 %v1365, 127
  %v1379 = vpop.permute.xlu0 %1378
  %1380 = vrot.lane.b32.xlu0 %v1366, 127
  %v1381 = vpop.permute.xlu0 %1380
  %1382 = vrot.lane.b32.xlu0 %v1367, 127
  %v1383 = vpop.permute.xlu0 %1382
  %vm1387 = vcmask 195584
  %v1389 = vsel %vm1387, %v1372, 0
  %v1392 = vsel %vm1387, %v1373, 0
  %v1395 = vsel %vm1387, %v1374, 0
  %1397 = vmatpush.msra.mxu0 0.0
  %1398 = vmatpush.msra.mxu0 0.0
  %1399 = vmatpush.msra.mxu0 0.0
  %1400 = vmatpush.msra.mxu0 0.0
  %1401 = vmatpush.msra.mxu0 0.0
  %1402 = vmatpush.msra.mxu0 0.0
  %1403 = vmatpush.msra.mxu0 0.0
  %1404 = vmatpush.msra.mxu0 0.0
  %1405 = vmatpush.msra.mxu0 0.0
  %1406 = vmatpush.msra.mxu0 0.0
  %1407 = vmatpush.msra.mxu0 0.0
  %1408 = vmatpush.msra.mxu0 0.0
  %1409 = vmatpush.msra.mxu0 0.0
  %1410 = vmatpush.msra.mxu0 %v1383
  %1411 = vmatpush.msra.mxu0 %v1381
  %1412 = vmatpush.msra.mxu0 %v1379
  %1413 = vmatmul.f32.gmra.mxu0 %v1389
  %v1414 = vpop.f32.mrf.mxu0
  %v1415 = vadd.f32 0.0, %v1414
  %1416 = vmatmul.f32.gmra.mxu0 %v1392
  %v1417 = vpop.f32.mrf.mxu0
  %v1418 = vadd.f32 0.0, %v1417
  %1419 = vmatmul.f32.gmra.mxu0 %v1395
  %v1420 = vpop.f32.mrf.mxu0
  %v1421 = vadd.f32 0.0, %v1420
  %1422 = vdwg.mxu0
  %v1424 = vsel %vm1387, %v1368, 0
  %v1427 = vsel %vm1387, %v1369, 0
  %v1430 = vsel %vm1387, %v1370, 0
  %1432 = vmatpush.msra.mxu0 0.0
  %1433 = vmatpush.msra.mxu0 0.0
  %1434 = vmatpush.msra.mxu0 0.0
  %1435 = vmatpush.msra.mxu0 0.0
  %1436 = vmatpush.msra.mxu0 0.0
  %1437 = vmatpush.msra.mxu0 0.0
  %1438 = vmatpush.msra.mxu0 0.0
  %1439 = vmatpush.msra.mxu0 0.0
  %1440 = vmatpush.msra.mxu0 0.0
  %1441 = vmatpush.msra.mxu0 0.0
  %1442 = vmatpush.msra.mxu0 0.0
  %1443 = vmatpush.msra.mxu0 0.0
  %1444 = vmatpush.msra.mxu0 0.0
  %1445 = vmatpush.msra.mxu0 %v1367
  %1446 = vmatpush.msra.mxu0 %v1366
  %1447 = vmatpush.msra.mxu0 %v1365
  %1448 = vmatmul.f32.gmra.mxu0 %v1424
  %v1449 = vpop.f32.mrf.mxu0
  %v1450 = vadd.f32 %v1415, %v1449
  %1451 = vmatmul.f32.gmra.mxu0 %v1427
  %v1452 = vpop.f32.mrf.mxu0
  %v1453 = vadd.f32 %v1418, %v1452
  %1454 = vmatmul.f32.gmra.mxu0 %v1430
  %v1455 = vpop.f32.mrf.mxu0
  %v1456 = vadd.f32 %v1421, %v1455
  %1457 = vdwg.mxu0
  %s1458 = scalar_lea.vmem %s9, 48
  %v1459 = vld [vmem:[%s1458] sm:$0xff]
  %v1460 = vld [vmem:[%s1458 + $0x8] sm:$0xff]
  %v1461 = vld [vmem:[%s1458 + $0x10] sm:$0xff]
  %1462 = vrot.lane.b32.xlu0 %v1365, 126
  %v1463 = vpop.permute.xlu0 %1462
  %1464 = vrot.lane.b32.xlu0 %v1366, 126
  %v1465 = vpop.permute.xlu0 %1464
  %1466 = vrot.lane.b32.xlu0 %v1367, 126
  %v1467 = vpop.permute.xlu0 %1466
  %v1472 = vsel %vm1387, %v1459, 0
  %v1475 = vsel %vm1387, %v1460, 0
  %v1478 = vsel %vm1387, %v1461, 0
  %1480 = vmatpush.msra.mxu0 0.0
  %1481 = vmatpush.msra.mxu0 0.0
  %1482 = vmatpush.msra.mxu0 0.0
  %1483 = vmatpush.msra.mxu0 0.0
  %1484 = vmatpush.msra.mxu0 0.0
  %1485 = vmatpush.msra.mxu0 0.0
  %1486 = vmatpush.msra.mxu0 0.0
  %1487 = vmatpush.msra.mxu0 0.0
  %1488 = vmatpush.msra.mxu0 0.0
  %1489 = vmatpush.msra.mxu0 0.0
  %1490 = vmatpush.msra.mxu0 0.0
  %1491 = vmatpush.msra.mxu0 0.0
  %1492 = vmatpush.msra.mxu0 0.0
  %1493 = vmatpush.msra.mxu0 %v1467
  %1494 = vmatpush.msra.mxu0 %v1465
  %1495 = vmatpush.msra.mxu0 %v1463
  %1496 = vmatmul.f32.gmra.mxu0 %v1472
  %v1497 = vpop.f32.mrf.mxu0
  %v1498 = vadd.f32 0.0, %v1497
  %1499 = vmatmul.f32.gmra.mxu0 %v1475
  %v1500 = vpop.f32.mrf.mxu0
  %v1501 = vadd.f32 0.0, %v1500
  %1502 = vmatmul.f32.gmra.mxu0 %v1478
  %v1503 = vpop.f32.mrf.mxu0
  %v1504 = vadd.f32 0.0, %v1503
  %1505 = vdwg.mxu0
  %v1506 = vadd.f32 %v1450, %v1498
  %v1507 = vadd.f32 %v1453, %v1501
  %v1508 = vadd.f32 %v1456, %v1504
  %v1509 = vld [vmem:[%s10] sm:$0xff]
  %v1510 = vld [vmem:[%s10 + $0x8] sm:$0xff]
  %v1511 = vld [vmem:[%s10 + $0x10] sm:$0xff]
  %1513 = vset.pattern.permute.xlu0 0
  %1514 = vperm.xlu0 %1513, %v1509
  %v1515 = vpop.permute.xlu0 %1514
  %1518 = vset.pattern.permute.xlu0 0
  %1519 = vperm.xlu0 %1518, %v1510
  %v1520 = vpop.permute.xlu0 %1519
  %1523 = vset.pattern.permute.xlu0 0
  %1524 = vperm.xlu0 %1523, %v1511
  %v1525 = vpop.permute.xlu0 %1524
  %v1527 = vadd.f32 %v1506, %v1515
  %v1528 = vadd.f32 %v1507, %v1520
  %v1529 = vadd.f32 %v1508, %v1525
  %vm1530 = vcmask 89088
  %v1531 = vsel %vm1530, %v1527, 0.0
  %1532 = vadd.xlane.f32.xlu0 %v1531
  %v1533 = vpop.xlane.xlu0 %1532
  %v1534 = vsel %vm1530, %v1528, 0.0
  %1535 = vadd.xlane.f32.xlu0 %v1534
  %v1536 = vpop.xlane.xlu0 %1535
  %v1537 = vsel %vm1530, %v1529, 0.0
  %1538 = vadd.xlane.f32.xlu0 %v1537
  %v1539 = vpop.xlane.xlu0 %1538
  %v1540 = vrcp.pop 11.0
  %v1541 = vmul.f32 11.0, %v1540
  %v1542 = vsub.f32 1.0, %v1541
  %v1543 = vmul.f32 %v1540, %v1542
  %v1544 = vadd.f32 %v1540, %v1543
  %vm1545 = vweird.f32 %v1540
  %v1546 = vsel %vm1545, %v1540, %v1544
  %v1547 = vmul.f32 %v1533, %v1546
  %v1548 = vmul.f32 %v1536, %v1546
  %v1549 = vmul.f32 %v1539, %v1546
  %v1550 = vsub.f32 %v1527, %v1547
  %v1551 = vsub.f32 %v1528, %v1548
  %v1552 = vsub.f32 %v1529, %v1549
  %v1553 = vmul.f32 %v1550, %v1550
  %v1554 = vmul.f32 %v1551, %v1551
  %v1555 = vmul.f32 %v1552, %v1552
  %v1556 = vsel %vm1530, %v1553, 0.0
  %1557 = vadd.xlane.f32.xlu0 %v1556
  %v1558 = vpop.xlane.xlu0 %1557
  %v1559 = vsel %vm1530, %v1554, 0.0
  %1560 = vadd.xlane.f32.xlu0 %v1559
  %v1561 = vpop.xlane.xlu0 %1560
  %v1562 = vsel %vm1530, %v1555, 0.0
  %1563 = vadd.xlane.f32.xlu0 %v1562
  %v1564 = vpop.xlane.xlu0 %1563
  %v1565 = vmul.f32 %v1558, %v1546
  %v1566 = vmul.f32 %v1561, %v1546
  %v1567 = vmul.f32 %v1564, %v1546
  %v1568 = vadd.f32 %v1565, 1e-05
  %v1569 = vadd.f32 %v1566, 1e-05
  %v1570 = vadd.f32 %v1567, 1e-05
  %v1571 = vrsqrt.pop %v1568
  %v1572 = vmul.f32 %v1571, %v1568
  %v1573 = vmul.f32 %v1572, %v1571
  %v1574 = vmul.f32 0.5, %v1573
  %v1575 = vsub.f32 1.5, %v1574
  %v1576 = vmul.f32 %v1571, %v1575
  %vm1577 = vweird.f32 %v1568
  %vm1578 = vweird.f32 %v1571
  %vm1579 = vmor %vm1577, %vm1578
  %v1580 = vsel %vm1579, %v1571, %v1576
  %v1581 = vrsqrt.pop %v1569
  %v1582 = vmul.f32 %v1581, %v1569
  %v1583 = vmul.f32 %v1582, %v1581
  %v1584 = vmul.f32 0.5, %v1583
  %v1585 = vsub.f32 1.5, %v1584
  %v1586 = vmul.f32 %v1581, %v1585
  %vm1587 = vweird.f32 %v1569
  %vm1588 = vweird.f32 %v1581
  %vm1589 = vmor %vm1587, %vm1588
  %v1590 = vsel %vm1589, %v1581, %v1586
  %v1591 = vrsqrt.pop %v1570
  %v1592 = vmul.f32 %v1591, %v1570
  %v1593 = vmul.f32 %v1592, %v1591
  %v1594 = vmul.f32 0.5, %v1593
  %v1595 = vsub.f32 1.5, %v1594
  %v1596 = vmul.f32 %v1591, %v1595
  %vm1597 = vweird.f32 %v1570
  %vm1598 = vweird.f32 %v1591
  %vm1599 = vmor %vm1597, %vm1598
  %v1600 = vsel %vm1599, %v1591, %v1596
  %v1601 = vmul.f32 %v1550, %v1580
  %v1602 = vmul.f32 %v1551, %v1590
  %v1603 = vmul.f32 %v1552, %v1600
  %v1604 = vmax.f32 %v1601, 0.0
  %v1605 = vmax.f32 %v1602, 0.0
  %v1606 = vmax.f32 %v1603, 0.0
  %1607 = vst.msk [vmem:[#allocation2] sm:$0xff] %vm1530, %v1604
  %1608 = vst.msk [vmem:[#allocation2 + $0x8] sm:$0xff] %vm1530, %v1605
  %1609 = vst.msk [vmem:[#allocation2 + $0x10] sm:$0xff] %vm1530, %v1606
  %s1610 = scalar_lea.vmem %s0, 4
  %v1611 = vld [vmem:[%s1610] sm:$0xf]
  %v1612 = vld [vmem:[%s1] sm:$0xff]
  %v1613 = vld [vmem:[%s563] sm:$0xff]
  %1615 = vrot.lane.b32.xlu0 %v1611, 127
  %v1616 = vpop.permute.xlu0 %1615
  %v1618 = vsel %vm568, %v1613, 0
  %v1620 = vsel %vm275, %v1616, 0
  %1622 = vmatpush.msra.mxu0 0.0
  %1623 = vmatpush.msra.mxu0 0.0
  %1624 = vmatpush.msra.mxu0 0.0
  %1625 = vmatpush.msra.mxu0 0.0
  %1626 = vmatpush.msra.mxu0 0.0
  %1627 = vmatpush.msra.mxu0 0.0
  %1628 = vmatpush.msra.mxu0 0.0
  %1629 = vmatpush.msra.mxu0 0.0
  %1630 = vmatpush.msra.mxu0 0.0
  %1631 = vmatpush.msra.mxu0 0.0
  %1632 = vmatpush.msra.mxu0 0.0
  %1633 = vmatpush.msra.mxu0 0.0
  %1634 = vmatpush.msra.mxu0 0.0
  %1635 = vmatpush.msra.mxu0 0.0
  %1636 = vmatpush.msra.mxu0 0.0
  %1637 = vmatpush.msra.mxu0 %v1620
  %1638 = vmatmul.f32.gmra.mxu0 %v1618
  %v1639 = vpop.f32.mrf.mxu0
  %v1640 = vadd.f32 0.0, %v1639
  %1641 = vdwg.mxu0
  %v1643 = vsel %vm568, %v1612, 0
  %v1645 = vsel %vm275, %v1611, 0
  %1647 = vmatpush.msra.mxu0 0.0
  %1648 = vmatpush.msra.mxu0 0.0
  %1649 = vmatpush.msra.mxu0 0.0
  %1650 = vmatpush.msra.mxu0 0.0
  %1651 = vmatpush.msra.mxu0 0.0
  %1652 = vmatpush.msra.mxu0 0.0
  %1653 = vmatpush.msra.mxu0 0.0
  %1654 = vmatpush.msra.mxu0 0.0
  %1655 = vmatpush.msra.mxu0 0.0
  %1656 = vmatpush.msra.mxu0 0.0
  %1657 = vmatpush.msra.mxu0 0.0
  %1658 = vmatpush.msra.mxu0 0.0
  %1659 = vmatpush.msra.mxu0 0.0
  %1660 = vmatpush.msra.mxu0 0.0
  %1661 = vmatpush.msra.mxu0 0.0
  %1662 = vmatpush.msra.mxu0 %v1645
  %1663 = vmatmul.f32.gmra.mxu0 %v1643
  %v1664 = vpop.f32.mrf.mxu0
  %v1665 = vadd.f32 %v1640, %v1664
  %1666 = vdwg.mxu0
  %v1667 = vld [vmem:[%s619] sm:$0xff]
  %1668 = vrot.lane.b32.xlu0 %v1611, 126
  %v1669 = vpop.permute.xlu0 %1668
  %v1671 = vsel %vm568, %v1667, 0
  %v1673 = vsel %vm275, %v1669, 0
  %1675 = vmatpush.msra.mxu0 0.0
  %1676 = vmatpush.msra.mxu0 0.0
  %1677 = vmatpush.msra.mxu0 0.0
  %1678 = vmatpush.msra.mxu0 0.0
  %1679 = vmatpush.msra.mxu0 0.0
  %1680 = vmatpush.msra.mxu0 0.0
  %1681 = vmatpush.msra.mxu0 0.0
  %1682 = vmatpush.msra.mxu0 0.0
  %1683 = vmatpush.msra.mxu0 0.0
  %1684 = vmatpush.msra.mxu0 0.0
  %1685 = vmatpush.msra.mxu0 0.0
  %1686 = vmatpush.msra.mxu0 0.0
  %1687 = vmatpush.msra.mxu0 0.0
  %1688 = vmatpush.msra.mxu0 0.0
  %1689 = vmatpush.msra.mxu0 0.0
  %1690 = vmatpush.msra.mxu0 %v1673
  %1691 = vmatmul.f32.gmra.mxu0 %v1671
  %v1692 = vpop.f32.mrf.mxu0
  %v1693 = vadd.f32 0.0, %v1692
  %1694 = vdwg.mxu0
  %v1695 = vadd.f32 %v1665, %v1693
  %v1696 = vld [vmem:[%s2] sm:$0xff]
  %1698 = vset.pattern.permute.xlu0 0
  %1699 = vperm.xlu0 %1698, %v1696
  %v1700 = vpop.permute.xlu0 %1699
  %v1702 = vadd.f32 %v1695, %v1700
  %v1703 = vsel %vm656, %v1702, 0.0
  %1704 = vadd.xlane.f32.xlu0 %v1703
  %v1705 = vpop.xlane.xlu0 %1704
  %v1706 = vmul.f32 %v1705, %v666
  %v1707 = vsub.f32 %v1702, %v1706
  %v1708 = vmul.f32 %v1707, %v1707
  %v1709 = vsel %vm656, %v1708, 0.0
  %1710 = vadd.xlane.f32.xlu0 %v1709
  %v1711 = vpop.xlane.xlu0 %1710
  %v1712 = vmul.f32 %v1711, %v666
  %v1713 = vadd.f32 %v1712, 1e-05
  %v1714 = vrsqrt.pop %v1713
  %v1715 = vmul.f32 %v1714, %v1713
  %v1716 = vmul.f32 %v1715, %v1714
  %v1717 = vmul.f32 0.5, %v1716
  %v1718 = vsub.f32 1.5, %v1717
  %v1719 = vmul.f32 %v1714, %v1718
  %vm1720 = vweird.f32 %v1713
  %vm1721 = vweird.f32 %v1714
  %vm1722 = vmor %vm1720, %vm1721
  %v1723 = vsel %vm1722, %v1714, %v1719
  %v1724 = vmul.f32 %v1707, %v1723
  %v1725 = vmax.f32 %v1724, 0.0
  %v1726 = vld [vmem:[%s3] sm:$0xff]
  %v1727 = vld [vmem:[%s688] sm:$0xff]
  %1729 = vrot.lane.b32.xlu0 %v1725, 127
  %v1730 = vpop.permute.xlu0 %1729
  %v1733 = vsel %vm694, %v1727, 0
  %1735 = vmatpush.msra.mxu0 0.0
  %1736 = vmatpush.msra.mxu0 0.0
  %1737 = vmatpush.msra.mxu0 0.0
  %1738 = vmatpush.msra.mxu0 0.0
  %1739 = vmatpush.msra.mxu0 0.0
  %1740 = vmatpush.msra.mxu0 0.0
  %1741 = vmatpush.msra.mxu0 0.0
  %1742 = vmatpush.msra.mxu0 0.0
  %1743 = vmatpush.msra.mxu0 0.0
  %1744 = vmatpush.msra.mxu0 0.0
  %1745 = vmatpush.msra.mxu0 0.0
  %1746 = vmatpush.msra.mxu0 0.0
  %1747 = vmatpush.msra.mxu0 0.0
  %1748 = vmatpush.msra.mxu0 0.0
  %1749 = vmatpush.msra.mxu0 0.0
  %1750 = vmatpush.msra.mxu0 %v1730
  %1751 = vmatmul.f32.gmra.mxu0 %v1733
  %v1752 = vpop.f32.mrf.mxu0
  %v1753 = vadd.f32 0.0, %v1752
  %1754 = vdwg.mxu0
  %v1756 = vsel %vm694, %v1726, 0
  %1758 = vmatpush.msra.mxu0 0.0
  %1759 = vmatpush.msra.mxu0 0.0
  %1760 = vmatpush.msra.mxu0 0.0
  %1761 = vmatpush.msra.mxu0 0.0
  %1762 = vmatpush.msra.mxu0 0.0
  %1763 = vmatpush.msra.mxu0 0.0
  %1764 = vmatpush.msra.mxu0 0.0
  %1765 = vmatpush.msra.mxu0 0.0
  %1766 = vmatpush.msra.mxu0 0.0
  %1767 = vmatpush.msra.mxu0 0.0
  %1768 = vmatpush.msra.mxu0 0.0
  %1769 = vmatpush.msra.mxu0 0.0
  %1770 = vmatpush.msra.mxu0 0.0
  %1771 = vmatpush.msra.mxu0 0.0
  %1772 = vmatpush.msra.mxu0 0.0
  %1773 = vmatpush.msra.mxu0 %v1725
  %1774 = vmatmul.f32.gmra.mxu0 %v1756
  %v1775 = vpop.f32.mrf.mxu0
  %v1776 = vadd.f32 %v1753, %v1775
  %1777 = vdwg.mxu0
  %v1778 = vld [vmem:[%s741] sm:$0xff]
  %1779 = vrot.lane.b32.xlu0 %v1725, 126
  %v1780 = vpop.permute.xlu0 %1779
  %v1783 = vsel %vm694, %v1778, 0
  %1785 = vmatpush.msra.mxu0 0.0
  %1786 = vmatpush.msra.mxu0 0.0
  %1787 = vmatpush.msra.mxu0 0.0
  %1788 = vmatpush.msra.mxu0 0.0
  %1789 = vmatpush.msra.mxu0 0.0
  %1790 = vmatpush.msra.mxu0 0.0
  %1791 = vmatpush.msra.mxu0 0.0
  %1792 = vmatpush.msra.mxu0 0.0
  %1793 = vmatpush.msra.mxu0 0.0
  %1794 = vmatpush.msra.mxu0 0.0
  %1795 = vmatpush.msra.mxu0 0.0
  %1796 = vmatpush.msra.mxu0 0.0
  %1797 = vmatpush.msra.mxu0 0.0
  %1798 = vmatpush.msra.mxu0 0.0
  %1799 = vmatpush.msra.mxu0 0.0
  %1800 = vmatpush.msra.mxu0 %v1780
  %1801 = vmatmul.f32.gmra.mxu0 %v1783
  %v1802 = vpop.f32.mrf.mxu0
  %v1803 = vadd.f32 0.0, %v1802
  %1804 = vdwg.mxu0
  %v1805 = vadd.f32 %v1776, %v1803
  %v1806 = vld [vmem:[%s4] sm:$0xff]
  %1808 = vset.pattern.permute.xlu0 0
  %1809 = vperm.xlu0 %1808, %v1806
  %v1810 = vpop.permute.xlu0 %1809
  %v1812 = vadd.f32 %v1805, %v1810
  %v1813 = vsel %vm777, %v1812, 0.0
  %1814 = vadd.xlane.f32.xlu0 %v1813
  %v1815 = vpop.xlane.xlu0 %1814
  %v1816 = vmul.f32 %v1815, %v787
  %v1817 = vsub.f32 %v1812, %v1816
  %v1818 = vmul.f32 %v1817, %v1817
  %v1819 = vsel %vm777, %v1818, 0.0
  %1820 = vadd.xlane.f32.xlu0 %v1819
  %v1821 = vpop.xlane.xlu0 %1820
  %v1822 = vmul.f32 %v1821, %v787
  %v1823 = vadd.f32 %v1822, 1e-05
  %v1824 = vrsqrt.pop %v1823
  %v1825 = vmul.f32 %v1824, %v1823
  %v1826 = vmul.f32 %v1825, %v1824
  %v1827 = vmul.f32 0.5, %v1826
  %v1828 = vsub.f32 1.5, %v1827
  %v1829 = vmul.f32 %v1824, %v1828
  %vm1830 = vweird.f32 %v1823
  %vm1831 = vweird.f32 %v1824
  %vm1832 = vmor %vm1830, %vm1831
  %v1833 = vsel %vm1832, %v1824, %v1829
  %v1834 = vmul.f32 %v1817, %v1833
  %v1835 = vmax.f32 %v1834, 0.0
  %v1836 = vld [vmem:[%s5] sm:$0xff]
  %v1837 = vld [vmem:[%s5 + $0x8] sm:$0xff]
  %v1838 = vld [vmem:[%s810] sm:$0xff]
  %v1839 = vld [vmem:[%s810 + $0x8] sm:$0xff]
  %1841 = vrot.lane.b32.xlu0 %v1835, 127
  %v1842 = vpop.permute.xlu0 %1841
  %v1845 = vsel %vm694, %v1838, 0
  %v1848 = vsel %vm694, %v1839, 0
  %1850 = vmatpush.msra.mxu0 0.0
  %1851 = vmatpush.msra.mxu0 0.0
  %1852 = vmatpush.msra.mxu0 0.0
  %1853 = vmatpush.msra.mxu0 0.0
  %1854 = vmatpush.msra.mxu0 0.0
  %1855 = vmatpush.msra.mxu0 0.0
  %1856 = vmatpush.msra.mxu0 0.0
  %1857 = vmatpush.msra.mxu0 0.0
  %1858 = vmatpush.msra.mxu0 0.0
  %1859 = vmatpush.msra.mxu0 0.0
  %1860 = vmatpush.msra.mxu0 0.0
  %1861 = vmatpush.msra.mxu0 0.0
  %1862 = vmatpush.msra.mxu0 0.0
  %1863 = vmatpush.msra.mxu0 0.0
  %1864 = vmatpush.msra.mxu0 0.0
  %1865 = vmatpush.msra.mxu0 %v1842
  %1866 = vmatmul.f32.gmra.mxu0 %v1845
  %v1867 = vpop.f32.mrf.mxu0
  %v1868 = vadd.f32 0.0, %v1867
  %1869 = vmatmul.f32.gmra.mxu0 %v1848
  %v1870 = vpop.f32.mrf.mxu0
  %v1871 = vadd.f32 0.0, %v1870
  %1872 = vdwg.mxu0
  %v1874 = vsel %vm694, %v1836, 0
  %v1877 = vsel %vm694, %v1837, 0
  %1879 = vmatpush.msra.mxu0 0.0
  %1880 = vmatpush.msra.mxu0 0.0
  %1881 = vmatpush.msra.mxu0 0.0
  %1882 = vmatpush.msra.mxu0 0.0
  %1883 = vmatpush.msra.mxu0 0.0
  %1884 = vmatpush.msra.mxu0 0.0
  %1885 = vmatpush.msra.mxu0 0.0
  %1886 = vmatpush.msra.mxu0 0.0
  %1887 = vmatpush.msra.mxu0 0.0
  %1888 = vmatpush.msra.mxu0 0.0
  %1889 = vmatpush.msra.mxu0 0.0
  %1890 = vmatpush.msra.mxu0 0.0
  %1891 = vmatpush.msra.mxu0 0.0
  %1892 = vmatpush.msra.mxu0 0.0
  %1893 = vmatpush.msra.mxu0 0.0
  %1894 = vmatpush.msra.mxu0 %v1835
  %1895 = vmatmul.f32.gmra.mxu0 %v1874
  %v1896 = vpop.f32.mrf.mxu0
  %v1897 = vadd.f32 %v1868, %v1896
  %1898 = vmatmul.f32.gmra.mxu0 %v1877
  %v1899 = vpop.f32.mrf.mxu0
  %v1900 = vadd.f32 %v1871, %v1899
  %1901 = vdwg.mxu0
  %v1902 = vld [vmem:[%s875] sm:$0xff]
  %v1903 = vld [vmem:[%s875 + $0x8] sm:$0xff]
  %1904 = vrot.lane.b32.xlu0 %v1835, 126
  %v1905 = vpop.permute.xlu0 %1904
  %v1908 = vsel %vm694, %v1902, 0
  %v1911 = vsel %vm694, %v1903, 0
  %1913 = vmatpush.msra.mxu0 0.0
  %1914 = vmatpush.msra.mxu0 0.0
  %1915 = vmatpush.msra.mxu0 0.0
  %1916 = vmatpush.msra.mxu0 0.0
  %1917 = vmatpush.msra.mxu0 0.0
  %1918 = vmatpush.msra.mxu0 0.0
  %1919 = vmatpush.msra.mxu0 0.0
  %1920 = vmatpush.msra.mxu0 0.0
  %1921 = vmatpush.msra.mxu0 0.0
  %1922 = vmatpush.msra.mxu0 0.0
  %1923 = vmatpush.msra.mxu0 0.0
  %1924 = vmatpush.msra.mxu0 0.0
  %1925 = vmatpush.msra.mxu0 0.0
  %1926 = vmatpush.msra.mxu0 0.0
  %1927 = vmatpush.msra.mxu0 0.0
  %1928 = vmatpush.msra.mxu0 %v1905
  %1929 = vmatmul.f32.gmra.mxu0 %v1908
  %v1930 = vpop.f32.mrf.mxu0
  %v1931 = vadd.f32 0.0, %v1930
  %1932 = vmatmul.f32.gmra.mxu0 %v1911
  %v1933 = vpop.f32.mrf.mxu0
  %v1934 = vadd.f32 0.0, %v1933
  %1935 = vdwg.mxu0
  %v1936 = vadd.f32 %v1897, %v1931
  %v1937 = vadd.f32 %v1900, %v1934
  %v1938 = vld [vmem:[%s6] sm:$0xff]
  %v1939 = vld [vmem:[%s6 + $0x8] sm:$0xff]
  %1941 = vset.pattern.permute.xlu0 0
  %1942 = vperm.xlu0 %1941, %v1938
  %v1943 = vpop.permute.xlu0 %1942
  %1946 = vset.pattern.permute.xlu0 0
  %1947 = vperm.xlu0 %1946, %v1939
  %v1948 = vpop.permute.xlu0 %1947
  %v1950 = vadd.f32 %v1936, %v1943
  %v1951 = vadd.f32 %v1937, %v1948
  %v1952 = vsel %vm926, %v1950, 0.0
  %1953 = vadd.xlane.f32.xlu0 %v1952
  %v1954 = vpop.xlane.xlu0 %1953
  %v1955 = vsel %vm926, %v1951, 0.0
  %1956 = vadd.xlane.f32.xlu0 %v1955
  %v1957 = vpop.xlane.xlu0 %1956
  %v1958 = vmul.f32 %v1954, %v939
  %v1959 = vmul.f32 %v1957, %v939
  %v1960 = vsub.f32 %v1950, %v1958
  %v1961 = vsub.f32 %v1951, %v1959
  %v1962 = vmul.f32 %v1960, %v1960
  %v1963 = vmul.f32 %v1961, %v1961
  %v1964 = vsel %vm926, %v1962, 0.0
  %1965 = vadd.xlane.f32.xlu0 %v1964
  %v1966 = vpop.xlane.xlu0 %1965
  %v1967 = vsel %vm926, %v1963, 0.0
  %1968 = vadd.xlane.f32.xlu0 %v1967
  %v1969 = vpop.xlane.xlu0 %1968
  %v1970 = vmul.f32 %v1966, %v939
  %v1971 = vmul.f32 %v1969, %v939
  %v1972 = vadd.f32 %v1970, 1e-05
  %v1973 = vadd.f32 %v1971, 1e-05
  %v1974 = vrsqrt.pop %v1972
  %v1975 = vmul.f32 %v1974, %v1972
  %v1976 = vmul.f32 %v1975, %v1974
  %v1977 = vmul.f32 0.5, %v1976
  %v1978 = vsub.f32 1.5, %v1977
  %v1979 = vmul.f32 %v1974, %v1978
  %vm1980 = vweird.f32 %v1972
  %vm1981 = vweird.f32 %v1974
  %vm1982 = vmor %vm1980, %vm1981
  %v1983 = vsel %vm1982, %v1974, %v1979
  %v1984 = vrsqrt.pop %v1973
  %v1985 = vmul.f32 %v1984, %v1973
  %v1986 = vmul.f32 %v1985, %v1984
  %v1987 = vmul.f32 0.5, %v1986
  %v1988 = vsub.f32 1.5, %v1987
  %v1989 = vmul.f32 %v1984, %v1988
  %vm1990 = vweird.f32 %v1973
  %vm1991 = vweird.f32 %v1984
  %vm1992 = vmor %vm1990, %vm1991
  %v1993 = vsel %vm1992, %v1984, %v1989
  %v1994 = vmul.f32 %v1960, %v1983
  %v1995 = vmul.f32 %v1961, %v1993
  %v1996 = vld [vmem:[%s11] sm:$0xff]
  %v1997 = vld [vmem:[%s11 + $0x8] sm:$0xff]
  %v1998 = vld [vmem:[%s11 + $0x10] sm:$0xff]
  %v1999 = vld [vmem:[%s11 + $0x18] sm:$0xff]
  %v2000 = vld [vmem:[%s11 + $0x20] sm:$0xff]
  %v2001 = vld [vmem:[%s11 + $0x28] sm:$0xff]
  %v2002 = vld [vmem:[%s11 + $0x30] sm:$0xff]
  %v2003 = vld [vmem:[%s11 + $0x38] sm:$0x3]
  %v2005 = vsel %vm926, %v1994, 0
  %v2008 = vsel %vm926, %v1995, 0
  %v2011 = vsel %vm992, %v2003, 0
  %2013 = vmatpush.msra.mxu0 0.0
  %2014 = vmatpush.msra.mxu0 0.0
  %2015 = vmatpush.msra.mxu0 0.0
  %2016 = vmatpush.msra.mxu0 0.0
  %2017 = vmatpush.msra.mxu0 0.0
  %2018 = vmatpush.msra.mxu0 0.0
  %2019 = vmatpush.msra.mxu0 0.0
  %2020 = vmatpush.msra.mxu0 0.0
  %2021 = vmatpush.msra.mxu0 %v2011
  %2022 = vmatpush.msra.mxu0 %v2002
  %2023 = vmatpush.msra.mxu0 %v2001
  %2024 = vmatpush.msra.mxu0 %v2000
  %2025 = vmatpush.msra.mxu0 %v1999
  %2026 = vmatpush.msra.mxu0 %v1998
  %2027 = vmatpush.msra.mxu0 %v1997
  %2028 = vmatpush.msra.mxu0 %v1996
  %2029 = vmatmul.f32.gmra.mxu0 %v2005
  %v2030 = vpop.f32.mrf.mxu0
  %v2031 = vadd.f32 0.0, %v2030
  %2032 = vmatmul.f32.gmra.mxu0 %v2008
  %v2033 = vpop.f32.mrf.mxu0
  %v2034 = vadd.f32 0.0, %v2033
  %2035 = vdwg.mxu0
  %v2036 = vld [vmem:[%s12] sm:$0xff]
  %v2037 = vld [vmem:[%s12 + $0x8] sm:$0xff]
  %v2038 = vld [vmem:[%s12 + $0x10] sm:$0xff]
  %v2039 = vld [vmem:[%s12 + $0x18] sm:$0xff]
  %v2040 = vld [vmem:[%s12 + $0x20] sm:$0xff]
  %v2041 = vld [vmem:[%s12 + $0x28] sm:$0xff]
  %v2042 = vld [vmem:[%s12 + $0x30] sm:$0xff]
  %v2043 = vld [vmem:[%s12 + $0x38] sm:$0x3]
  %v2045 = vsel %vm992, %v2043, 0
  %2047 = vmatpush.msra.mxu0 0.0
  %2048 = vmatpush.msra.mxu0 0.0
  %2049 = vmatpush.msra.mxu0 0.0
  %2050 = vmatpush.msra.mxu0 0.0
  %2051 = vmatpush.msra.mxu0 0.0
  %2052 = vmatpush.msra.mxu0 0.0
  %2053 = vmatpush.msra.mxu0 0.0
  %2054 = vmatpush.msra.mxu0 0.0
  %2055 = vmatpush.msra.mxu0 %v2045
  %2056 = vmatpush.msra.mxu0 %v2042
  %2057 = vmatpush.msra.mxu0 %v2041
  %2058 = vmatpush.msra.mxu0 %v2040
  %2059 = vmatpush.msra.mxu0 %v2039
  %2060 = vmatpush.msra.mxu0 %v2038
  %2061 = vmatpush.msra.mxu0 %v2037
  %2062 = vmatpush.msra.mxu0 %v2036
  %2063 = vmatmul.f32.gmra.mxu0 %v2005
  %v2064 = vpop.f32.mrf.mxu0
  %v2065 = vadd.f32 0.0, %v2064
  %2066 = vmatmul.f32.gmra.mxu0 %v2008
  %v2067 = vpop.f32.mrf.mxu0
  %v2068 = vadd.f32 0.0, %v2067
  %2069 = vdwg.mxu0
  %v2070 = vmax.f32 %v2031, %v2065
  %v2071 = vmax.f32 %v2034, %v2068
  %v2072 = vmax.f32 %v2070, 0.0
  %v2073 = vmax.f32 %v2071, 0.0
  %v2074 = vld [vmem:[%s7] sm:$0xff]
  %v2075 = vld [vmem:[%s7 + $0x8] sm:$0xff]
  %v2076 = vld [vmem:[%s7 + $0x10] sm:$0xff]
  %v2077 = vld [vmem:[%s1060] sm:$0xff]
  %v2078 = vld [vmem:[%s1060 + $0x8] sm:$0xff]
  %v2079 = vld [vmem:[%s1060 + $0x10] sm:$0xff]
  %2082 = vrot.lane.b32.xlu0 %v2072, 127
  %v2083 = vpop.permute.xlu0 %2082
  %2084 = vrot.lane.b32.xlu0 %v2073, 127
  %v2085 = vpop.permute.xlu0 %2084
  %v2089 = vsel %vm1072, %v2077, 0
  %v2092 = vsel %vm1072, %v2078, 0
  %v2095 = vsel %vm1072, %v2079, 0
  %2097 = vmatpush.msra.mxu0 0.0
  %2098 = vmatpush.msra.mxu0 0.0
  %2099 = vmatpush.msra.mxu0 0.0
  %2100 = vmatpush.msra.mxu0 0.0
  %2101 = vmatpush.msra.mxu0 0.0
  %2102 = vmatpush.msra.mxu0 0.0
  %2103 = vmatpush.msra.mxu0 0.0
  %2104 = vmatpush.msra.mxu0 0.0
  %2105 = vmatpush.msra.mxu0 0.0
  %2106 = vmatpush.msra.mxu0 0.0
  %2107 = vmatpush.msra.mxu0 0.0
  %2108 = vmatpush.msra.mxu0 0.0
  %2109 = vmatpush.msra.mxu0 0.0
  %2110 = vmatpush.msra.mxu0 0.0
  %2111 = vmatpush.msra.mxu0 %v2085
  %2112 = vmatpush.msra.mxu0 %v2083
  %2113 = vmatmul.f32.gmra.mxu0 %v2089
  %v2114 = vpop.f32.mrf.mxu0
  %v2115 = vadd.f32 0.0, %v2114
  %2116 = vmatmul.f32.gmra.mxu0 %v2092
  %v2117 = vpop.f32.mrf.mxu0
  %v2118 = vadd.f32 0.0, %v2117
  %2119 = vmatmul.f32.gmra.mxu0 %v2095
  %v2120 = vpop.f32.mrf.mxu0
  %v2121 = vadd.f32 0.0, %v2120
  %2122 = vdwg.mxu0
  %v2124 = vsel %vm1072, %v2074, 0
  %v2127 = vsel %vm1072, %v2075, 0
  %v2130 = vsel %vm1072, %v2076, 0
  %2132 = vmatpush.msra.mxu0 0.0
  %2133 = vmatpush.msra.mxu0 0.0
  %2134 = vmatpush.msra.mxu0 0.0
  %2135 = vmatpush.msra.mxu0 0.0
  %2136 = vmatpush.msra.mxu0 0.0
  %2137 = vmatpush.msra.mxu0 0.0
  %2138 = vmatpush.msra.mxu0 0.0
  %2139 = vmatpush.msra.mxu0 0.0
  %2140 = vmatpush.msra.mxu0 0.0
  %2141 = vmatpush.msra.mxu0 0.0
  %2142 = vmatpush.msra.mxu0 0.0
  %2143 = vmatpush.msra.mxu0 0.0
  %2144 = vmatpush.msra.mxu0 0.0
  %2145 = vmatpush.msra.mxu0 0.0
  %2146 = vmatpush.msra.mxu0 %v2073
  %2147 = vmatpush.msra.mxu0 %v2072
  %2148 = vmatmul.f32.gmra.mxu0 %v2124
  %v2149 = vpop.f32.mrf.mxu0
  %v2150 = vadd.f32 %v2115, %v2149
  %2151 = vmatmul.f32.gmra.mxu0 %v2127
  %v2152 = vpop.f32.mrf.mxu0
  %v2153 = vadd.f32 %v2118, %v2152
  %2154 = vmatmul.f32.gmra.mxu0 %v2130
  %v2155 = vpop.f32.mrf.mxu0
  %v2156 = vadd.f32 %v2121, %v2155
  %2157 = vdwg.mxu0
  %v2158 = vld [vmem:[%s1143] sm:$0xff]
  %v2159 = vld [vmem:[%s1143 + $0x8] sm:$0xff]
  %v2160 = vld [vmem:[%s1143 + $0x10] sm:$0xff]
  %2161 = vrot.lane.b32.xlu0 %v2072, 126
  %v2162 = vpop.permute.xlu0 %2161
  %2163 = vrot.lane.b32.xlu0 %v2073, 126
  %v2164 = vpop.permute.xlu0 %2163
  %v2168 = vsel %vm1072, %v2158, 0
  %v2171 = vsel %vm1072, %v2159, 0
  %v2174 = vsel %vm1072, %v2160, 0
  %2176 = vmatpush.msra.mxu0 0.0
  %2177 = vmatpush.msra.mxu0 0.0
  %2178 = vmatpush.msra.mxu0 0.0
  %2179 = vmatpush.msra.mxu0 0.0
  %2180 = vmatpush.msra.mxu0 0.0
  %2181 = vmatpush.msra.mxu0 0.0
  %2182 = vmatpush.msra.mxu0 0.0
  %2183 = vmatpush.msra.mxu0 0.0
  %2184 = vmatpush.msra.mxu0 0.0
  %2185 = vmatpush.msra.mxu0 0.0
  %2186 = vmatpush.msra.mxu0 0.0
  %2187 = vmatpush.msra.mxu0 0.0
  %2188 = vmatpush.msra.mxu0 0.0
  %2189 = vmatpush.msra.mxu0 0.0
  %2190 = vmatpush.msra.mxu0 %v2164
  %2191 = vmatpush.msra.mxu0 %v2162
  %2192 = vmatmul.f32.gmra.mxu0 %v2168
  %v2193 = vpop.f32.mrf.mxu0
  %v2194 = vadd.f32 0.0, %v2193
  %2195 = vmatmul.f32.gmra.mxu0 %v2171
  %v2196 = vpop.f32.mrf.mxu0
  %v2197 = vadd.f32 0.0, %v2196
  %2198 = vmatmul.f32.gmra.mxu0 %v2174
  %v2199 = vpop.f32.mrf.mxu0
  %v2200 = vadd.f32 0.0, %v2199
  %2201 = vdwg.mxu0
  %v2202 = vadd.f32 %v2150, %v2194
  %v2203 = vadd.f32 %v2153, %v2197
  %v2204 = vadd.f32 %v2156, %v2200
  %v2205 = vld [vmem:[%s8] sm:$0xff]
  %v2206 = vld [vmem:[%s8 + $0x8] sm:$0xff]
  %v2207 = vld [vmem:[%s8 + $0x10] sm:$0xff]
  %2209 = vset.pattern.permute.xlu0 0
  %2210 = vperm.xlu0 %2209, %v2205
  %v2211 = vpop.permute.xlu0 %2210
  %2214 = vset.pattern.permute.xlu0 0
  %2215 = vperm.xlu0 %2214, %v2206
  %v2216 = vpop.permute.xlu0 %2215
  %2219 = vset.pattern.permute.xlu0 0
  %2220 = vperm.xlu0 %2219, %v2207
  %v2221 = vpop.permute.xlu0 %2220
  %v2223 = vadd.f32 %v2202, %v2211
  %v2224 = vadd.f32 %v2203, %v2216
  %v2225 = vadd.f32 %v2204, %v2221
  %v2226 = vsel %vm1212, %v2223, 0.0
  %2227 = vadd.xlane.f32.xlu0 %v2226
  %v2228 = vpop.xlane.xlu0 %2227
  %v2229 = vsel %vm1212, %v2224, 0.0
  %2230 = vadd.xlane.f32.xlu0 %v2229
  %v2231 = vpop.xlane.xlu0 %2230
  %v2232 = vsel %vm1212, %v2225, 0.0
  %2233 = vadd.xlane.f32.xlu0 %v2232
  %v2234 = vpop.xlane.xlu0 %2233
  %v2235 = vmul.f32 %v2228, %v1228
  %v2236 = vmul.f32 %v2231, %v1228
  %v2237 = vmul.f32 %v2234, %v1228
  %v2238 = vsub.f32 %v2223, %v2235
  %v2239 = vsub.f32 %v2224, %v2236
  %v2240 = vsub.f32 %v2225, %v2237
  %v2241 = vmul.f32 %v2238, %v2238
  %v2242 = vmul.f32 %v2239, %v2239
  %v2243 = vmul.f32 %v2240, %v2240
  %v2244 = vsel %vm1212, %v2241, 0.0
  %2245 = vadd.xlane.f32.xlu0 %v2244
  %v2246 = vpop.xlane.xlu0 %2245
  %v2247 = vsel %vm1212, %v2242, 0.0
  %2248 = vadd.xlane.f32.xlu0 %v2247
  %v2249 = vpop.xlane.xlu0 %2248
  %v2250 = vsel %vm1212, %v2243, 0.0
  %2251 = vadd.xlane.f32.xlu0 %v2250
  %v2252 = vpop.xlane.xlu0 %2251
  %v2253 = vmul.f32 %v2246, %v1228
  %v2254 = vmul.f32 %v2249, %v1228
  %v2255 = vmul.f32 %v2252, %v1228
  %v2256 = vadd.f32 %v2253, 1e-05
  %v2257 = vadd.f32 %v2254, 1e-05
  %v2258 = vadd.f32 %v2255, 1e-05
  %v2259 = vrsqrt.pop %v2256
  %v2260 = vmul.f32 %v2259, %v2256
  %v2261 = vmul.f32 %v2260, %v2259
  %v2262 = vmul.f32 0.5, %v2261
  %v2263 = vsub.f32 1.5, %v2262
  %v2264 = vmul.f32 %v2259, %v2263
  %vm2265 = vweird.f32 %v2256
  %vm2266 = vweird.f32 %v2259
  %vm2267 = vmor %vm2265, %vm2266
  %v2268 = vsel %vm2267, %v2259, %v2264
  %v2269 = vrsqrt.pop %v2257
  %v2270 = vmul.f32 %v2269, %v2257
  %v2271 = vmul.f32 %v2270, %v2269
  %v2272 = vmul.f32 0.5, %v2271
  %v2273 = vsub.f32 1.5, %v2272
  %v2274 = vmul.f32 %v2269, %v2273
  %vm2275 = vweird.f32 %v2257
  %vm2276 = vweird.f32 %v2269
  %vm2277 = vmor %vm2275, %vm2276
  %v2278 = vsel %vm2277, %v2269, %v2274
  %v2279 = vrsqrt.pop %v2258
  %v2280 = vmul.f32 %v2279, %v2258
  %v2281 = vmul.f32 %v2280, %v2279
  %v2282 = vmul.f32 0.5, %v2281
  %v2283 = vsub.f32 1.5, %v2282
  %v2284 = vmul.f32 %v2279, %v2283
  %vm2285 = vweird.f32 %v2258
  %vm2286 = vweird.f32 %v2279
  %vm2287 = vmor %vm2285, %vm2286
  %v2288 = vsel %vm2287, %v2279, %v2284
  %v2289 = vmul.f32 %v2238, %v2268
  %v2290 = vmul.f32 %v2239, %v2278
  %v2291 = vmul.f32 %v2240, %v2288
  %v2292 = vld [vmem:[%s13] sm:$0xff]
  %v2293 = vld [vmem:[%s13 + $0x8] sm:$0xff]
  %v2294 = vld [vmem:[%s13 + $0x10] sm:$0xff]
  %v2295 = vld [vmem:[%s13 + $0x18] sm:$0x7]
  %v2297 = vsel %vm1212, %v2289, 0
  %v2300 = vsel %vm1212, %v2290, 0
  %v2303 = vsel %vm1212, %v2291, 0
  %v2306 = vsel %vm1299, %v2295, 0
  %2308 = vmatpush.msra.mxu0 0.0
  %2309 = vmatpush.msra.mxu0 0.0
  %2310 = vmatpush.msra.mxu0 0.0
  %2311 = vmatpush.msra.mxu0 0.0
  %2312 = vmatpush.msra.mxu0 0.0
  %2313 = vmatpush.msra.mxu0 0.0
  %2314 = vmatpush.msra.mxu0 0.0
  %2315 = vmatpush.msra.mxu0 0.0
  %2316 = vmatpush.msra.mxu0 0.0
  %2317 = vmatpush.msra.mxu0 0.0
  %2318 = vmatpush.msra.mxu0 0.0
  %2319 = vmatpush.msra.mxu0 0.0
  %2320 = vmatpush.msra.mxu0 %v2306
  %2321 = vmatpush.msra.mxu0 %v2294
  %2322 = vmatpush.msra.mxu0 %v2293
  %2323 = vmatpush.msra.mxu0 %v2292
  %2324 = vmatmul.f32.gmra.mxu0 %v2297
  %v2325 = vpop.f32.mrf.mxu0
  %v2326 = vadd.f32 0.0, %v2325
  %2327 = vmatmul.f32.gmra.mxu0 %v2300
  %v2328 = vpop.f32.mrf.mxu0
  %v2329 = vadd.f32 0.0, %v2328
  %2330 = vmatmul.f32.gmra.mxu0 %v2303
  %v2331 = vpop.f32.mrf.mxu0
  %v2332 = vadd.f32 0.0, %v2331
  %2333 = vdwg.mxu0
  %v2334 = vld [vmem:[%s14] sm:$0xff]
  %v2335 = vld [vmem:[%s14 + $0x8] sm:$0xff]
  %v2336 = vld [vmem:[%s14 + $0x10] sm:$0xff]
  %v2337 = vld [vmem:[%s14 + $0x18] sm:$0x7]
  %v2339 = vsel %vm1299, %v2337, 0
  %2341 = vmatpush.msra.mxu0 0.0
  %2342 = vmatpush.msra.mxu0 0.0
  %2343 = vmatpush.msra.mxu0 0.0
  %2344 = vmatpush.msra.mxu0 0.0
  %2345 = vmatpush.msra.mxu0 0.0
  %2346 = vmatpush.msra.mxu0 0.0
  %2347 = vmatpush.msra.mxu0 0.0
  %2348 = vmatpush.msra.mxu0 0.0
  %2349 = vmatpush.msra.mxu0 0.0
  %2350 = vmatpush.msra.mxu0 0.0
  %2351 = vmatpush.msra.mxu0 0.0
  %2352 = vmatpush.msra.mxu0 0.0
  %2353 = vmatpush.msra.mxu0 %v2339
  %2354 = vmatpush.msra.mxu0 %v2336
  %2355 = vmatpush.msra.mxu0 %v2335
  %2356 = vmatpush.msra.mxu0 %v2334
  %2357 = vmatmul.f32.gmra.mxu0 %v2297
  %v2358 = vpop.f32.mrf.mxu0
  %v2359 = vadd.f32 0.0, %v2358
  %2360 = vmatmul.f32.gmra.mxu0 %v2300
  %v2361 = vpop.f32.mrf.mxu0
  %v2362 = vadd.f32 0.0, %v2361
  %2363 = vmatmul.f32.gmra.mxu0 %v2303
  %v2364 = vpop.f32.mrf.mxu0
  %v2365 = vadd.f32 0.0, %v2364
  %2366 = vdwg.mxu0
  %v2367 = vmax.f32 %v2326, %v2359
  %v2368 = vmax.f32 %v2329, %v2362
  %v2369 = vmax.f32 %v2332, %v2365
  %v2370 = vmax.f32 %v2367, 0.0
  %v2371 = vmax.f32 %v2368, 0.0
  %v2372 = vmax.f32 %v2369, 0.0
  %v2373 = vld [vmem:[%s9] sm:$0xff]
  %v2374 = vld [vmem:[%s9 + $0x8] sm:$0xff]
  %v2375 = vld [vmem:[%s9 + $0x10] sm:$0xff]
  %v2376 = vld [vmem:[%s1371] sm:$0xff]
  %v2377 = vld [vmem:[%s1371 + $0x8] sm:$0xff]
  %v2378 = vld [vmem:[%s1371 + $0x10] sm:$0xff]
  %2382 = vrot.lane.b32.xlu0 %v2370, 127
  %v2383 = vpop.permute.xlu0 %2382
  %2384 = vrot.lane.b32.xlu0 %v2371, 127
  %v2385 = vpop.permute.xlu0 %2384
  %2386 = vrot.lane.b32.xlu0 %v2372, 127
  %v2387 = vpop.permute.xlu0 %2386
  %v2392 = vsel %vm1387, %v2376, 0
  %v2395 = vsel %vm1387, %v2377, 0
  %v2398 = vsel %vm1387, %v2378, 0
  %2400 = vmatpush.msra.mxu0 0.0
  %2401 = vmatpush.msra.mxu0 0.0
  %2402 = vmatpush.msra.mxu0 0.0
  %2403 = vmatpush.msra.mxu0 0.0
  %2404 = vmatpush.msra.mxu0 0.0
  %2405 = vmatpush.msra.mxu0 0.0
  %2406 = vmatpush.msra.mxu0 0.0
  %2407 = vmatpush.msra.mxu0 0.0
  %2408 = vmatpush.msra.mxu0 0.0
  %2409 = vmatpush.msra.mxu0 0.0
  %2410 = vmatpush.msra.mxu0 0.0
  %2411 = vmatpush.msra.mxu0 0.0
  %2412 = vmatpush.msra.mxu0 0.0
  %2413 = vmatpush.msra.mxu0 %v2387
  %2414 = vmatpush.msra.mxu0 %v2385
  %2415 = vmatpush.msra.mxu0 %v2383
  %2416 = vmatmul.f32.gmra.mxu0 %v2392
  %v2417 = vpop.f32.mrf.mxu0
  %v2418 = vadd.f32 0.0, %v2417
  %2419 = vmatmul.f32.gmra.mxu0 %v2395
  %v2420 = vpop.f32.mrf.mxu0
  %v2421 = vadd.f32 0.0, %v2420
  %2422 = vmatmul.f32.gmra.mxu0 %v2398
  %v2423 = vpop.f32.mrf.mxu0
  %v2424 = vadd.f32 0.0, %v2423
  %2425 = vdwg.mxu0
  %v2427 = vsel %vm1387, %v2373, 0
  %v2430 = vsel %vm1387, %v2374, 0
  %v2433 = vsel %vm1387, %v2375, 0
  %2435 = vmatpush.msra.mxu0 0.0
  %2436 = vmatpush.msra.mxu0 0.0
  %2437 = vmatpush.msra.mxu0 0.0
  %2438 = vmatpush.msra.mxu0 0.0
  %2439 = vmatpush.msra.mxu0 0.0
  %2440 = vmatpush.msra.mxu0 0.0
  %2441 = vmatpush.msra.mxu0 0.0
  %2442 = vmatpush.msra.mxu0 0.0
  %2443 = vmatpush.msra.mxu0 0.0
  %2444 = vmatpush.msra.mxu0 0.0
  %2445 = vmatpush.msra.mxu0 0.0
  %2446 = vmatpush.msra.mxu0 0.0
  %2447 = vmatpush.msra.mxu0 0.0
  %2448 = vmatpush.msra.mxu0 %v2372
  %2449 = vmatpush.msra.mxu0 %v2371
  %2450 = vmatpush.msra.mxu0 %v2370
  %2451 = vmatmul.f32.gmra.mxu0 %v2427
  %v2452 = vpop.f32.mrf.mxu0
  %v2453 = vadd.f32 %v2418, %v2452
  %2454 = vmatmul.f32.gmra.mxu0 %v2430
  %v2455 = vpop.f32.mrf.mxu0
  %v2456 = vadd.f32 %v2421, %v2455
  %2457 = vmatmul.f32.gmra.mxu0 %v2433
  %v2458 = vpop.f32.mrf.mxu0
  %v2459 = vadd.f32 %v2424, %v2458
  %2460 = vdwg.mxu0
  %v2461 = vld [vmem:[%s1458] sm:$0xff]
  %v2462 = vld [vmem:[%s1458 + $0x8] sm:$0xff]
  %v2463 = vld [vmem:[%s1458 + $0x10] sm:$0xff]
  %2464 = vrot.lane.b32.xlu0 %v2370, 126
  %v2465 = vpop.permute.xlu0 %2464
  %2466 = vrot.lane.b32.xlu0 %v2371, 126
  %v2467 = vpop.permute.xlu0 %2466
  %2468 = vrot.lane.b32.xlu0 %v2372, 126
  %v2469 = vpop.permute.xlu0 %2468
  %v2474 = vsel %vm1387, %v2461, 0
  %v2477 = vsel %vm1387, %v2462, 0
  %v2480 = vsel %vm1387, %v2463, 0
  %2482 = vmatpush.msra.mxu0 0.0
  %2483 = vmatpush.msra.mxu0 0.0
  %2484 = vmatpush.msra.mxu0 0.0
  %2485 = vmatpush.msra.mxu0 0.0
  %2486 = vmatpush.msra.mxu0 0.0
  %2487 = vmatpush.msra.mxu0 0.0
  %2488 = vmatpush.msra.mxu0 0.0
  %2489 = vmatpush.msra.mxu0 0.0
  %2490 = vmatpush.msra.mxu0 0.0
  %2491 = vmatpush.msra.mxu0 0.0
  %2492 = vmatpush.msra.mxu0 0.0
  %2493 = vmatpush.msra.mxu0 0.0
  %2494 = vmatpush.msra.mxu0 0.0
  %2495 = vmatpush.msra.mxu0 %v2469
  %2496 = vmatpush.msra.mxu0 %v2467
  %2497 = vmatpush.msra.mxu0 %v2465
  %2498 = vmatmul.f32.gmra.mxu0 %v2474
  %v2499 = vpop.f32.mrf.mxu0
  %v2500 = vadd.f32 0.0, %v2499
  %2501 = vmatmul.f32.gmra.mxu0 %v2477
  %v2502 = vpop.f32.mrf.mxu0
  %v2503 = vadd.f32 0.0, %v2502
  %2504 = vmatmul.f32.gmra.mxu0 %v2480
  %v2505 = vpop.f32.mrf.mxu0
  %v2506 = vadd.f32 0.0, %v2505
  %2507 = vdwg.mxu0
  %v2508 = vadd.f32 %v2453, %v2500
  %v2509 = vadd.f32 %v2456, %v2503
  %v2510 = vadd.f32 %v2459, %v2506
  %v2511 = vld [vmem:[%s10] sm:$0xff]
  %v2512 = vld [vmem:[%s10 + $0x8] sm:$0xff]
  %v2513 = vld [vmem:[%s10 + $0x10] sm:$0xff]
  %2515 = vset.pattern.permute.xlu0 0
  %2516 = vperm.xlu0 %2515, %v2511
  %v2517 = vpop.permute.xlu0 %2516
  %2520 = vset.pattern.permute.xlu0 0
  %2521 = vperm.xlu0 %2520, %v2512
  %v2522 = vpop.permute.xlu0 %2521
  %2525 = vset.pattern.permute.xlu0 0
  %2526 = vperm.xlu0 %2525, %v2513
  %v2527 = vpop.permute.xlu0 %2526
  %v2529 = vadd.f32 %v2508, %v2517
  %v2530 = vadd.f32 %v2509, %v2522
  %v2531 = vadd.f32 %v2510, %v2527
  %v2532 = vsel %vm1530, %v2529, 0.0
  %2533 = vadd.xlane.f32.xlu0 %v2532
  %v2534 = vpop.xlane.xlu0 %2533
  %v2535 = vsel %vm1530, %v2530, 0.0
  %2536 = vadd.xlane.f32.xlu0 %v2535
  %v2537 = vpop.xlane.xlu0 %2536
  %v2538 = vsel %vm1530, %v2531, 0.0
  %2539 = vadd.xlane.f32.xlu0 %v2538
  %v2540 = vpop.xlane.xlu0 %2539
  %v2541 = vmul.f32 %v2534, %v1546
  %v2542 = vmul.f32 %v2537, %v1546
  %v2543 = vmul.f32 %v2540, %v1546
  %v2544 = vsub.f32 %v2529, %v2541
  %v2545 = vsub.f32 %v2530, %v2542
  %v2546 = vsub.f32 %v2531, %v2543
  %v2547 = vmul.f32 %v2544, %v2544
  %v2548 = vmul.f32 %v2545, %v2545
  %v2549 = vmul.f32 %v2546, %v2546
  %v2550 = vsel %vm1530, %v2547, 0.0
  %2551 = vadd.xlane.f32.xlu0 %v2550
  %v2552 = vpop.xlane.xlu0 %2551
  %v2553 = vsel %vm1530, %v2548, 0.0
  %2554 = vadd.xlane.f32.xlu0 %v2553
  %v2555 = vpop.xlane.xlu0 %2554
  %v2556 = vsel %vm1530, %v2549, 0.0
  %2557 = vadd.xlane.f32.xlu0 %v2556
  %v2558 = vpop.xlane.xlu0 %2557
  %v2559 = vmul.f32 %v2552, %v1546
  %v2560 = vmul.f32 %v2555, %v1546
  %v2561 = vmul.f32 %v2558, %v1546
  %v2562 = vadd.f32 %v2559, 1e-05
  %v2563 = vadd.f32 %v2560, 1e-05
  %v2564 = vadd.f32 %v2561, 1e-05
  %v2565 = vrsqrt.pop %v2562
  %v2566 = vmul.f32 %v2565, %v2562
  %v2567 = vmul.f32 %v2566, %v2565
  %v2568 = vmul.f32 0.5, %v2567
  %v2569 = vsub.f32 1.5, %v2568
  %v2570 = vmul.f32 %v2565, %v2569
  %vm2571 = vweird.f32 %v2562
  %vm2572 = vweird.f32 %v2565
  %vm2573 = vmor %vm2571, %vm2572
  %v2574 = vsel %vm2573, %v2565, %v2570
  %v2575 = vrsqrt.pop %v2563
  %v2576 = vmul.f32 %v2575, %v2563
  %v2577 = vmul.f32 %v2576, %v2575
  %v2578 = vmul.f32 0.5, %v2577
  %v2579 = vsub.f32 1.5, %v2578
  %v2580 = vmul.f32 %v2575, %v2579
  %vm2581 = vweird.f32 %v2563
  %vm2582 = vweird.f32 %v2575
  %vm2583 = vmor %vm2581, %vm2582
  %v2584 = vsel %vm2583, %v2575, %v2580
  %v2585 = vrsqrt.pop %v2564
  %v2586 = vmul.f32 %v2585, %v2564
  %v2587 = vmul.f32 %v2586, %v2585
  %v2588 = vmul.f32 0.5, %v2587
  %v2589 = vsub.f32 1.5, %v2588
  %v2590 = vmul.f32 %v2585, %v2589
  %vm2591 = vweird.f32 %v2564
  %vm2592 = vweird.f32 %v2585
  %vm2593 = vmor %vm2591, %vm2592
  %v2594 = vsel %vm2593, %v2585, %v2590
  %v2595 = vmul.f32 %v2544, %v2574
  %v2596 = vmul.f32 %v2545, %v2584
  %v2597 = vmul.f32 %v2546, %v2594
  %v2598 = vmax.f32 %v2595, 0.0
  %v2599 = vmax.f32 %v2596, 0.0
  %v2600 = vmax.f32 %v2597, 0.0
  %2601 = vst.msk [vmem:[#allocation2 + $0x18] sm:$0xff] %vm1530, %v2598
  %2602 = vst.msk [vmem:[#allocation2 + $0x20] sm:$0xff] %vm1530, %v2599
  %2603 = vst.msk [vmem:[#allocation2 + $0x28] sm:$0xff] %vm1530, %v2600
  %v2604 = vld [vmem:[#allocation2] sm:$0xff]
  %v2605 = vld [vmem:[#allocation2 + $0x8] sm:$0xff]
  %v2606 = vld [vmem:[#allocation2 + $0x10] sm:$0xff]
  %v2607 = vld [vmem:[#allocation2 + $0x18] sm:$0xff]
  %v2608 = vld [vmem:[#allocation2 + $0x20] sm:$0xff]
  %v2609 = vld [vmem:[#allocation2 + $0x28] sm:$0xff]
  %v2610 = vld [vmem:[%s17] sm:$0x7]
  %v2612 = vperm.slane %v2610, 0
  %v2613 = vperm.slane %v2610, 1
  %v2614 = vperm.slane %v2610, 2
  %v2619 = vsel %vm1530, %v2604, 0
  %v2622 = vsel %vm1530, %v2605, 0
  %v2625 = vsel %vm1530, %v2606, 0
  %v2628 = vsel %vm1530, %v2607, 0
  %v2631 = vsel %vm1530, %v2608, 0
  %v2634 = vsel %vm1530, %v2609, 0
  %v2637 = vsel %vm1299, %v375, 0
  %v2640 = vsel %vm1299, %v467, 0
  %v2643 = vsel %vm1299, %v559, 0
  %2645 = vmatpush.msra.mxu0 0.0
  %2646 = vmatpush.msra.mxu0 0.0
  %2647 = vmatpush.msra.mxu0 0.0
  %2648 = vmatpush.msra.mxu0 0.0
  %2649 = vmatpush.msra.mxu0 0.0
  %2650 = vmatpush.msra.mxu0 0.0
  %2651 = vmatpush.msra.mxu0 0.0
  %2652 = vmatpush.msra.mxu0 0.0
  %2653 = vmatpush.msra.mxu0 0.0
  %2654 = vmatpush.msra.mxu0 0.0
  %2655 = vmatpush.msra.mxu0 0.0
  %2656 = vmatpush.msra.mxu0 0.0
  %2657 = vmatpush.msra.mxu0 0.0
  %2658 = vmatpush.msra.mxu0 0.0
  %2659 = vmatpush.msra.mxu0 %v2637
  %2660 = vmatpush.msra.mxu0 %v372
  %2661 = vmatmul.f32.gmra.mxu0 %v2619
  %v2662 = vpop.f32.mrf.mxu0
  %v2663 = vadd.f32 %v2612, %v2662
  %2664 = vmatmul.f32.gmra.mxu0 %v2622
  %v2665 = vpop.f32.mrf.mxu0
  %v2666 = vadd.f32 %v2612, %v2665
  %2667 = vmatmul.f32.gmra.mxu0 %v2625
  %v2668 = vpop.f32.mrf.mxu0
  %v2669 = vadd.f32 %v2612, %v2668
  %2670 = vmatmul.f32.gmra.mxu0 %v2628
  %v2671 = vpop.f32.mrf.mxu0
  %v2672 = vadd.f32 %v2612, %v2671
  %2673 = vmatmul.f32.gmra.mxu0 %v2631
  %v2674 = vpop.f32.mrf.mxu0
  %v2675 = vadd.f32 %v2612, %v2674
  %2676 = vmatmul.f32.gmra.mxu0 %v2634
  %v2677 = vpop.f32.mrf.mxu0
  %v2678 = vadd.f32 %v2612, %v2677
  %2679 = vdwg.mxu0
  %2680 = vmatpush.msra.mxu0 0.0
  %2681 = vmatpush.msra.mxu0 0.0
  %2682 = vmatpush.msra.mxu0 0.0
  %2683 = vmatpush.msra.mxu0 0.0
  %2684 = vmatpush.msra.mxu0 0.0
  %2685 = vmatpush.msra.mxu0 0.0
  %2686 = vmatpush.msra.mxu0 0.0
  %2687 = vmatpush.msra.mxu0 0.0
  %2688 = vmatpush.msra.mxu0 0.0
  %2689 = vmatpush.msra.mxu0 0.0
  %2690 = vmatpush.msra.mxu0 0.0
  %2691 = vmatpush.msra.mxu0 0.0
  %2692 = vmatpush.msra.mxu0 0.0
  %2693 = vmatpush.msra.mxu0 0.0
  %2694 = vmatpush.msra.mxu0 %v2640
  %2695 = vmatpush.msra.mxu0 %v464
  %2696 = vmatmul.f32.gmra.mxu0 %v2619
  %v2697 = vpop.f32.mrf.mxu0
  %v2698 = vadd.f32 %v2613, %v2697
  %2699 = vmatmul.f32.gmra.mxu0 %v2622
  %v2700 = vpop.f32.mrf.mxu0
  %v2701 = vadd.f32 %v2613, %v2700
  %2702 = vmatmul.f32.gmra.mxu0 %v2625
  %v2703 = vpop.f32.mrf.mxu0
  %v2704 = vadd.f32 %v2613, %v2703
  %2705 = vmatmul.f32.gmra.mxu0 %v2628
  %v2706 = vpop.f32.mrf.mxu0
  %v2707 = vadd.f32 %v2613, %v2706
  %2708 = vmatmul.f32.gmra.mxu0 %v2631
  %v2709 = vpop.f32.mrf.mxu0
  %v2710 = vadd.f32 %v2613, %v2709
  %2711 = vmatmul.f32.gmra.mxu0 %v2634
  %v2712 = vpop.f32.mrf.mxu0
  %v2713 = vadd.f32 %v2613, %v2712
  %2714 = vdwg.mxu0
  %2715 = vmatpush.msra.mxu0 0.0
  %2716 = vmatpush.msra.mxu0 0.0
  %2717 = vmatpush.msra.mxu0 0.0
  %2718 = vmatpush.msra.mxu0 0.0
  %2719 = vmatpush.msra.mxu0 0.0
  %2720 = vmatpush.msra.mxu0 0.0
  %2721 = vmatpush.msra.mxu0 0.0
  %2722 = vmatpush.msra.mxu0 0.0
  %2723 = vmatpush.msra.mxu0 0.0
  %2724 = vmatpush.msra.mxu0 0.0
  %2725 = vmatpush.msra.mxu0 0.0
  %2726 = vmatpush.msra.mxu0 0.0
  %2727 = vmatpush.msra.mxu0 0.0
  %2728 = vmatpush.msra.mxu0 0.0
  %2729 = vmatpush.msra.mxu0 %v2643
  %2730 = vmatpush.msra.mxu0 %v556
  %2731 = vmatmul.f32.gmra.mxu0 %v2619
  %v2732 = vpop.f32.mrf.mxu0
  %v2733 = vadd.f32 %v2614, %v2732
  %2734 = vmatmul.f32.gmra.mxu0 %v2622
  %v2735 = vpop.f32.mrf.mxu0
  %v2736 = vadd.f32 %v2614, %v2735
  %2737 = vmatmul.f32.gmra.mxu0 %v2625
  %v2738 = vpop.f32.mrf.mxu0
  %v2739 = vadd.f32 %v2614, %v2738
  %2740 = vmatmul.f32.gmra.mxu0 %v2628
  %v2741 = vpop.f32.mrf.mxu0
  %v2742 = vadd.f32 %v2614, %v2741
  %2743 = vmatmul.f32.gmra.mxu0 %v2631
  %v2744 = vpop.f32.mrf.mxu0
  %v2745 = vadd.f32 %v2614, %v2744
  %2746 = vmatmul.f32.gmra.mxu0 %v2634
  %v2747 = vpop.f32.mrf.mxu0
  %v2748 = vadd.f32 %v2614, %v2747
  %2749 = vdwg.mxu0
  %v2750 = vadd.f32 %v2663, %v2698
  %vm2751 = vcmask 359424
  %v2752 = vsel %vm2751, %v2733, 0.0
  %v2753 = vadd.f32 %v2750, %v2752
  %2754 = vadd.xlane.f32.xlu0 %v2753
  %v2755 = vpop.xlane.xlu0 %2754
  %v2756 = vadd.f32 %v2666, %v2701
  %v2757 = vsel %vm2751, %v2736, 0.0
  %v2758 = vadd.f32 %v2756, %v2757
  %2759 = vadd.xlane.f32.xlu0 %v2758
  %v2760 = vpop.xlane.xlu0 %2759
  %v2761 = vadd.f32 %v2669, %v2704
  %v2762 = vsel %vm2751, %v2739, 0.0
  %v2763 = vadd.f32 %v2761, %v2762
  %2764 = vadd.xlane.f32.xlu0 %v2763
  %v2765 = vpop.xlane.xlu0 %2764
  %v2766 = vadd.f32 %v2672, %v2707
  %v2767 = vsel %vm2751, %v2742, 0.0
  %v2768 = vadd.f32 %v2766, %v2767
  %2769 = vadd.xlane.f32.xlu0 %v2768
  %v2770 = vpop.xlane.xlu0 %2769
  %v2771 = vadd.f32 %v2675, %v2710
  %v2772 = vsel %vm2751, %v2745, 0.0
  %v2773 = vadd.f32 %v2771, %v2772
  %2774 = vadd.xlane.f32.xlu0 %v2773
  %v2775 = vpop.xlane.xlu0 %2774
  %v2776 = vadd.f32 %v2678, %v2713
  %v2777 = vsel %vm2751, %v2748, 0.0
  %v2778 = vadd.f32 %v2776, %v2777
  %2779 = vadd.xlane.f32.xlu0 %v2778
  %v2780 = vpop.xlane.xlu0 %2779
  %v2781 = vrcp.pop 300.0
  %v2782 = vmul.f32 300.0, %v2781
  %v2783 = vsub.f32 1.0, %v2782
  %v2784 = vmul.f32 %v2781, %v2783
  %v2785 = vadd.f32 %v2781, %v2784
  %vm2786 = vweird.f32 %v2781
  %v2787 = vsel %vm2786, %v2781, %v2785
  %v2788 = vmul.f32 %v2755, %v2787
  %v2789 = vmul.f32 %v2760, %v2787
  %v2790 = vmul.f32 %v2765, %v2787
  %v2791 = vmul.f32 %v2770, %v2787
  %v2792 = vmul.f32 %v2775, %v2787
  %v2793 = vmul.f32 %v2780, %v2787
  %v2794 = vsub.f32 %v2663, %v2788
  %v2795 = vsub.f32 %v2698, %v2788
  %v2796 = vsub.f32 %v2733, %v2788
  %v2797 = vsub.f32 %v2666, %v2789
  %v2798 = vsub.f32 %v2701, %v2789
  %v2799 = vsub.f32 %v2736, %v2789
  %v2800 = vsub.f32 %v2669, %v2790
  %v2801 = vsub.f32 %v2704, %v2790
  %v2802 = vsub.f32 %v2739, %v2790
  %v2803 = vsub.f32 %v2672, %v2791
  %v2804 = vsub.f32 %v2707, %v2791
  %v2805 = vsub.f32 %v2742, %v2791
  %v2806 = vsub.f32 %v2675, %v2792
  %v2807 = vsub.f32 %v2710, %v2792
  %v2808 = vsub.f32 %v2745, %v2792
  %v2809 = vsub.f32 %v2678, %v2793
  %v2810 = vsub.f32 %v2713, %v2793
  %v2811 = vsub.f32 %v2748, %v2793
  %v2812 = vmul.f32 %v2794, %v2794
  %v2813 = vmul.f32 %v2795, %v2795
  %v2814 = vmul.f32 %v2796, %v2796
  %v2815 = vmul.f32 %v2797, %v2797
  %v2816 = vmul.f32 %v2798, %v2798
  %v2817 = vmul.f32 %v2799, %v2799
  %v2818 = vmul.f32 %v2800, %v2800
  %v2819 = vmul.f32 %v2801, %v2801
  %v2820 = vmul.f32 %v2802, %v2802
  %v2821 = vmul.f32 %v2803, %v2803
  %v2822 = vmul.f32 %v2804, %v2804
  %v2823 = vmul.f32 %v2805, %v2805
  %v2824 = vmul.f32 %v2806, %v2806
  %v2825 = vmul.f32 %v2807, %v2807
  %v2826 = vmul.f32 %v2808, %v2808
  %v2827 = vmul.f32 %v2809, %v2809
  %v2828 = vmul.f32 %v2810, %v2810
  %v2829 = vmul.f32 %v2811, %v2811
  %v2830 = vadd.f32 %v2812, %v2813
  %v2831 = vsel %vm2751, %v2814, 0.0
  %v2832 = vadd.f32 %v2830, %v2831
  %2833 = vadd.xlane.f32.xlu0 %v2832
  %v2834 = vpop.xlane.xlu0 %2833
  %v2835 = vadd.f32 %v2815, %v2816
  %v2836 = vsel %vm2751, %v2817, 0.0
  %v2837 = vadd.f32 %v2835, %v2836
  %2838 = vadd.xlane.f32.xlu0 %v2837
  %v2839 = vpop.xlane.xlu0 %2838
  %v2840 = vadd.f32 %v2818, %v2819
  %v2841 = vsel %vm2751, %v2820, 0.0
  %v2842 = vadd.f32 %v2840, %v2841
  %2843 = vadd.xlane.f32.xlu0 %v2842
  %v2844 = vpop.xlane.xlu0 %2843
  %v2845 = vadd.f32 %v2821, %v2822
  %v2846 = vsel %vm2751, %v2823, 0.0
  %v2847 = vadd.f32 %v2845, %v2846
  %2848 = vadd.xlane.f32.xlu0 %v2847
  %v2849 = vpop.xlane.xlu0 %2848
  %v2850 = vadd.f32 %v2824, %v2825
  %v2851 = vsel %vm2751, %v2826, 0.0
  %v2852 = vadd.f32 %v2850, %v2851
  %2853 = vadd.xlane.f32.xlu0 %v2852
  %v2854 = vpop.xlane.xlu0 %2853
  %v2855 = vadd.f32 %v2827, %v2828
  %v2856 = vsel %vm2751, %v2829, 0.0
  %v2857 = vadd.f32 %v2855, %v2856
  %2858 = vadd.xlane.f32.xlu0 %v2857
  %v2859 = vpop.xlane.xlu0 %2858
  %v2860 = vmul.f32 %v2834, %v2787
  %v2861 = vmul.f32 %v2839, %v2787
  %v2862 = vmul.f32 %v2844, %v2787
  %v2863 = vmul.f32 %v2849, %v2787
  %v2864 = vmul.f32 %v2854, %v2787
  %v2865 = vmul.f32 %v2859, %v2787
  %v2866 = vadd.f32 %v2860, 1e-05
  %v2867 = vadd.f32 %v2861, 1e-05
  %v2868 = vadd.f32 %v2862, 1e-05
  %v2869 = vadd.f32 %v2863, 1e-05
  %v2870 = vadd.f32 %v2864, 1e-05
  %v2871 = vadd.f32 %v2865, 1e-05
  %v2872 = vrsqrt.pop %v2866
  %v2873 = vmul.f32 %v2872, %v2866
  %v2874 = vmul.f32 %v2873, %v2872
  %v2875 = vmul.f32 0.5, %v2874
  %v2876 = vsub.f32 1.5, %v2875
  %v2877 = vmul.f32 %v2872, %v2876
  %vm2878 = vweird.f32 %v2866
  %vm2879 = vweird.f32 %v2872
  %vm2880 = vmor %vm2878, %vm2879
  %v2881 = vsel %vm2880, %v2872, %v2877
  %v2882 = vrsqrt.pop %v2867
  %v2883 = vmul.f32 %v2882, %v2867
  %v2884 = vmul.f32 %v2883, %v2882
  %v2885 = vmul.f32 0.5, %v2884
  %v2886 = vsub.f32 1.5, %v2885
  %v2887 = vmul.f32 %v2882, %v2886
  %vm2888 = vweird.f32 %v2867
  %vm2889 = vweird.f32 %v2882
  %vm2890 = vmor %vm2888, %vm2889
  %v2891 = vsel %vm2890, %v2882, %v2887
  %v2892 = vrsqrt.pop %v2868
  %v2893 = vmul.f32 %v2892, %v2868
  %v2894 = vmul.f32 %v2893, %v2892
  %v2895 = vmul.f32 0.5, %v2894
  %v2896 = vsub.f32 1.5, %v2895
  %v2897 = vmul.f32 %v2892, %v2896
  %vm2898 = vweird.f32 %v2868
  %vm2899 = vweird.f32 %v2892
  %vm2900 = vmor %vm2898, %vm2899
  %v2901 = vsel %vm2900, %v2892, %v2897
  %v2902 = vrsqrt.pop %v2869
  %v2903 = vmul.f32 %v2902, %v2869
  %v2904 = vmul.f32 %v2903, %v2902
  %v2905 = vmul.f32 0.5, %v2904
  %v2906 = vsub.f32 1.5, %v2905
  %v2907 = vmul.f32 %v2902, %v2906
  %vm2908 = vweird.f32 %v2869
  %vm2909 = vweird.f32 %v2902
  %vm2910 = vmor %vm2908, %vm2909
  %v2911 = vsel %vm2910, %v2902, %v2907
  %v2912 = vrsqrt.pop %v2870
  %v2913 = vmul.f32 %v2912, %v2870
  %v2914 = vmul.f32 %v2913, %v2912
  %v2915 = vmul.f32 0.5, %v2914
  %v2916 = vsub.f32 1.5, %v2915
  %v2917 = vmul.f32 %v2912, %v2916
  %vm2918 = vweird.f32 %v2870
  %vm2919 = vweird.f32 %v2912
  %vm2920 = vmor %vm2918, %vm2919
  %v2921 = vsel %vm2920, %v2912, %v2917
  %v2922 = vrsqrt.pop %v2871
  %v2923 = vmul.f32 %v2922, %v2871
  %v2924 = vmul.f32 %v2923, %v2922
  %v2925 = vmul.f32 0.5, %v2924
  %v2926 = vsub.f32 1.5, %v2925
  %v2927 = vmul.f32 %v2922, %v2926
  %vm2928 = vweird.f32 %v2871
  %vm2929 = vweird.f32 %v2922
  %vm2930 = vmor %vm2928, %vm2929
  %v2931 = vsel %vm2930, %v2922, %v2927
  %v2932 = vmul.f32 %v2794, %v2881
  %v2933 = vmul.f32 %v2795, %v2881
  %v2934 = vmul.f32 %v2796, %v2881
  %v2935 = vmul.f32 %v2797, %v2891
  %v2936 = vmul.f32 %v2798, %v2891
  %v2937 = vmul.f32 %v2799, %v2891
  %v2938 = vmul.f32 %v2800, %v2901
  %v2939 = vmul.f32 %v2801, %v2901
  %v2940 = vmul.f32 %v2802, %v2901
  %v2941 = vmul.f32 %v2803, %v2911
  %v2942 = vmul.f32 %v2804, %v2911
  %v2943 = vmul.f32 %v2805, %v2911
  %v2944 = vmul.f32 %v2806, %v2921
  %v2945 = vmul.f32 %v2807, %v2921
  %v2946 = vmul.f32 %v2808, %v2921
  %v2947 = vmul.f32 %v2809, %v2931
  %v2948 = vmul.f32 %v2810, %v2931
  %v2949 = vmul.f32 %v2811, %v2931
  %v2950 = vld [vmem:[%s18] sm:$0x7]
  %v2952 = vperm.slane %v2950, 0
  %v2953 = vperm.slane %v2950, 1
  %v2954 = vperm.slane %v2950, 2
  %v2958 = vmul.f32 %v2932, %v2952
  %v2959 = vmul.f32 %v2933, %v2953
  %v2960 = vmul.f32 %v2934, %v2954
  %v2961 = vmul.f32 %v2935, %v2952
  %v2962 = vmul.f32 %v2936, %v2953
  %v2963 = vmul.f32 %v2937, %v2954
  %v2964 = vmul.f32 %v2938, %v2952
  %v2965 = vmul.f32 %v2939, %v2953
  %v2966 = vmul.f32 %v2940, %v2954
  %v2967 = vmul.f32 %v2941, %v2952
  %v2968 = vmul.f32 %v2942, %v2953
  %v2969 = vmul.f32 %v2943, %v2954
  %v2970 = vmul.f32 %v2944, %v2952
  %v2971 = vmul.f32 %v2945, %v2953
  %v2972 = vmul.f32 %v2946, %v2954
  %v2973 = vmul.f32 %v2947, %v2952
  %v2974 = vmul.f32 %v2948, %v2953
  %v2975 = vmul.f32 %v2949, %v2954
  %v2976 = vld [vmem:[%s19] sm:$0x7]
  %v2978 = vperm.slane %v2976, 0
  %v2979 = vperm.slane %v2976, 1
  %v2980 = vperm.slane %v2976, 2
  %v2984 = vadd.f32 %v2958, %v2978
  %v2985 = vadd.f32 %v2959, %v2979
  %v2986 = vadd.f32 %v2960, %v2980
  %v2987 = vadd.f32 %v2961, %v2978
  %v2988 = vadd.f32 %v2962, %v2979
  %v2989 = vadd.f32 %v2963, %v2980
  %v2990 = vadd.f32 %v2964, %v2978
  %v2991 = vadd.f32 %v2965, %v2979
  %v2992 = vadd.f32 %v2966, %v2980
  %v2993 = vadd.f32 %v2967, %v2978
  %v2994 = vadd.f32 %v2968, %v2979
  %v2995 = vadd.f32 %v2969, %v2980
  %v2996 = vadd.f32 %v2970, %v2978
  %v2997 = vadd.f32 %v2971, %v2979
  %v2998 = vadd.f32 %v2972, %v2980
  %v2999 = vadd.f32 %v2973, %v2978
  %v3000 = vadd.f32 %v2974, %v2979
  %v3001 = vadd.f32 %v2975, %v2980
  %v3002 = vmax.f32 %v2984, 0.0
  %v3003 = vmax.f32 %v2985, 0.0
  %v3004 = vmax.f32 %v2986, 0.0
  %v3005 = vmax.f32 %v2987, 0.0
  %v3006 = vmax.f32 %v2988, 0.0
  %v3007 = vmax.f32 %v2989, 0.0
  %v3008 = vmax.f32 %v2990, 0.0
  %v3009 = vmax.f32 %v2991, 0.0
  %v3010 = vmax.f32 %v2992, 0.0
  %v3011 = vmax.f32 %v2993, 0.0
  %v3012 = vmax.f32 %v2994, 0.0
  %v3013 = vmax.f32 %v2995, 0.0
  %v3014 = vmax.f32 %v2996, 0.0
  %v3015 = vmax.f32 %v2997, 0.0
  %v3016 = vmax.f32 %v2998, 0.0
  %v3017 = vmax.f32 %v2999, 0.0
  %v3018 = vmax.f32 %v3000, 0.0
  %v3019 = vmax.f32 %v3001, 0.0
  %v3020 = vld [vmem:[%s20] sm:$0xff]
  %v3021 = vld [vmem:[%s20 + $0x8] sm:$0xff]
  %v3022 = vld [vmem:[%s20 + $0x10] sm:$0xff]
  %v3023 = vld [vmem:[%s20 + $0x18] sm:$0xff]
  %v3024 = vld [vmem:[%s20 + $0x20] sm:$0xff]
  %v3025 = vld [vmem:[%s20 + $0x28] sm:$0xff]
  %v3026 = vld [vmem:[%s20 + $0x30] sm:$0xff]
  %v3027 = vld [vmem:[%s20 + $0x38] sm:$0xff]
  %v3028 = vld [vmem:[%s20 + $0x40] sm:$0xff]
  %v3029 = vld [vmem:[%s20 + $0x48] sm:$0xff]
  %v3030 = vld [vmem:[%s20 + $0x50] sm:$0xff]
  %v3031 = vld [vmem:[%s20 + $0x58] sm:$0xff]
  %v3032 = vld [vmem:[%s20 + $0x60] sm:$0xff]
  %v3033 = vld [vmem:[%s20 + $0x68] sm:$0xff]
  %v3034 = vld [vmem:[%s20 + $0x70] sm:$0xff]
  %v3035 = vld [vmem:[%s20 + $0x78] sm:$0xff]
  %v3036 = vld [vmem:[%s20 + $0x80] sm:$0xff]
  %v3037 = vld [vmem:[%s20 + $0x88] sm:$0xff]
  %v3038 = vld [vmem:[%s20 + $0x90] sm:$0xff]
  %v3039 = vld [vmem:[%s20 + $0x98] sm:$0xff]
  %v3040 = vld [vmem:[%s20 + $0xa0] sm:$0xff]
  %v3041 = vld [vmem:[%s20 + $0xa8] sm:$0xff]
  %v3042 = vld [vmem:[%s20 + $0xb0] sm:$0xff]
  %v3043 = vld [vmem:[%s20 + $0xb8] sm:$0xff]
  %v3044 = vld [vmem:[%s20 + $0xc0] sm:$0xff]
  %v3045 = vld [vmem:[%s20 + $0xc8] sm:$0xff]
  %v3046 = vld [vmem:[%s20 + $0xd0] sm:$0xff]
  %v3047 = vld [vmem:[%s20 + $0xd8] sm:$0xff]
  %v3048 = vld [vmem:[%s20 + $0xe0] sm:$0xff]
  %v3049 = vld [vmem:[%s20 + $0xe8] sm:$0xff]
  %v3050 = vld [vmem:[%s20 + $0xf0] sm:$0xff]
  %v3051 = vld [vmem:[%s20 + $0xf8] sm:$0xff]
  %v3052 = vld [vmem:[%s20 + $0x100] sm:$0xff]
  %v3053 = vld [vmem:[%s20 + $0x108] sm:$0xff]
  %v3054 = vld [vmem:[%s20 + $0x110] sm:$0xff]
  %v3055 = vld [vmem:[%s20 + $0x118] sm:$0xff]
  %v3056 = vld [vmem:[%s20 + $0x120] sm:$0xff]
  %v3057 = vld [vmem:[%s20 + $0x128] sm:$0xf]
  %v3058 = vld [vmem:[%s21] sm:$0x1]
  %v3060 = vperm.slane %v3058, 0
  %v3063 = vsel %vm2751, %v3004, 0
  %v3066 = vsel %vm2751, %v3007, 0
  %v3069 = vsel %vm2751, %v3010, 0
  %v3072 = vsel %vm2751, %v3013, 0
  %v3075 = vsel %vm2751, %v3016, 0
  %v3078 = vsel %vm2751, %v3019, 0
  %v3081 = vsel %vm275, %v3057, 0
  %3083 = vmatpush.msra.mxu0 %v3035
  %3084 = vmatpush.msra.mxu0 %v3034
  %3085 = vmatpush.msra.mxu0 %v3033
  %3086 = vmatpush.msra.mxu0 %v3032
  %3087 = vmatpush.msra.mxu0 %v3031
  %3088 = vmatpush.msra.mxu0 %v3030
  %3089 = vmatpush.msra.mxu0 %v3029
  %3090 = vmatpush.msra.mxu0 %v3028
  %3091 = vmatpush.msra.mxu0 %v3027
  %3092 = vmatpush.msra.mxu0 %v3026
  %3093 = vmatpush.msra.mxu0 %v3025
  %3094 = vmatpush.msra.mxu0 %v3024
  %3095 = vmatpush.msra.mxu0 %v3023
  %3096 = vmatpush.msra.mxu0 %v3022
  %3097 = vmatpush.msra.mxu0 %v3021
  %3098 = vmatpush.msra.mxu0 %v3020
  %3099 = vmatmul.f32.gmra.mxu0 %v3002
  %v3100 = vpop.f32.mrf.mxu0
  %v3101 = vadd.f32 %v3060, %v3100
  %3102 = vmatmul.f32.gmra.mxu0 %v3005
  %v3103 = vpop.f32.mrf.mxu0
  %v3104 = vadd.f32 %v3060, %v3103
  %3105 = vmatmul.f32.gmra.mxu0 %v3008
  %v3106 = vpop.f32.mrf.mxu0
  %v3107 = vadd.f32 %v3060, %v3106
  %3108 = vmatmul.f32.gmra.mxu0 %v3011
  %v3109 = vpop.f32.mrf.mxu0
  %v3110 = vadd.f32 %v3060, %v3109
  %3111 = vmatmul.f32.gmra.mxu0 %v3014
  %v3112 = vpop.f32.mrf.mxu0
  %v3113 = vadd.f32 %v3060, %v3112
  %3114 = vmatmul.f32.gmra.mxu0 %v3017
  %v3115 = vpop.f32.mrf.mxu0
  %v3116 = vadd.f32 %v3060, %v3115
  %3117 = vdwg.mxu0
  %3118 = vmatpush.msra.mxu0 %v3051
  %3119 = vmatpush.msra.mxu0 %v3050
  %3120 = vmatpush.msra.mxu0 %v3049
  %3121 = vmatpush.msra.mxu0 %v3048
  %3122 = vmatpush.msra.mxu0 %v3047
  %3123 = vmatpush.msra.mxu0 %v3046
  %3124 = vmatpush.msra.mxu0 %v3045
  %3125 = vmatpush.msra.mxu0 %v3044
  %3126 = vmatpush.msra.mxu0 %v3043
  %3127 = vmatpush.msra.mxu0 %v3042
  %3128 = vmatpush.msra.mxu0 %v3041
  %3129 = vmatpush.msra.mxu0 %v3040
  %3130 = vmatpush.msra.mxu0 %v3039
  %3131 = vmatpush.msra.mxu0 %v3038
  %3132 = vmatpush.msra.mxu0 %v3037
  %3133 = vmatpush.msra.mxu0 %v3036
  %3134 = vmatmul.f32.gmra.mxu0 %v3003
  %v3135 = vpop.f32.mrf.mxu0
  %v3136 = vadd.f32 %v3101, %v3135
  %3137 = vmatmul.f32.gmra.mxu0 %v3006
  %v3138 = vpop.f32.mrf.mxu0
  %v3139 = vadd.f32 %v3104, %v3138
  %3140 = vmatmul.f32.gmra.mxu0 %v3009
  %v3141 = vpop.f32.mrf.mxu0
  %v3142 = vadd.f32 %v3107, %v3141
  %3143 = vmatmul.f32.gmra.mxu0 %v3012
  %v3144 = vpop.f32.mrf.mxu0
  %v3145 = vadd.f32 %v3110, %v3144
  %3146 = vmatmul.f32.gmra.mxu0 %v3015
  %v3147 = vpop.f32.mrf.mxu0
  %v3148 = vadd.f32 %v3113, %v3147
  %3149 = vmatmul.f32.gmra.mxu0 %v3018
  %v3150 = vpop.f32.mrf.mxu0
  %v3151 = vadd.f32 %v3116, %v3150
  %3152 = vdwg.mxu0
  %3153 = vmatpush.msra.mxu0 0.0
  %3154 = vmatpush.msra.mxu0 0.0
  %3155 = vmatpush.msra.mxu0 0.0
  %3156 = vmatpush.msra.mxu0 0.0
  %3157 = vmatpush.msra.mxu0 0.0
  %3158 = vmatpush.msra.mxu0 0.0
  %3159 = vmatpush.msra.mxu0 0.0
  %3160 = vmatpush.msra.mxu0 0.0
  %3161 = vmatpush.msra.mxu0 0.0
  %3162 = vmatpush.msra.mxu0 0.0
  %3163 = vmatpush.msra.mxu0 %v3081
  %3164 = vmatpush.msra.mxu0 %v3056
  %3165 = vmatpush.msra.mxu0 %v3055
  %3166 = vmatpush.msra.mxu0 %v3054
  %3167 = vmatpush.msra.mxu0 %v3053
  %3168 = vmatpush.msra.mxu0 %v3052
  %3169 = vmatmul.f32.gmra.mxu0 %v3063
  %v3170 = vpop.f32.mrf.mxu0
  %v3171 = vadd.f32 %v3136, %v3170
  %3172 = vmatmul.f32.gmra.mxu0 %v3066
  %v3173 = vpop.f32.mrf.mxu0
  %v3174 = vadd.f32 %v3139, %v3173
  %3175 = vmatmul.f32.gmra.mxu0 %v3069
  %v3176 = vpop.f32.mrf.mxu0
  %v3177 = vadd.f32 %v3142, %v3176
  %3178 = vmatmul.f32.gmra.mxu0 %v3072
  %v3179 = vpop.f32.mrf.mxu0
  %v3180 = vadd.f32 %v3145, %v3179
  %3181 = vmatmul.f32.gmra.mxu0 %v3075
  %v3182 = vpop.f32.mrf.mxu0
  %v3183 = vadd.f32 %v3148, %v3182
  %3184 = vmatmul.f32.gmra.mxu0 %v3078
  %v3185 = vpop.f32.mrf.mxu0
  %v3186 = vadd.f32 %v3151, %v3185
  %3187 = vdwg.mxu0
  %vm3188 = vcmask 80896
  %3189 = vst.msk [vmem:[%s22] sm:$0xff] %vm3188, %v3171
  %3190 = vst.msk [vmem:[%s22 + $0x8] sm:$0xff] %vm3188, %v3174
  %3191 = vst.msk [vmem:[%s22 + $0x10] sm:$0xff] %vm3188, %v3177
  %s3192 = scalar_lea.vmem %s22, 24
  %3193 = vst.msk [vmem:[%s3192] sm:$0xff] %vm3188, %v3180
  %3194 = vst.msk [vmem:[%s3192 + $0x8] sm:$0xff] %vm3188, %v3183
  %3195 = vst.msk [vmem:[%s3192 + $0x10] sm:$0xff] %vm3188, %v3186
  // Predicated region
  $region90: #{convnet_forward.1} parent=0 // pred_check
    _
  $region91: #{convnet_forward.1} parent=0 // pred_check_branch
    %3197 = sbr.rel (0) target = $region93
  $region92: #{convnet_forward.1} parent=0 // pred_region
    _
  $region93: #{convnet_forward.1} parent=0 // pred_fallthru
    _
  // Predicated region
  $region94: #{convnet_forward.1} parent=0 // pred_check
    _
  $region95: #{convnet_forward.1} parent=0 // pred_check_branch
    %3199 = sbr.rel (0) target = $region97
  $region96: #{convnet_forward.1} parent=0 // pred_region
    _
  $region97: #{convnet_forward.1} parent=0 // pred_fallthru
    _

</llo_original>
